<compile_context>
chip_gen: v7x
topology: tpu7x:2x2x1
jax: 0.10.0
libtpu: 0.0.40
codegen_flags: <defaults>
</compile_context>

<pallas_src>
import functools
import numpy as np
import jax
import jax.numpy as jnp
from jax.experimental import pallas as pl
from jax.experimental.pallas import tpu as pltpu


# ----------------------------------------------------------------------------
# Host-side construction of the blur operator (cv2.getGaussianKernel + reflect pad).
# ----------------------------------------------------------------------------
def _gaussian_kernel_1d(ksize, sigma):
    """Replicates cv2.getGaussianKernel(ksize, sigma) for ksize > 7."""
    s = float(sigma)
    if s <= 0:
        s = 0.3 * ((ksize - 1) * 0.5 - 1.0) + 0.8
    x = np.arange(ksize, dtype=np.float64) - (ksize - 1) * 0.5
    k = np.exp(-(x * x) / (2.0 * s * s))
    return k / k.sum()


def _blur_matrix(k1d, n):
    """Dense (n, n) matrix M such that (x @ M)[w] = sum_j k[j] * x[reflect(w + j - p)].

    Folds the 1-D correlation AND PyTorch-style 'reflect' padding into one matrix.
    Requires pad = len(k1d)//2 <= n - 1 (same constraint F.pad(mode='reflect') enforces).
    """
    k = len(k1d)
    p = k // 2
    assert p <= n - 1, f"reflect pad {p} must be < dim {n} (same constraint as F.pad reflect)"
    m = np.zeros((n, n), dtype=np.float64)
    for w in range(n):
        for j in range(k):
            idx = w + j - p
            if idx < 0:
                idx = -idx
            elif idx >= n:
                idx = 2 * (n - 1) - idx
            m[idx, w] += k1d[j]
    return m.astype(np.float32)


@functools.lru_cache(maxsize=None)
def _blur_matrices(radius, sigma, h, w):
    ksize = radius + 1 if radius % 2 == 0 else radius
    k1d = _gaussian_kernel_1d(ksize, sigma)
    mh = _blur_matrix(k1d, w)          # right-multiply: horizontal blur  (x @ MH)
    mv = _blur_matrix(k1d, h).T        # left-multiply:  vertical blur    (MV @ x)
    return mv, mh


# ----------------------------------------------------------------------------
# Fused Pallas kernel: blur -> residual/mask -> blur(mask) -> sharpen/blend.
# ----------------------------------------------------------------------------
def _usm_sharp_kernel(img_ref, mv_ref, mh_ref, out_ref, blur_ref, *, weight, threshold, pt):
    # img_ref / out_ref / blur_ref : (PT, H, W)   mv_ref : (H, H)   mh_ref : (W, W)
    H = img_ref.shape[1]
    W = img_ref.shape[2]
    mv = mv_ref[...]
    mh = mh_ref[...]

    def blur_into(src, dst_ref):
        # Horizontal pass: all PT planes fused into ONE (PT*H, W) @ (W, W) MXU matmul.
        # The reshape only merges leading dims (lane dim W stays last) -> layout no-op.
        ph = jnp.dot(src.reshape(pt * H, W), mh,
                     preferred_element_type=jnp.float32).reshape(pt, H, W)
        # Vertical pass: one (H, H) @ (H, W) MXU matmul per plane, written directly to VMEM
        # scratch (static unroll; PT is a small compile-time constant).
        for i in range(pt):
            dst_ref[i] = jnp.dot(mv, ph[i], preferred_element_type=jnp.float32)

    x = img_ref[...]                                   # (PT, H, W)

    blur_into(x, blur_ref)                             # filter2D(img, gauss2d)
    residual = x - blur_ref[...]
    # |residual| * 255 > threshold  <=>  |residual| > threshold / 255  (one compare, no mul)
    mask = (jnp.abs(residual) > (threshold / 255.0)).astype(jnp.float32)

    blur_into(mask, blur_ref)                          # filter2D(mask, gauss2d), scratch reused
    soft = blur_ref[...]

    sharp = jnp.clip(x + weight * residual, 0.0, 1.0)
    out_ref[...] = soft * sharp + (1.0 - soft) * x


def usm_sharp(img, weight=0.9, threshold=30, radius=80, sigma=0):
    """img: (B, C, H, W) float32 in [0, 1]; scalar weight/threshold (compile-time constants)."""
    # TODO(synk): traced per-call tensor weight/threshold would need an SMEM scalar input.
    B, C, H, W = img.shape
    mv_np, mh_np = _blur_matrices(int(radius), float(sigma), int(H), int(W))
    mv = jnp.asarray(mv_np)
    mh = jnp.asarray(mh_np)

    bc = B * C
    # Planes per grid step: largest divisor of B*C whose tile stays comfortably inside VMEM
    # (<= ~4 MiB per plane-tile buffer, accounting for double-buffered in/out + scratch).
    cap = max(1, min(bc, (4 * 1024 * 1024) // (H * W * 4)))
    pt = 1
    for d in range(1, cap + 1):
        if bc % d == 0:
            pt = d

    planes = img.astype(jnp.float32).reshape(bc, H, W)

    out = pl.pallas_call(
        functools.partial(_usm_sharp_kernel,
                          weight=float(weight), threshold=float(threshold), pt=pt),
        out_shape=jax.ShapeDtypeStruct((bc, H, W), jnp.float32),
        grid=(bc // pt,),
        in_specs=[
            pl.BlockSpec((pt, H, W), lambda i: (i, 0, 0)),   # PT planes per step
            pl.BlockSpec((H, H), lambda i: (0, 0)),          # vertical blur matrix (resident)
            pl.BlockSpec((W, W), lambda i: (0, 0)),          # horizontal blur matrix (resident)
        ],
        out_specs=pl.BlockSpec((pt, H, W), lambda i: (i, 0, 0)),
        scratch_shapes=[pltpu.VMEM((pt, H, W), jnp.float32)],  # shared blur scratch
        compiler_params=pltpu.CompilerParams(
            dimension_semantics=("parallel",),               # shardable across TCs (v7x)
            vmem_limit_bytes=64 * 1024 * 1024),
    )(planes, mv, mh)

    return out.reshape(B, C, H, W)


# ----------------------------------------------------------------------------
# Pure-JAX reference (reflect pad + explicit separable taps) for a correctness check.
# ----------------------------------------------------------------------------
def _blur_reference(x, k1d):
    p = k1d.shape[0] // 2
    H, W = x.shape[-2:]
    xp = jnp.pad(x, ((0, 0), (0, 0), (p, p), (p, p)), mode="reflect")
    acc = jnp.zeros(xp.shape[:-1] + (W,), jnp.float32)
    for j in range(k1d.shape[0]):
        acc = acc + k1d[j] * xp[..., :, j:j + W]
    out = jnp.zeros(x.shape, jnp.float32)
    for i in range(k1d.shape[0]):
        out = out + k1d[i] * acc[..., i:i + H, :]
    return out


def _usm_sharp_reference(img, k1d, weight, threshold):
    blur = _blur_reference(img, k1d)
    residual = img - blur
    mask = (jnp.abs(residual) * 255.0 > threshold).astype(jnp.float32)
    soft = _blur_reference(mask, k1d)
    sharp = jnp.clip(img + weight * residual, 0.0, 1.0)
    return soft * sharp + (1.0 - soft) * img


if __name__ == "__main__":
    key = jax.random.PRNGKey(0)
    # radius=80 -> 81-tap Gaussian -> reflect pad 40 requires spatial > 40;
    # 128 keeps the layout lane-dense while staying small.
    B, C, H, W = 2, 3, 128, 128
    img = jax.random.uniform(key, (B, C, H, W), dtype=jnp.float32)

    out = usm_sharp(img, weight=0.9, threshold=30, radius=80, sigma=0)
    out = jax.block_until_ready(out)

    assert out.shape == (B, C, H, W), out.shape
    assert bool(jnp.all(jnp.isfinite(out)))

    k1d = jnp.asarray(_gaussian_kernel_1d(81, 0), dtype=jnp.float32)
    ref = _usm_sharp_reference(img, k1d, 0.9, 30.0)
    err = float(jnp.max(jnp.abs(out - ref)))
    # loose tolerance: hard threshold in the mask can flip on ~1e-6-level blur differences
    assert err < 1e-2, f"max abs error vs reference: {err}"

    print("KERNEL_OK")
</pallas_src>

<mosaic_0001>
module attributes {stable_mosaic.version = 11 : i64} {
  func.func @_usm_sharp_kernel(%arg0: i32, %arg1: memref<6x128x128xf32, #tpu.memory_space<vmem>>, %arg2: memref<128x128xf32, #tpu.memory_space<vmem>>, %arg3: memref<128x128xf32, #tpu.memory_space<vmem>>, %arg4: memref<6x128x128xf32, #tpu.memory_space<vmem>>, %arg5: memref<6x128x128xf32, #tpu.memory_space<vmem>>) attributes {dimension_semantics = [#tpu.dimension_semantics<parallel>], iteration_bounds = array<i64: 1>, scalar_prefetch = 0 : i64, scratch_operands = 1 : i64, tpu.core_type = #tpu.core_type<tc>, window_params = [{transform_indices = @transform_0, window_bounds = array<i64: 6, 128, 128>}, {pipeline_mode = #tpu.pipeline_mode<synchronous>, transform_indices = @transform_1, window_bounds = array<i64: 128, 128>}, {pipeline_mode = #tpu.pipeline_mode<synchronous>, transform_indices = @transform_2, window_bounds = array<i64: 128, 128>}, {transform_indices = @transform_3, window_bounds = array<i64: 6, 128, 128>}]} {
    %c0 = arith.constant 0 : index
    %c0_0 = arith.constant 0 : index
    %0 = vector.load %arg2[%c0, %c0_0] : memref<128x128xf32, #tpu.memory_space<vmem>>, vector<128x128xf32>
    %c0_1 = arith.constant 0 : index
    %c0_2 = arith.constant 0 : index
    %1 = vector.load %arg3[%c0_1, %c0_2] : memref<128x128xf32, #tpu.memory_space<vmem>>, vector<128x128xf32>
    %c0_3 = arith.constant 0 : index
    %c0_4 = arith.constant 0 : index
    %c0_5 = arith.constant 0 : index
    %2 = vector.load %arg1[%c0_3, %c0_4, %c0_5] : memref<6x128x128xf32, #tpu.memory_space<vmem>>, vector<6x128x128xf32>
    %3 = vector.shape_cast %2 : vector<6x128x128xf32> to vector<768x128xf32>
    %cst = arith.constant dense<0.000000e+00> : vector<768x128xf32>
    %4 = tpu.matmul %3, %1, %cst {dimension_numbers = #tpu.dot_dimension_numbers<[1], [0], [0], [1], [0, 0, 1, 1], [], []>} : vector<768x128xf32>, vector<128x128xf32>, vector<768x128xf32> -> vector<768x128xf32>
    %5 = vector.shape_cast %4 : vector<768x128xf32> to vector<6x128x128xf32>
    %6 = vector.extract_strided_slice %5 {offsets = [0, 0, 0], sizes = [1, 128, 128], strides = [1, 1, 1]} : vector<6x128x128xf32> to vector<1x128x128xf32>
    %7 = vector.shape_cast %6 : vector<1x128x128xf32> to vector<128x128xf32>
    %cst_6 = arith.constant dense<0.000000e+00> : vector<128x128xf32>
    %8 = tpu.matmul %0, %7, %cst_6 {dimension_numbers = #tpu.dot_dimension_numbers<[1], [0], [0], [1], [0, 0, 1, 1], [], []>} : vector<128x128xf32>, vector<128x128xf32>, vector<128x128xf32> -> vector<128x128xf32>
    %c0_7 = arith.constant 0 : index
    %c0_8 = arith.constant 0 : index
    %c0_9 = arith.constant 0 : index
    %9 = vector.load %arg5[%c0_7, %c0_8, %c0_9] : memref<6x128x128xf32, #tpu.memory_space<vmem>>, vector<1x128x128xf32>
    %10 = vector.shape_cast %9 : vector<1x128x128xf32> to vector<128x128xf32>
    %11 = vector.shape_cast %8 : vector<128x128xf32> to vector<1x128x128xf32>
    tpu.vector_store %arg5[%c0_7, %c0_8, %c0_9], %11 {strides = array<i32>} : memref<6x128x128xf32, #tpu.memory_space<vmem>>, vector<1x128x128xf32>,
    %12 = vector.extract_strided_slice %5 {offsets = [1, 0, 0], sizes = [1, 128, 128], strides = [1, 1, 1]} : vector<6x128x128xf32> to vector<1x128x128xf32>
    %13 = vector.shape_cast %12 : vector<1x128x128xf32> to vector<128x128xf32>
    %cst_10 = arith.constant dense<0.000000e+00> : vector<128x128xf32>
    %14 = tpu.matmul %0, %13, %cst_10 {dimension_numbers = #tpu.dot_dimension_numbers<[1], [0], [0], [1], [0, 0, 1, 1], [], []>} : vector<128x128xf32>, vector<128x128xf32>, vector<128x128xf32> -> vector<128x128xf32>
    %c1 = arith.constant 1 : index
    %c0_11 = arith.constant 0 : index
    %c0_12 = arith.constant 0 : index
    %15 = vector.load %arg5[%c1, %c0_11, %c0_12] : memref<6x128x128xf32, #tpu.memory_space<vmem>>, vector<1x128x128xf32>
    %16 = vector.shape_cast %15 : vector<1x128x128xf32> to vector<128x128xf32>
    %17 = vector.shape_cast %14 : vector<128x128xf32> to vector<1x128x128xf32>
    tpu.vector_store %arg5[%c1, %c0_11, %c0_12], %17 {strides = array<i32>} : memref<6x128x128xf32, #tpu.memory_space<vmem>>, vector<1x128x128xf32>,
    %18 = vector.extract_strided_slice %5 {offsets = [2, 0, 0], sizes = [1, 128, 128], strides = [1, 1, 1]} : vector<6x128x128xf32> to vector<1x128x128xf32>
    %19 = vector.shape_cast %18 : vector<1x128x128xf32> to vector<128x128xf32>
    %cst_13 = arith.constant dense<0.000000e+00> : vector<128x128xf32>
    %20 = tpu.matmul %0, %19, %cst_13 {dimension_numbers = #tpu.dot_dimension_numbers<[1], [0], [0], [1], [0, 0, 1, 1], [], []>} : vector<128x128xf32>, vector<128x128xf32>, vector<128x128xf32> -> vector<128x128xf32>
    %c2 = arith.constant 2 : index
    %c0_14 = arith.constant 0 : index
    %c0_15 = arith.constant 0 : index
    %21 = vector.load %arg5[%c2, %c0_14, %c0_15] : memref<6x128x128xf32, #tpu.memory_space<vmem>>, vector<1x128x128xf32>
    %22 = vector.shape_cast %21 : vector<1x128x128xf32> to vector<128x128xf32>
    %23 = vector.shape_cast %20 : vector<128x128xf32> to vector<1x128x128xf32>
    tpu.vector_store %arg5[%c2, %c0_14, %c0_15], %23 {strides = array<i32>} : memref<6x128x128xf32, #tpu.memory_space<vmem>>, vector<1x128x128xf32>,
    %24 = vector.extract_strided_slice %5 {offsets = [3, 0, 0], sizes = [1, 128, 128], strides = [1, 1, 1]} : vector<6x128x128xf32> to vector<1x128x128xf32>
    %25 = vector.shape_cast %24 : vector<1x128x128xf32> to vector<128x128xf32>
    %cst_16 = arith.constant dense<0.000000e+00> : vector<128x128xf32>
    %26 = tpu.matmul %0, %25, %cst_16 {dimension_numbers = #tpu.dot_dimension_numbers<[1], [0], [0], [1], [0, 0, 1, 1], [], []>} : vector<128x128xf32>, vector<128x128xf32>, vector<128x128xf32> -> vector<128x128xf32>
    %c3 = arith.constant 3 : index
    %c0_17 = arith.constant 0 : index
    %c0_18 = arith.constant 0 : index
    %27 = vector.load %arg5[%c3, %c0_17, %c0_18] : memref<6x128x128xf32, #tpu.memory_space<vmem>>, vector<1x128x128xf32>
    %28 = vector.shape_cast %27 : vector<1x128x128xf32> to vector<128x128xf32>
    %29 = vector.shape_cast %26 : vector<128x128xf32> to vector<1x128x128xf32>
    tpu.vector_store %arg5[%c3, %c0_17, %c0_18], %29 {strides = array<i32>} : memref<6x128x128xf32, #tpu.memory_space<vmem>>, vector<1x128x128xf32>,
    %30 = vector.extract_strided_slice %5 {offsets = [4, 0, 0], sizes = [1, 128, 128], strides = [1, 1, 1]} : vector<6x128x128xf32> to vector<1x128x128xf32>
    %31 = vector.shape_cast %30 : vector<1x128x128xf32> to vector<128x128xf32>
    %cst_19 = arith.constant dense<0.000000e+00> : vector<128x128xf32>
    %32 = tpu.matmul %0, %31, %cst_19 {dimension_numbers = #tpu.dot_dimension_numbers<[1], [0], [0], [1], [0, 0, 1, 1], [], []>} : vector<128x128xf32>, vector<128x128xf32>, vector<128x128xf32> -> vector<128x128xf32>
    %c4 = arith.constant 4 : index
    %c0_20 = arith.constant 0 : index
    %c0_21 = arith.constant 0 : index
    %33 = vector.load %arg5[%c4, %c0_20, %c0_21] : memref<6x128x128xf32, #tpu.memory_space<vmem>>, vector<1x128x128xf32>
    %34 = vector.shape_cast %33 : vector<1x128x128xf32> to vector<128x128xf32>
    %35 = vector.shape_cast %32 : vector<128x128xf32> to vector<1x128x128xf32>
    tpu.vector_store %arg5[%c4, %c0_20, %c0_21], %35 {strides = array<i32>} : memref<6x128x128xf32, #tpu.memory_space<vmem>>, vector<1x128x128xf32>,
    %36 = vector.extract_strided_slice %5 {offsets = [5, 0, 0], sizes = [1, 128, 128], strides = [1, 1, 1]} : vector<6x128x128xf32> to vector<1x128x128xf32>
    %37 = vector.shape_cast %36 : vector<1x128x128xf32> to vector<128x128xf32>
    %cst_22 = arith.constant dense<0.000000e+00> : vector<128x128xf32>
    %38 = tpu.matmul %0, %37, %cst_22 {dimension_numbers = #tpu.dot_dimension_numbers<[1], [0], [0], [1], [0, 0, 1, 1], [], []>} : vector<128x128xf32>, vector<128x128xf32>, vector<128x128xf32> -> vector<128x128xf32>
    %c5 = arith.constant 5 : index
    %c0_23 = arith.constant 0 : index
    %c0_24 = arith.constant 0 : index
    %39 = vector.load %arg5[%c5, %c0_23, %c0_24] : memref<6x128x128xf32, #tpu.memory_space<vmem>>, vector<1x128x128xf32>
    %40 = vector.shape_cast %39 : vector<1x128x128xf32> to vector<128x128xf32>
    %41 = vector.shape_cast %38 : vector<128x128xf32> to vector<1x128x128xf32>
    tpu.vector_store %arg5[%c5, %c0_23, %c0_24], %41 {strides = array<i32>} : memref<6x128x128xf32, #tpu.memory_space<vmem>>, vector<1x128x128xf32>,
    %c0_25 = arith.constant 0 : index
    %c0_26 = arith.constant 0 : index
    %c0_27 = arith.constant 0 : index
    %42 = vector.load %arg5[%c0_25, %c0_26, %c0_27] : memref<6x128x128xf32, #tpu.memory_space<vmem>>, vector<6x128x128xf32>
    %43 = arith.subf %2, %42 : vector<6x128x128xf32>
    %44 = math.absf %43 : vector<6x128x128xf32>
    %cst_28 = arith.constant 0.117647059 : f32
    %45 = vector.broadcast %cst_28 : f32 to vector<6x128x128xf32>
    %46 = arith.cmpf ogt, %44, %45 : vector<6x128x128xf32>
    %47 = arith.extui %46 : vector<6x128x128xi1> to vector<6x128x128xi32>
    %48 = arith.sitofp %47 : vector<6x128x128xi32> to vector<6x128x128xf32>
    %49 = vector.shape_cast %48 : vector<6x128x128xf32> to vector<768x128xf32>
    %cst_29 = arith.constant dense<0.000000e+00> : vector<768x128xf32>
    %50 = tpu.matmul %49, %1, %cst_29 {dimension_numbers = #tpu.dot_dimension_numbers<[1], [0], [0], [1], [0, 0, 1, 1], [], []>} : vector<768x128xf32>, vector<128x128xf32>, vector<768x128xf32> -> vector<768x128xf32>
    %51 = vector.shape_cast %50 : vector<768x128xf32> to vector<6x128x128xf32>
    %52 = vector.extract_strided_slice %51 {offsets = [0, 0, 0], sizes = [1, 128, 128], strides = [1, 1, 1]} : vector<6x128x128xf32> to vector<1x128x128xf32>
    %53 = vector.shape_cast %52 : vector<1x128x128xf32> to vector<128x128xf32>
    %cst_30 = arith.constant dense<0.000000e+00> : vector<128x128xf32>
    %54 = tpu.matmul %0, %53, %cst_30 {dimension_numbers = #tpu.dot_dimension_numbers<[1], [0], [0], [1], [0, 0, 1, 1], [], []>} : vector<128x128xf32>, vector<128x128xf32>, vector<128x128xf32> -> vector<128x128xf32>
    %c0_31 = arith.constant 0 : index
    %c0_32 = arith.constant 0 : index
    %c0_33 = arith.constant 0 : index
    %55 = vector.load %arg5[%c0_31, %c0_32, %c0_33] : memref<6x128x128xf32, #tpu.memory_space<vmem>>, vector<1x128x128xf32>
    %56 = vector.shape_cast %55 : vector<1x128x128xf32> to vector<128x128xf32>
    %57 = vector.shape_cast %54 : vector<128x128xf32> to vector<1x128x128xf32>
    tpu.vector_store %arg5[%c0_31, %c0_32, %c0_33], %57 {strides = array<i32>} : memref<6x128x128xf32, #tpu.memory_space<vmem>>, vector<1x128x128xf32>,
    %58 = vector.extract_strided_slice %51 {offsets = [1, 0, 0], sizes = [1, 128, 128], strides = [1, 1, 1]} : vector<6x128x128xf32> to vector<1x128x128xf32>
    %59 = vector.shape_cast %58 : vector<1x128x128xf32> to vector<128x128xf32>
    %cst_34 = arith.constant dense<0.000000e+00> : vector<128x128xf32>
    %60 = tpu.matmul %0, %59, %cst_34 {dimension_numbers = #tpu.dot_dimension_numbers<[1], [0], [0], [1], [0, 0, 1, 1], [], []>} : vector<128x128xf32>, vector<128x128xf32>, vector<128x128xf32> -> vector<128x128xf32>
    %c1_35 = arith.constant 1 : index
    %c0_36 = arith.constant 0 : index
    %c0_37 = arith.constant 0 : index
    %61 = vector.load %arg5[%c1_35, %c0_36, %c0_37] : memref<6x128x128xf32, #tpu.memory_space<vmem>>, vector<1x128x128xf32>
    %62 = vector.shape_cast %61 : vector<1x128x128xf32> to vector<128x128xf32>
    %63 = vector.shape_cast %60 : vector<128x128xf32> to vector<1x128x128xf32>
    tpu.vector_store %arg5[%c1_35, %c0_36, %c0_37], %63 {strides = array<i32>} : memref<6x128x128xf32, #tpu.memory_space<vmem>>, vector<1x128x128xf32>,
    %64 = vector.extract_strided_slice %51 {offsets = [2, 0, 0], sizes = [1, 128, 128], strides = [1, 1, 1]} : vector<6x128x128xf32> to vector<1x128x128xf32>
    %65 = vector.shape_cast %64 : vector<1x128x128xf32> to vector<128x128xf32>
    %cst_38 = arith.constant dense<0.000000e+00> : vector<128x128xf32>
    %66 = tpu.matmul %0, %65, %cst_38 {dimension_numbers = #tpu.dot_dimension_numbers<[1], [0], [0], [1], [0, 0, 1, 1], [], []>} : vector<128x128xf32>, vector<128x128xf32>, vector<128x128xf32> -> vector<128x128xf32>
    %c2_39 = arith.constant 2 : index
    %c0_40 = arith.constant 0 : index
    %c0_41 = arith.constant 0 : index
    %67 = vector.load %arg5[%c2_39, %c0_40, %c0_41] : memref<6x128x128xf32, #tpu.memory_space<vmem>>, vector<1x128x128xf32>
    %68 = vector.shape_cast %67 : vector<1x128x128xf32> to vector<128x128xf32>
    %69 = vector.shape_cast %66 : vector<128x128xf32> to vector<1x128x128xf32>
    tpu.vector_store %arg5[%c2_39, %c0_40, %c0_41], %69 {strides = array<i32>} : memref<6x128x128xf32, #tpu.memory_space<vmem>>, vector<1x128x128xf32>,
    %70 = vector.extract_strided_slice %51 {offsets = [3, 0, 0], sizes = [1, 128, 128], strides = [1, 1, 1]} : vector<6x128x128xf32> to vector<1x128x128xf32>
    %71 = vector.shape_cast %70 : vector<1x128x128xf32> to vector<128x128xf32>
    %cst_42 = arith.constant dense<0.000000e+00> : vector<128x128xf32>
    %72 = tpu.matmul %0, %71, %cst_42 {dimension_numbers = #tpu.dot_dimension_numbers<[1], [0], [0], [1], [0, 0, 1, 1], [], []>} : vector<128x128xf32>, vector<128x128xf32>, vector<128x128xf32> -> vector<128x128xf32>
    %c3_43 = arith.constant 3 : index
    %c0_44 = arith.constant 0 : index
    %c0_45 = arith.constant 0 : index
    %73 = vector.load %arg5[%c3_43, %c0_44, %c0_45] : memref<6x128x128xf32, #tpu.memory_space<vmem>>, vector<1x128x128xf32>
    %74 = vector.shape_cast %73 : vector<1x128x128xf32> to vector<128x128xf32>
    %75 = vector.shape_cast %72 : vector<128x128xf32> to vector<1x128x128xf32>
    tpu.vector_store %arg5[%c3_43, %c0_44, %c0_45], %75 {strides = array<i32>} : memref<6x128x128xf32, #tpu.memory_space<vmem>>, vector<1x128x128xf32>,
    %76 = vector.extract_strided_slice %51 {offsets = [4, 0, 0], sizes = [1, 128, 128], strides = [1, 1, 1]} : vector<6x128x128xf32> to vector<1x128x128xf32>
    %77 = vector.shape_cast %76 : vector<1x128x128xf32> to vector<128x128xf32>
    %cst_46 = arith.constant dense<0.000000e+00> : vector<128x128xf32>
    %78 = tpu.matmul %0, %77, %cst_46 {dimension_numbers = #tpu.dot_dimension_numbers<[1], [0], [0], [1], [0, 0, 1, 1], [], []>} : vector<128x128xf32>, vector<128x128xf32>, vector<128x128xf32> -> vector<128x128xf32>
    %c4_47 = arith.constant 4 : index
    %c0_48 = arith.constant 0 : index
    %c0_49 = arith.constant 0 : index
    %79 = vector.load %arg5[%c4_47, %c0_48, %c0_49] : memref<6x128x128xf32, #tpu.memory_space<vmem>>, vector<1x128x128xf32>
    %80 = vector.shape_cast %79 : vector<1x128x128xf32> to vector<128x128xf32>
    %81 = vector.shape_cast %78 : vector<128x128xf32> to vector<1x128x128xf32>
    tpu.vector_store %arg5[%c4_47, %c0_48, %c0_49], %81 {strides = array<i32>} : memref<6x128x128xf32, #tpu.memory_space<vmem>>, vector<1x128x128xf32>,
    %82 = vector.extract_strided_slice %51 {offsets = [5, 0, 0], sizes = [1, 128, 128], strides = [1, 1, 1]} : vector<6x128x128xf32> to vector<1x128x128xf32>
    %83 = vector.shape_cast %82 : vector<1x128x128xf32> to vector<128x128xf32>
    %cst_50 = arith.constant dense<0.000000e+00> : vector<128x128xf32>
    %84 = tpu.matmul %0, %83, %cst_50 {dimension_numbers = #tpu.dot_dimension_numbers<[1], [0], [0], [1], [0, 0, 1, 1], [], []>} : vector<128x128xf32>, vector<128x128xf32>, vector<128x128xf32> -> vector<128x128xf32>
    %c5_51 = arith.constant 5 : index
    %c0_52 = arith.constant 0 : index
    %c0_53 = arith.constant 0 : index
    %85 = vector.load %arg5[%c5_51, %c0_52, %c0_53] : memref<6x128x128xf32, #tpu.memory_space<vmem>>, vector<1x128x128xf32>
    %86 = vector.shape_cast %85 : vector<1x128x128xf32> to vector<128x128xf32>
    %87 = vector.shape_cast %84 : vector<128x128xf32> to vector<1x128x128xf32>
    tpu.vector_store %arg5[%c5_51, %c0_52, %c0_53], %87 {strides = array<i32>} : memref<6x128x128xf32, #tpu.memory_space<vmem>>, vector<1x128x128xf32>,
    %c0_54 = arith.constant 0 : index
    %c0_55 = arith.constant 0 : index
    %c0_56 = arith.constant 0 : index
    %88 = vector.load %arg5[%c0_54, %c0_55, %c0_56] : memref<6x128x128xf32, #tpu.memory_space<vmem>>, vector<6x128x128xf32>
    %cst_57 = arith.constant 0.899999976 : f32
    %89 = vector.broadcast %cst_57 : f32 to vector<6x128x128xf32>
    %90 = arith.mulf %89, %43 : vector<6x128x128xf32>
    %91 = arith.addf %2, %90 : vector<6x128x128xf32>
    %cst_58 = arith.constant 0.000000e+00 : f32
    %cst_59 = arith.constant 1.000000e+00 : f32
    %92 = vector.broadcast %cst_58 : f32 to vector<6x128x128xf32>
    %93 = arith.maximumf %92, %91 : vector<6x128x128xf32>
    %94 = vector.broadcast %cst_59 : f32 to vector<6x128x128xf32>
    %95 = arith.minimumf %94, %93 : vector<6x128x128xf32>
    %96 = arith.mulf %88, %95 : vector<6x128x128xf32>
    %cst_60 = arith.constant 1.000000e+00 : f32
    %97 = vector.broadcast %cst_60 : f32 to vector<6x128x128xf32>
    %98 = arith.subf %97, %88 : vector<6x128x128xf32>
    %99 = arith.mulf %98, %2 : vector<6x128x128xf32>
    %100 = arith.addf %96, %99 : vector<6x128x128xf32>
    %c0_61 = arith.constant 0 : index
    %c0_62 = arith.constant 0 : index
    %c0_63 = arith.constant 0 : index
    %101 = vector.load %arg4[%c0_61, %c0_62, %c0_63] : memref<6x128x128xf32, #tpu.memory_space<vmem>>, vector<6x128x128xf32>
    tpu.vector_store %arg4[%c0_61, %c0_62, %c0_63], %100 {strides = array<i32>} : memref<6x128x128xf32, #tpu.memory_space<vmem>>, vector<6x128x128xf32>,
    return
  }
  func.func @transform_0(%arg0: i32) -> (i32, i32, i32) {
    %c0_i32 = arith.constant 0 : i32
    %c0_i32_0 = arith.constant 0 : i32
    %c0_i32_1 = arith.constant 0 : i32
    return %arg0, %c0_i32, %c0_i32_0 : i32, i32, i32
  }
  func.func @transform_1(%arg0: i32) -> (i32, i32) {
    %c0_i32 = arith.constant 0 : i32
    %c0_i32_0 = arith.constant 0 : i32
    %c0_i32_1 = arith.constant 0 : i32
    return %c0_i32, %c0_i32_0 : i32, i32
  }
  func.func @transform_2(%arg0: i32) -> (i32, i32) {
    %c0_i32 = arith.constant 0 : i32
    %c0_i32_0 = arith.constant 0 : i32
    %c0_i32_1 = arith.constant 0 : i32
    return %c0_i32, %c0_i32_0 : i32, i32
  }
  func.func @transform_3(%arg0: i32) -> (i32, i32, i32) {
    %c0_i32 = arith.constant 0 : i32
    %c0_i32_0 = arith.constant 0 : i32
    %c0_i32_1 = arith.constant 0 : i32
    return %arg0, %c0_i32, %c0_i32_0 : i32, i32, i32
  }
}

</mosaic_0001>

<llo_original>
// kernel: tpu_custom_call.1
$region0: #{tpu_custom_call.1}
  #allocation0 [shape = 'u32[]', space=smem, size = 0x4, offset = 0x4, fixed_abs, tag = 'smem constant byte address 0x4 - core index']
  #allocation1 [shape = 'u32[144,128]{1,0:T(1,128)}', space=vmem, size = 0x12000, scoped, tag = 'internal scratch']
  #allocation2 [shape = 'f32[6,128,128]{2,1,0:T(8,128)}', space=vmem, size = 0x60000, scoped, tag = 'scratch operand']
  %s0 = inlined_call_operand.hbm [shape: f32[6,128,128], index: 0, kind: input, shape index: {}]
  %s1 = inlined_call_operand.hbm [shape: f32[128,128], index: 1, kind: input, shape index: {}]
  %s2 = inlined_call_operand.hbm [shape: f32[128,128], index: 2, kind: input, shape index: {}]
  %s3 = inlined_call_operand.hbm [shape: f32[6,128,128], index: 3, kind: output, shape index: {}]
  %s4 = sld [smem:[#allocation0]]
  $region34: #{tpu_custom_call.1} parent=0
    _
  %s6 = ssub.s32 1, %s4
  %s7 = scalar_select 0, %s6, %s4
  $region1: #{tpu_custom_call.1} parent=0
    #allocation3 [shape = 'u8[393216]{0}', space=vmem, size = 0x60000, scoped, tag = 'input window, operand 0, single buffered']
    #allocation4 [shape = 's32[1]{0}', space=sflag, size = 0x4, scoped, tag = 'scoped memory for tpu_custom_call.1']
    #allocation5 [shape = 's32[1]{0}', space=sflag, size = 0x4, scoped, tag = 'scoped memory for tpu_custom_call.1']
    #allocation6 [shape = 'u8[65536]{0}', space=vmem, size = 0x10000, scoped, tag = 'input window, operand 1, single buffered']
    #allocation7 [shape = 's32[1]{0}', space=sflag, size = 0x4, scoped, tag = 'scoped memory for tpu_custom_call.1']
    #allocation8 [shape = 'u8[65536]{0}', space=vmem, size = 0x10000, scoped, tag = 'input window, operand 2, single buffered']
    #allocation9 [shape = 'u8[393216]{0}', space=vmem, size = 0x60000, scoped, tag = 'output window, operand 0, single buffered']
    %8 = vsyncpa [#allocation4], 0
    %9 = vsyncpa [#allocation7], 0
    %10 = vsyncpa [#allocation5], 0
    // Predicated region
    $region2: #{tpu_custom_call.1} parent=1 // pred_check
      _
    $region3: #{tpu_custom_call.1} parent=1 // pred_check_branch
      %12 = sbr.rel (0) target = $region5
    $region4: #{tpu_custom_call.1} parent=1 // pred_region
      %s14 = ssub.s32 12288, 12288
      %15 = vsyncadd [#allocation4], %s14
      %s16 = sshll.u32 [#allocation3], 4
      %s17 = int_to_ptr.vmem [resolvable:$true] %s16
      %22 = dma.hbm_to_vmem [thread:$0]  %s0, 12288, %s17, [#allocation4], 128, 128, 8
    $region5: #{tpu_custom_call.1} parent=1 // pred_fallthru
      _
    // Predicated region
    $region6: #{tpu_custom_call.1} parent=1 // pred_check
      _
    $region7: #{tpu_custom_call.1} parent=1 // pred_check_branch
      %24 = sbr.rel (0) target = $region9
    $region8: #{tpu_custom_call.1} parent=1 // pred_region
      %s26 = ssub.s32 2048, 2048
      %27 = vsyncadd [#allocation7], %s26
      %s28 = sshll.u32 [#allocation6], 4
      %s29 = int_to_ptr.vmem [resolvable:$true] %s28
      %34 = dma.hbm_to_vmem [thread:$0]  %s1, 2048, %s29, [#allocation7], 128, 128, 8
    $region9: #{tpu_custom_call.1} parent=1 // pred_fallthru
      _
    // Predicated region
    $region10: #{tpu_custom_call.1} parent=1 // pred_check
      _
    $region11: #{tpu_custom_call.1} parent=1 // pred_check_branch
      %36 = sbr.rel (0) target = $region13
    $region12: #{tpu_custom_call.1} parent=1 // pred_region
      %s38 = ssub.s32 2048, 2048
      %39 = vsyncadd [#allocation7], %s38
      %s40 = sshll.u32 [#allocation8], 4
      %s41 = int_to_ptr.vmem [resolvable:$true] %s40
      %46 = dma.hbm_to_vmem [thread:$0]  %s2, 2048, %s41, [#allocation7], 128, 128, 8
    $region13: #{tpu_custom_call.1} parent=1 // pred_fallthru
      _
    // Predicated region
    $region14: #{tpu_custom_call.1} parent=1 // pred_check
      _
    $region15: #{tpu_custom_call.1} parent=1 // pred_check_branch
      %48 = sbr.rel (0) target = $region17
    $region16: #{tpu_custom_call.1} parent=1 // pred_region
      %49 = dma.done [#allocation4], 12288
    $region17: #{tpu_custom_call.1} parent=1 // pred_fallthru
      _
    // Predicated region
    $region18: #{tpu_custom_call.1} parent=1 // pred_check
      _
    $region19: #{tpu_custom_call.1} parent=1 // pred_check_branch
      %51 = sbr.rel (0) target = $region21
    $region20: #{tpu_custom_call.1} parent=1 // pred_region
      %52 = dma.done [#allocation7], 2048
    $region21: #{tpu_custom_call.1} parent=1 // pred_fallthru
      _
    // Predicated region
    $region22: #{tpu_custom_call.1} parent=1 // pred_check
      _
    $region23: #{tpu_custom_call.1} parent=1 // pred_check_branch
      %54 = sbr.rel (0) target = $region25
    $region24: #{tpu_custom_call.1} parent=1 // pred_region
      %55 = dma.done [#allocation7], 2048
    $region25: #{tpu_custom_call.1} parent=1 // pred_fallthru
      _
    %v56 = vld [vmem:[#allocation6] sm:$0xff]
    %v57 = vld [vmem:[#allocation6 + $0x8] sm:$0xff]
    %v58 = vld [vmem:[#allocation6 + $0x10] sm:$0xff]
    %v59 = vld [vmem:[#allocation6 + $0x18] sm:$0xff]
    %v60 = vld [vmem:[#allocation6 + $0x20] sm:$0xff]
    %v61 = vld [vmem:[#allocation6 + $0x28] sm:$0xff]
    %v62 = vld [vmem:[#allocation6 + $0x30] sm:$0xff]
    %v63 = vld [vmem:[#allocation6 + $0x38] sm:$0xff]
    %v64 = vld [vmem:[#allocation6 + $0x40] sm:$0xff]
    %v65 = vld [vmem:[#allocation6 + $0x48] sm:$0xff]
    %v66 = vld [vmem:[#allocation6 + $0x50] sm:$0xff]
    %v67 = vld [vmem:[#allocation6 + $0x58] sm:$0xff]
    %v68 = vld [vmem:[#allocation6 + $0x60] sm:$0xff]
    %v69 = vld [vmem:[#allocation6 + $0x68] sm:$0xff]
    %v70 = vld [vmem:[#allocation6 + $0x70] sm:$0xff]
    %v71 = vld [vmem:[#allocation6 + $0x78] sm:$0xff]
    %v72 = vld [vmem:[#allocation8] sm:$0xff]
    %v73 = vld [vmem:[#allocation8 + $0x8] sm:$0xff]
    %v74 = vld [vmem:[#allocation8 + $0x10] sm:$0xff]
    %v75 = vld [vmem:[#allocation8 + $0x18] sm:$0xff]
    %v76 = vld [vmem:[#allocation8 + $0x20] sm:$0xff]
    %v77 = vld [vmem:[#allocation8 + $0x28] sm:$0xff]
    %v78 = vld [vmem:[#allocation8 + $0x30] sm:$0xff]
    %v79 = vld [vmem:[#allocation8 + $0x38] sm:$0xff]
    %v80 = vld [vmem:[#allocation8 + $0x40] sm:$0xff]
    %v81 = vld [vmem:[#allocation8 + $0x48] sm:$0xff]
    %v82 = vld [vmem:[#allocation8 + $0x50] sm:$0xff]
    %v83 = vld [vmem:[#allocation8 + $0x58] sm:$0xff]
    %v84 = vld [vmem:[#allocation8 + $0x60] sm:$0xff]
    %v85 = vld [vmem:[#allocation8 + $0x68] sm:$0xff]
    %v86 = vld [vmem:[#allocation8 + $0x70] sm:$0xff]
    %v87 = vld [vmem:[#allocation8 + $0x78] sm:$0xff]
    %v88 = vld [vmem:[#allocation3] sm:$0xff]
    %v89 = vld [vmem:[#allocation3 + $0x8] sm:$0xff]
    %v90 = vld [vmem:[#allocation3 + $0x10] sm:$0xff]
    %v91 = vld [vmem:[#allocation3 + $0x18] sm:$0xff]
    %v92 = vld [vmem:[#allocation3 + $0x20] sm:$0xff]
    %v93 = vld [vmem:[#allocation3 + $0x28] sm:$0xff]
    %v94 = vld [vmem:[#allocation3 + $0x30] sm:$0xff]
    %v95 = vld [vmem:[#allocation3 + $0x38] sm:$0xff]
    %v96 = vld [vmem:[#allocation3 + $0x40] sm:$0xff]
    %v97 = vld [vmem:[#allocation3 + $0x48] sm:$0xff]
    %v98 = vld [vmem:[#allocation3 + $0x50] sm:$0xff]
    %v99 = vld [vmem:[#allocation3 + $0x58] sm:$0xff]
    %v100 = vld [vmem:[#allocation3 + $0x60] sm:$0xff]
    %v101 = vld [vmem:[#allocation3 + $0x68] sm:$0xff]
    %v102 = vld [vmem:[#allocation3 + $0x70] sm:$0xff]
    %v103 = vld [vmem:[#allocation3 + $0x78] sm:$0xff]
    %v104 = vld [vmem:[#allocation3 + $0x80] sm:$0xff]
    %v105 = vld [vmem:[#allocation3 + $0x88] sm:$0xff]
    %v106 = vld [vmem:[#allocation3 + $0x90] sm:$0xff]
    %v107 = vld [vmem:[#allocation3 + $0x98] sm:$0xff]
    %v108 = vld [vmem:[#allocation3 + $0xa0] sm:$0xff]
    %v109 = vld [vmem:[#allocation3 + $0xa8] sm:$0xff]
    %v110 = vld [vmem:[#allocation3 + $0xb0] sm:$0xff]
    %v111 = vld [vmem:[#allocation3 + $0xb8] sm:$0xff]
    %v112 = vld [vmem:[#allocation3 + $0xc0] sm:$0xff]
    %v113 = vld [vmem:[#allocation3 + $0xc8] sm:$0xff]
    %v114 = vld [vmem:[#allocation3 + $0xd0] sm:$0xff]
    %v115 = vld [vmem:[#allocation3 + $0xd8] sm:$0xff]
    %v116 = vld [vmem:[#allocation3 + $0xe0] sm:$0xff]
    %v117 = vld [vmem:[#allocation3 + $0xe8] sm:$0xff]
    %v118 = vld [vmem:[#allocation3 + $0xf0] sm:$0xff]
    %v119 = vld [vmem:[#allocation3 + $0xf8] sm:$0xff]
    %v120 = vld [vmem:[#allocation3 + $0x100] sm:$0xff]
    %v121 = vld [vmem:[#allocation3 + $0x108] sm:$0xff]
    %v122 = vld [vmem:[#allocation3 + $0x110] sm:$0xff]
    %v123 = vld [vmem:[#allocation3 + $0x118] sm:$0xff]
    %v124 = vld [vmem:[#allocation3 + $0x120] sm:$0xff]
    %v125 = vld [vmem:[#allocation3 + $0x128] sm:$0xff]
    %v126 = vld [vmem:[#allocation3 + $0x130] sm:$0xff]
    %v127 = vld [vmem:[#allocation3 + $0x138] sm:$0xff]
    %v128 = vld [vmem:[#allocation3 + $0x140] sm:$0xff]
    %v129 = vld [vmem:[#allocation3 + $0x148] sm:$0xff]
    %v130 = vld [vmem:[#allocation3 + $0x150] sm:$0xff]
    %v131 = vld [vmem:[#allocation3 + $0x158] sm:$0xff]
    %v132 = vld [vmem:[#allocation3 + $0x160] sm:$0xff]
    %v133 = vld [vmem:[#allocation3 + $0x168] sm:$0xff]
    %v134 = vld [vmem:[#allocation3 + $0x170] sm:$0xff]
    %v135 = vld [vmem:[#allocation3 + $0x178] sm:$0xff]
    %v136 = vld [vmem:[#allocation3 + $0x180] sm:$0xff]
    %v137 = vld [vmem:[#allocation3 + $0x188] sm:$0xff]
    %v138 = vld [vmem:[#allocation3 + $0x190] sm:$0xff]
    %v139 = vld [vmem:[#allocation3 + $0x198] sm:$0xff]
    %v140 = vld [vmem:[#allocation3 + $0x1a0] sm:$0xff]
    %v141 = vld [vmem:[#allocation3 + $0x1a8] sm:$0xff]
    %v142 = vld [vmem:[#allocation3 + $0x1b0] sm:$0xff]
    %v143 = vld [vmem:[#allocation3 + $0x1b8] sm:$0xff]
    %v144 = vld [vmem:[#allocation3 + $0x1c0] sm:$0xff]
    %v145 = vld [vmem:[#allocation3 + $0x1c8] sm:$0xff]
    %v146 = vld [vmem:[#allocation3 + $0x1d0] sm:$0xff]
    %v147 = vld [vmem:[#allocation3 + $0x1d8] sm:$0xff]
    %v148 = vld [vmem:[#allocation3 + $0x1e0] sm:$0xff]
    %v149 = vld [vmem:[#allocation3 + $0x1e8] sm:$0xff]
    %v150 = vld [vmem:[#allocation3 + $0x1f0] sm:$0xff]
    %v151 = vld [vmem:[#allocation3 + $0x1f8] sm:$0xff]
    %v152 = vld [vmem:[#allocation3 + $0x200] sm:$0xff]
    %v153 = vld [vmem:[#allocation3 + $0x208] sm:$0xff]
    %v154 = vld [vmem:[#allocation3 + $0x210] sm:$0xff]
    %v155 = vld [vmem:[#allocation3 + $0x218] sm:$0xff]
    %v156 = vld [vmem:[#allocation3 + $0x220] sm:$0xff]
    %v157 = vld [vmem:[#allocation3 + $0x228] sm:$0xff]
    %v158 = vld [vmem:[#allocation3 + $0x230] sm:$0xff]
    %v159 = vld [vmem:[#allocation3 + $0x238] sm:$0xff]
    %v160 = vld [vmem:[#allocation3 + $0x240] sm:$0xff]
    %v161 = vld [vmem:[#allocation3 + $0x248] sm:$0xff]
    %v162 = vld [vmem:[#allocation3 + $0x250] sm:$0xff]
    %v163 = vld [vmem:[#allocation3 + $0x258] sm:$0xff]
    %v164 = vld [vmem:[#allocation3 + $0x260] sm:$0xff]
    %v165 = vld [vmem:[#allocation3 + $0x268] sm:$0xff]
    %v166 = vld [vmem:[#allocation3 + $0x270] sm:$0xff]
    %v167 = vld [vmem:[#allocation3 + $0x278] sm:$0xff]
    %v168 = vld [vmem:[#allocation3 + $0x280] sm:$0xff]
    %v169 = vld [vmem:[#allocation3 + $0x288] sm:$0xff]
    %v170 = vld [vmem:[#allocation3 + $0x290] sm:$0xff]
    %v171 = vld [vmem:[#allocation3 + $0x298] sm:$0xff]
    %v172 = vld [vmem:[#allocation3 + $0x2a0] sm:$0xff]
    %v173 = vld [vmem:[#allocation3 + $0x2a8] sm:$0xff]
    %v174 = vld [vmem:[#allocation3 + $0x2b0] sm:$0xff]
    %v175 = vld [vmem:[#allocation3 + $0x2b8] sm:$0xff]
    %v176 = vld [vmem:[#allocation3 + $0x2c0] sm:$0xff]
    %v177 = vld [vmem:[#allocation3 + $0x2c8] sm:$0xff]
    %v178 = vld [vmem:[#allocation3 + $0x2d0] sm:$0xff]
    %v179 = vld [vmem:[#allocation3 + $0x2d8] sm:$0xff]
    %v180 = vld [vmem:[#allocation3 + $0x2e0] sm:$0xff]
    %v181 = vld [vmem:[#allocation3 + $0x2e8] sm:$0xff]
    %v182 = vld [vmem:[#allocation3 + $0x2f0] sm:$0xff]
    %v183 = vld [vmem:[#allocation3 + $0x2f8] sm:$0xff]
    %184 = vmatprep.subr.mxu0 0.0
    %185 = vmatpush1.msra.mxu0 %v72
    %186 = vmatprep.subr.mxu0 0.0
    %187 = vmatpush1.msra.mxu0 %v73
    %188 = vmatprep.subr.mxu0 0.0
    %189 = vmatpush1.msra.mxu0 %v74
    %190 = vmatprep.subr.mxu0 0.0
    %191 = vmatpush1.msra.mxu0 %v75
    %192 = vmatprep.subr.mxu0 0.0
    %193 = vmatpush1.msra.mxu0 %v76
    %194 = vmatprep.subr.mxu0 0.0
    %195 = vmatpush1.msra.mxu0 %v77
    %196 = vmatprep.subr.mxu0 0.0
    %197 = vmatpush1.msra.mxu0 %v78
    %198 = vmatprep.subr.mxu0 0.0
    %199 = vmatpush1.msra.mxu0 %v79
    %200 = vmatprep.subr.mxu0 0.0
    %201 = vmatpush1.msra.mxu0 %v80
    %202 = vmatprep.subr.mxu0 0.0
    %203 = vmatpush1.msra.mxu0 %v81
    %204 = vmatprep.subr.mxu0 0.0
    %205 = vmatpush1.msra.mxu0 %v82
    %206 = vmatprep.subr.mxu0 0.0
    %207 = vmatpush1.msra.mxu0 %v83
    %208 = vmatprep.subr.mxu0 0.0
    %209 = vmatpush1.msra.mxu0 %v84
    %210 = vmatprep.subr.mxu0 0.0
    %211 = vmatpush1.msra.mxu0 %v85
    %212 = vmatprep.subr.mxu0 0.0
    %213 = vmatpush1.msra.mxu0 %v86
    %214 = vmatprep.subr.mxu0 0.0
    %215 = vmatpush1.msra.mxu0 %v87
    %216 = vmatprep.subr.mxu0 0.0
    %217 = vmatpush1.msra.mxu0 0.0
    %218 = vmatprep.subr.mxu0 0.0
    %219 = vmatpush1.msra.mxu0 0.0
    %220 = vmatprep.subr.mxu0 0.0
    %221 = vmatpush1.msra.mxu0 0.0
    %222 = vmatprep.subr.mxu0 0.0
    %223 = vmatpush1.msra.mxu0 0.0
    %224 = vmatprep.subr.mxu0 0.0
    %225 = vmatpush1.msra.mxu0 0.0
    %226 = vmatprep.subr.mxu0 0.0
    %227 = vmatpush1.msra.mxu0 0.0
    %228 = vmatprep.subr.mxu0 0.0
    %229 = vmatpush1.msra.mxu0 0.0
    %230 = vmatprep.subr.mxu0 0.0
    %231 = vmatpush1.msra.mxu0 0.0
    %232 = vmatprep.subr.mxu0 0.0
    %233 = vmatpush1.msra.mxu0 0.0
    %234 = vmatprep.subr.mxu0 0.0
    %235 = vmatpush1.msra.mxu0 0.0
    %236 = vmatprep.subr.mxu0 0.0
    %237 = vmatpush1.msra.mxu0 0.0
    %238 = vmatprep.subr.mxu0 0.0
    %239 = vmatpush1.msra.mxu0 0.0
    %240 = vmatprep.subr.mxu0 0.0
    %241 = vmatpush1.msra.mxu0 0.0
    %242 = vmatprep.subr.mxu0 0.0
    %243 = vmatpush1.msra.mxu0 0.0
    %244 = vmatprep.subr.mxu0 0.0
    %245 = vmatpush1.msra.mxu0 0.0
    %246 = vmatprep.subr.mxu0 0.0
    %247 = vmatpush1.msra.mxu0 0.0
    %248 = vmatprep.mubr.f32.mxu0 0.0
    %249 = vmatmul.mubr.f32.gmra.mrb[0].mxu0 %v88
    %v250 = vpop.f32.mrb[0].mxu0
    %v251 = vadd.f32 0.0, %v250
    %v252 = vpop.f32.mrb[0].mxu0
    %253 = vmatprep.mubr.f32.mxu0 0.0
    %254 = vmatmul.mubr.f32.gmra.mrb[0].mxu0 %v89
    %v255 = vpop.f32.mrb[0].mxu0
    %v256 = vadd.f32 0.0, %v255
    %v257 = vpop.f32.mrb[0].mxu0
    %258 = vmatprep.mubr.f32.mxu0 0.0
    %259 = vmatmul.mubr.f32.gmra.mrb[0].mxu0 %v90
    %v260 = vpop.f32.mrb[0].mxu0
    %v261 = vadd.f32 0.0, %v260
    %v262 = vpop.f32.mrb[0].mxu0
    %263 = vmatprep.mubr.f32.mxu0 0.0
    %264 = vmatmul.mubr.f32.gmra.mrb[0].mxu0 %v91
    %v265 = vpop.f32.mrb[0].mxu0
    %v266 = vadd.f32 0.0, %v265
    %v267 = vpop.f32.mrb[0].mxu0
    %268 = vmatprep.mubr.f32.mxu0 0.0
    %269 = vmatmul.mubr.f32.gmra.mrb[0].mxu0 %v92
    %v270 = vpop.f32.mrb[0].mxu0
    %v271 = vadd.f32 0.0, %v270
    %v272 = vpop.f32.mrb[0].mxu0
    %273 = vmatprep.mubr.f32.mxu0 0.0
    %274 = vmatmul.mubr.f32.gmra.mrb[0].mxu0 %v93
    %v275 = vpop.f32.mrb[0].mxu0
    %v276 = vadd.f32 0.0, %v275
    %v277 = vpop.f32.mrb[0].mxu0
    %278 = vmatprep.mubr.f32.mxu0 0.0
    %279 = vmatmul.mubr.f32.gmra.mrb[0].mxu0 %v94
    %v280 = vpop.f32.mrb[0].mxu0
    %v281 = vadd.f32 0.0, %v280
    %v282 = vpop.f32.mrb[0].mxu0
    %283 = vmatprep.mubr.f32.mxu0 0.0
    %284 = vmatmul.mubr.f32.gmra.mrb[0].mxu0 %v95
    %v285 = vpop.f32.mrb[0].mxu0
    %v286 = vadd.f32 0.0, %v285
    %v287 = vpop.f32.mrb[0].mxu0
    %288 = vmatprep.mubr.f32.mxu0 0.0
    %289 = vmatmul.mubr.f32.gmra.mrb[0].mxu0 %v96
    %v290 = vpop.f32.mrb[0].mxu0
    %v291 = vadd.f32 0.0, %v290
    %v292 = vpop.f32.mrb[0].mxu0
    %293 = vmatprep.mubr.f32.mxu0 0.0
    %294 = vmatmul.mubr.f32.gmra.mrb[0].mxu0 %v97
    %v295 = vpop.f32.mrb[0].mxu0
    %v296 = vadd.f32 0.0, %v295
    %v297 = vpop.f32.mrb[0].mxu0
    %298 = vmatprep.mubr.f32.mxu0 0.0
    %299 = vmatmul.mubr.f32.gmra.mrb[0].mxu0 %v98
    %v300 = vpop.f32.mrb[0].mxu0
    %v301 = vadd.f32 0.0, %v300
    %v302 = vpop.f32.mrb[0].mxu0
    %303 = vmatprep.mubr.f32.mxu0 0.0
    %304 = vmatmul.mubr.f32.gmra.mrb[0].mxu0 %v99
    %v305 = vpop.f32.mrb[0].mxu0
    %v306 = vadd.f32 0.0, %v305
    %v307 = vpop.f32.mrb[0].mxu0
    %308 = vmatprep.mubr.f32.mxu0 0.0
    %309 = vmatmul.mubr.f32.gmra.mrb[0].mxu0 %v100
    %v310 = vpop.f32.mrb[0].mxu0
    %v311 = vadd.f32 0.0, %v310
    %v312 = vpop.f32.mrb[0].mxu0
    %313 = vmatprep.mubr.f32.mxu0 0.0
    %314 = vmatmul.mubr.f32.gmra.mrb[0].mxu0 %v101
    %v315 = vpop.f32.mrb[0].mxu0
    %v316 = vadd.f32 0.0, %v315
    %v317 = vpop.f32.mrb[0].mxu0
    %318 = vmatprep.mubr.f32.mxu0 0.0
    %319 = vmatmul.mubr.f32.gmra.mrb[0].mxu0 %v102
    %v320 = vpop.f32.mrb[0].mxu0
    %v321 = vadd.f32 0.0, %v320
    %v322 = vpop.f32.mrb[0].mxu0
    %323 = vmatprep.mubr.f32.mxu0 0.0
    %324 = vmatmul.mubr.f32.gmra.mrb[0].mxu0 %v103
    %v325 = vpop.f32.mrb[0].mxu0
    %v326 = vadd.f32 0.0, %v325
    %v327 = vpop.f32.mrb[0].mxu0
    %328 = vmatprep.mubr.f32.mxu0 0.0
    %329 = vmatmul.mubr.f32.gmra.mrb[0].mxu0 %v104
    %v330 = vpop.f32.mrb[0].mxu0
    %v331 = vadd.f32 0.0, %v330
    %v332 = vpop.f32.mrb[0].mxu0
    %333 = vmatprep.mubr.f32.mxu0 0.0
    %334 = vmatmul.mubr.f32.gmra.mrb[0].mxu0 %v105
    %v335 = vpop.f32.mrb[0].mxu0
    %v336 = vadd.f32 0.0, %v335
    %v337 = vpop.f32.mrb[0].mxu0
    %338 = vmatprep.mubr.f32.mxu0 0.0
    %339 = vmatmul.mubr.f32.gmra.mrb[0].mxu0 %v106
    %v340 = vpop.f32.mrb[0].mxu0
    %v341 = vadd.f32 0.0, %v340
    %v342 = vpop.f32.mrb[0].mxu0
    %343 = vmatprep.mubr.f32.mxu0 0.0
    %344 = vmatmul.mubr.f32.gmra.mrb[0].mxu0 %v107
    %v345 = vpop.f32.mrb[0].mxu0
    %v346 = vadd.f32 0.0, %v345
    %v347 = vpop.f32.mrb[0].mxu0
    %348 = vmatprep.mubr.f32.mxu0 0.0
    %349 = vmatmul.mubr.f32.gmra.mrb[0].mxu0 %v108
    %v350 = vpop.f32.mrb[0].mxu0
    %v351 = vadd.f32 0.0, %v350
    %v352 = vpop.f32.mrb[0].mxu0
    %353 = vmatprep.mubr.f32.mxu0 0.0
    %354 = vmatmul.mubr.f32.gmra.mrb[0].mxu0 %v109
    %v355 = vpop.f32.mrb[0].mxu0
    %v356 = vadd.f32 0.0, %v355
    %v357 = vpop.f32.mrb[0].mxu0
    %358 = vmatprep.mubr.f32.mxu0 0.0
    %359 = vmatmul.mubr.f32.gmra.mrb[0].mxu0 %v110
    %v360 = vpop.f32.mrb[0].mxu0
    %v361 = vadd.f32 0.0, %v360
    %v362 = vpop.f32.mrb[0].mxu0
    %363 = vmatprep.mubr.f32.mxu0 0.0
    %364 = vmatmul.mubr.f32.gmra.mrb[0].mxu0 %v111
    %v365 = vpop.f32.mrb[0].mxu0
    %v366 = vadd.f32 0.0, %v365
    %v367 = vpop.f32.mrb[0].mxu0
    %368 = vmatprep.mubr.f32.mxu0 0.0
    %369 = vmatmul.mubr.f32.gmra.mrb[0].mxu0 %v112
    %v370 = vpop.f32.mrb[0].mxu0
    %v371 = vadd.f32 0.0, %v370
    %v372 = vpop.f32.mrb[0].mxu0
    %373 = vmatprep.mubr.f32.mxu0 0.0
    %374 = vmatmul.mubr.f32.gmra.mrb[0].mxu0 %v113
    %v375 = vpop.f32.mrb[0].mxu0
    %v376 = vadd.f32 0.0, %v375
    %v377 = vpop.f32.mrb[0].mxu0
    %378 = vmatprep.mubr.f32.mxu0 0.0
    %379 = vmatmul.mubr.f32.gmra.mrb[0].mxu0 %v114
    %v380 = vpop.f32.mrb[0].mxu0
    %v381 = vadd.f32 0.0, %v380
    %v382 = vpop.f32.mrb[0].mxu0
    %383 = vmatprep.mubr.f32.mxu0 0.0
    %384 = vmatmul.mubr.f32.gmra.mrb[0].mxu0 %v115
    %v385 = vpop.f32.mrb[0].mxu0
    %v386 = vadd.f32 0.0, %v385
    %v387 = vpop.f32.mrb[0].mxu0
    %388 = vmatprep.mubr.f32.mxu0 0.0
    %389 = vmatmul.mubr.f32.gmra.mrb[0].mxu0 %v116
    %v390 = vpop.f32.mrb[0].mxu0
    %v391 = vadd.f32 0.0, %v390
    %v392 = vpop.f32.mrb[0].mxu0
    %393 = vmatprep.mubr.f32.mxu0 0.0
    %394 = vmatmul.mubr.f32.gmra.mrb[0].mxu0 %v117
    %v395 = vpop.f32.mrb[0].mxu0
    %v396 = vadd.f32 0.0, %v395
    %v397 = vpop.f32.mrb[0].mxu0
    %398 = vmatprep.mubr.f32.mxu0 0.0
    %399 = vmatmul.mubr.f32.gmra.mrb[0].mxu0 %v118
    %v400 = vpop.f32.mrb[0].mxu0
    %v401 = vadd.f32 0.0, %v400
    %v402 = vpop.f32.mrb[0].mxu0
    %403 = vmatprep.mubr.f32.mxu0 0.0
    %404 = vmatmul.mubr.f32.gmra.mrb[0].mxu0 %v119
    %v405 = vpop.f32.mrb[0].mxu0
    %v406 = vadd.f32 0.0, %v405
    %v407 = vpop.f32.mrb[0].mxu0
    %408 = vmatprep.mubr.f32.mxu0 0.0
    %409 = vmatmul.mubr.f32.gmra.mrb[0].mxu0 %v120
    %v410 = vpop.f32.mrb[0].mxu0
    %v411 = vadd.f32 0.0, %v410
    %v412 = vpop.f32.mrb[0].mxu0
    %413 = vmatprep.mubr.f32.mxu0 0.0
    %414 = vmatmul.mubr.f32.gmra.mrb[0].mxu0 %v121
    %v415 = vpop.f32.mrb[0].mxu0
    %v416 = vadd.f32 0.0, %v415
    %v417 = vpop.f32.mrb[0].mxu0
    %418 = vmatprep.mubr.f32.mxu0 0.0
    %419 = vmatmul.mubr.f32.gmra.mrb[0].mxu0 %v122
    %v420 = vpop.f32.mrb[0].mxu0
    %v421 = vadd.f32 0.0, %v420
    %v422 = vpop.f32.mrb[0].mxu0
    %423 = vmatprep.mubr.f32.mxu0 0.0
    %424 = vmatmul.mubr.f32.gmra.mrb[0].mxu0 %v123
    %v425 = vpop.f32.mrb[0].mxu0
    %v426 = vadd.f32 0.0, %v425
    %v427 = vpop.f32.mrb[0].mxu0
    %428 = vmatprep.mubr.f32.mxu0 0.0
    %429 = vmatmul.mubr.f32.gmra.mrb[0].mxu0 %v124
    %v430 = vpop.f32.mrb[0].mxu0
    %v431 = vadd.f32 0.0, %v430
    %v432 = vpop.f32.mrb[0].mxu0
    %433 = vmatprep.mubr.f32.mxu0 0.0
    %434 = vmatmul.mubr.f32.gmra.mrb[0].mxu0 %v125
    %v435 = vpop.f32.mrb[0].mxu0
    %v436 = vadd.f32 0.0, %v435
    %v437 = vpop.f32.mrb[0].mxu0
    %438 = vmatprep.mubr.f32.mxu0 0.0
    %439 = vmatmul.mubr.f32.gmra.mrb[0].mxu0 %v126
    %v440 = vpop.f32.mrb[0].mxu0
    %v441 = vadd.f32 0.0, %v440
    %v442 = vpop.f32.mrb[0].mxu0
    %443 = vmatprep.mubr.f32.mxu0 0.0
    %444 = vmatmul.mubr.f32.gmra.mrb[0].mxu0 %v127
    %v445 = vpop.f32.mrb[0].mxu0
    %v446 = vadd.f32 0.0, %v445
    %v447 = vpop.f32.mrb[0].mxu0
    %448 = vmatprep.mubr.f32.mxu0 0.0
    %449 = vmatmul.mubr.f32.gmra.mrb[0].mxu0 %v128
    %v450 = vpop.f32.mrb[0].mxu0
    %v451 = vadd.f32 0.0, %v450
    %v452 = vpop.f32.mrb[0].mxu0
    %453 = vmatprep.mubr.f32.mxu0 0.0
    %454 = vmatmul.mubr.f32.gmra.mrb[0].mxu0 %v129
    %v455 = vpop.f32.mrb[0].mxu0
    %v456 = vadd.f32 0.0, %v455
    %v457 = vpop.f32.mrb[0].mxu0
    %458 = vmatprep.mubr.f32.mxu0 0.0
    %459 = vmatmul.mubr.f32.gmra.mrb[0].mxu0 %v130
    %v460 = vpop.f32.mrb[0].mxu0
    %v461 = vadd.f32 0.0, %v460
    %v462 = vpop.f32.mrb[0].mxu0
    %463 = vmatprep.mubr.f32.mxu0 0.0
    %464 = vmatmul.mubr.f32.gmra.mrb[0].mxu0 %v131
    %v465 = vpop.f32.mrb[0].mxu0
    %v466 = vadd.f32 0.0, %v465
    %v467 = vpop.f32.mrb[0].mxu0
    %468 = vmatprep.mubr.f32.mxu0 0.0
    %469 = vmatmul.mubr.f32.gmra.mrb[0].mxu0 %v132
    %v470 = vpop.f32.mrb[0].mxu0
    %v471 = vadd.f32 0.0, %v470
    %v472 = vpop.f32.mrb[0].mxu0
    %473 = vmatprep.mubr.f32.mxu0 0.0
    %474 = vmatmul.mubr.f32.gmra.mrb[0].mxu0 %v133
    %v475 = vpop.f32.mrb[0].mxu0
    %v476 = vadd.f32 0.0, %v475
    %v477 = vpop.f32.mrb[0].mxu0
    %478 = vmatprep.mubr.f32.mxu0 0.0
    %479 = vmatmul.mubr.f32.gmra.mrb[0].mxu0 %v134
    %v480 = vpop.f32.mrb[0].mxu0
    %v481 = vadd.f32 0.0, %v480
    %v482 = vpop.f32.mrb[0].mxu0
    %483 = vmatprep.mubr.f32.mxu0 0.0
    %484 = vmatmul.mubr.f32.gmra.mrb[0].mxu0 %v135
    %v485 = vpop.f32.mrb[0].mxu0
    %v486 = vadd.f32 0.0, %v485
    %v487 = vpop.f32.mrb[0].mxu0
    %488 = vmatprep.mubr.f32.mxu0 0.0
    %489 = vmatmul.mubr.f32.gmra.mrb[0].mxu0 %v136
    %v490 = vpop.f32.mrb[0].mxu0
    %v491 = vadd.f32 0.0, %v490
    %v492 = vpop.f32.mrb[0].mxu0
    %493 = vmatprep.mubr.f32.mxu0 0.0
    %494 = vmatmul.mubr.f32.gmra.mrb[0].mxu0 %v137
    %v495 = vpop.f32.mrb[0].mxu0
    %v496 = vadd.f32 0.0, %v495
    %v497 = vpop.f32.mrb[0].mxu0
    %498 = vmatprep.mubr.f32.mxu0 0.0
    %499 = vmatmul.mubr.f32.gmra.mrb[0].mxu0 %v138
    %v500 = vpop.f32.mrb[0].mxu0
    %v501 = vadd.f32 0.0, %v500
    %v502 = vpop.f32.mrb[0].mxu0
    %503 = vmatprep.mubr.f32.mxu0 0.0
    %504 = vmatmul.mubr.f32.gmra.mrb[0].mxu0 %v139
    %v505 = vpop.f32.mrb[0].mxu0
    %v506 = vadd.f32 0.0, %v505
    %v507 = vpop.f32.mrb[0].mxu0
    %508 = vmatprep.mubr.f32.mxu0 0.0
    %509 = vmatmul.mubr.f32.gmra.mrb[0].mxu0 %v140
    %v510 = vpop.f32.mrb[0].mxu0
    %v511 = vadd.f32 0.0, %v510
    %v512 = vpop.f32.mrb[0].mxu0
    %513 = vmatprep.mubr.f32.mxu0 0.0
    %514 = vmatmul.mubr.f32.gmra.mrb[0].mxu0 %v141
    %v515 = vpop.f32.mrb[0].mxu0
    %v516 = vadd.f32 0.0, %v515
    %v517 = vpop.f32.mrb[0].mxu0
    %518 = vmatprep.mubr.f32.mxu0 0.0
    %519 = vmatmul.mubr.f32.gmra.mrb[0].mxu0 %v142
    %v520 = vpop.f32.mrb[0].mxu0
    %v521 = vadd.f32 0.0, %v520
    %v522 = vpop.f32.mrb[0].mxu0
    %523 = vmatprep.mubr.f32.mxu0 0.0
    %524 = vmatmul.mubr.f32.gmra.mrb[0].mxu0 %v143
    %v525 = vpop.f32.mrb[0].mxu0
    %v526 = vadd.f32 0.0, %v525
    %v527 = vpop.f32.mrb[0].mxu0
    %528 = vmatprep.mubr.f32.mxu0 0.0
    %529 = vmatmul.mubr.f32.gmra.mrb[0].mxu0 %v144
    %v530 = vpop.f32.mrb[0].mxu0
    %v531 = vadd.f32 0.0, %v530
    %v532 = vpop.f32.mrb[0].mxu0
    %533 = vmatprep.mubr.f32.mxu0 0.0
    %534 = vmatmul.mubr.f32.gmra.mrb[0].mxu0 %v145
    %v535 = vpop.f32.mrb[0].mxu0
    %v536 = vadd.f32 0.0, %v535
    %v537 = vpop.f32.mrb[0].mxu0
    %538 = vmatprep.mubr.f32.mxu0 0.0
    %539 = vmatmul.mubr.f32.gmra.mrb[0].mxu0 %v146
    %v540 = vpop.f32.mrb[0].mxu0
    %v541 = vadd.f32 0.0, %v540
    %v542 = vpop.f32.mrb[0].mxu0
    %543 = vmatprep.mubr.f32.mxu0 0.0
    %544 = vmatmul.mubr.f32.gmra.mrb[0].mxu0 %v147
    %v545 = vpop.f32.mrb[0].mxu0
    %v546 = vadd.f32 0.0, %v545
    %v547 = vpop.f32.mrb[0].mxu0
    %548 = vmatprep.mubr.f32.mxu0 0.0
    %549 = vmatmul.mubr.f32.gmra.mrb[0].mxu0 %v148
    %v550 = vpop.f32.mrb[0].mxu0
    %v551 = vadd.f32 0.0, %v550
    %v552 = vpop.f32.mrb[0].mxu0
    %553 = vmatprep.mubr.f32.mxu0 0.0
    %554 = vmatmul.mubr.f32.gmra.mrb[0].mxu0 %v149
    %v555 = vpop.f32.mrb[0].mxu0
    %v556 = vadd.f32 0.0, %v555
    %v557 = vpop.f32.mrb[0].mxu0
    %558 = vmatprep.mubr.f32.mxu0 0.0
    %559 = vmatmul.mubr.f32.gmra.mrb[0].mxu0 %v150
    %v560 = vpop.f32.mrb[0].mxu0
    %v561 = vadd.f32 0.0, %v560
    %v562 = vpop.f32.mrb[0].mxu0
    %563 = vmatprep.mubr.f32.mxu0 0.0
    %564 = vmatmul.mubr.f32.gmra.mrb[0].mxu0 %v151
    %v565 = vpop.f32.mrb[0].mxu0
    %v566 = vadd.f32 0.0, %v565
    %v567 = vpop.f32.mrb[0].mxu0
    %568 = vmatprep.mubr.f32.mxu0 0.0
    %569 = vmatmul.mubr.f32.gmra.mrb[0].mxu0 %v152
    %v570 = vpop.f32.mrb[0].mxu0
    %v571 = vadd.f32 0.0, %v570
    %v572 = vpop.f32.mrb[0].mxu0
    %573 = vmatprep.mubr.f32.mxu0 0.0
    %574 = vmatmul.mubr.f32.gmra.mrb[0].mxu0 %v153
    %v575 = vpop.f32.mrb[0].mxu0
    %v576 = vadd.f32 0.0, %v575
    %v577 = vpop.f32.mrb[0].mxu0
    %578 = vmatprep.mubr.f32.mxu0 0.0
    %579 = vmatmul.mubr.f32.gmra.mrb[0].mxu0 %v154
    %v580 = vpop.f32.mrb[0].mxu0
    %v581 = vadd.f32 0.0, %v580
    %v582 = vpop.f32.mrb[0].mxu0
    %583 = vmatprep.mubr.f32.mxu0 0.0
    %584 = vmatmul.mubr.f32.gmra.mrb[0].mxu0 %v155
    %v585 = vpop.f32.mrb[0].mxu0
    %v586 = vadd.f32 0.0, %v585
    %v587 = vpop.f32.mrb[0].mxu0
    %588 = vmatprep.mubr.f32.mxu0 0.0
    %589 = vmatmul.mubr.f32.gmra.mrb[0].mxu0 %v156
    %v590 = vpop.f32.mrb[0].mxu0
    %v591 = vadd.f32 0.0, %v590
    %v592 = vpop.f32.mrb[0].mxu0
    %593 = vmatprep.mubr.f32.mxu0 0.0
    %594 = vmatmul.mubr.f32.gmra.mrb[0].mxu0 %v157
    %v595 = vpop.f32.mrb[0].mxu0
    %v596 = vadd.f32 0.0, %v595
    %v597 = vpop.f32.mrb[0].mxu0
    %598 = vmatprep.mubr.f32.mxu0 0.0
    %599 = vmatmul.mubr.f32.gmra.mrb[0].mxu0 %v158
    %v600 = vpop.f32.mrb[0].mxu0
    %v601 = vadd.f32 0.0, %v600
    %v602 = vpop.f32.mrb[0].mxu0
    %603 = vmatprep.mubr.f32.mxu0 0.0
    %604 = vmatmul.mubr.f32.gmra.mrb[0].mxu0 %v159
    %v605 = vpop.f32.mrb[0].mxu0
    %v606 = vadd.f32 0.0, %v605
    %v607 = vpop.f32.mrb[0].mxu0
    %608 = vmatprep.mubr.f32.mxu0 0.0
    %609 = vmatmul.mubr.f32.gmra.mrb[0].mxu0 %v160
    %v610 = vpop.f32.mrb[0].mxu0
    %v611 = vadd.f32 0.0, %v610
    %v612 = vpop.f32.mrb[0].mxu0
    %613 = vmatprep.mubr.f32.mxu0 0.0
    %614 = vmatmul.mubr.f32.gmra.mrb[0].mxu0 %v161
    %v615 = vpop.f32.mrb[0].mxu0
    %v616 = vadd.f32 0.0, %v615
    %v617 = vpop.f32.mrb[0].mxu0
    %618 = vmatprep.mubr.f32.mxu0 0.0
    %619 = vmatmul.mubr.f32.gmra.mrb[0].mxu0 %v162
    %v620 = vpop.f32.mrb[0].mxu0
    %v621 = vadd.f32 0.0, %v620
    %v622 = vpop.f32.mrb[0].mxu0
    %623 = vmatprep.mubr.f32.mxu0 0.0
    %624 = vmatmul.mubr.f32.gmra.mrb[0].mxu0 %v163
    %v625 = vpop.f32.mrb[0].mxu0
    %v626 = vadd.f32 0.0, %v625
    %v627 = vpop.f32.mrb[0].mxu0
    %628 = vmatprep.mubr.f32.mxu0 0.0
    %629 = vmatmul.mubr.f32.gmra.mrb[0].mxu0 %v164
    %v630 = vpop.f32.mrb[0].mxu0
    %v631 = vadd.f32 0.0, %v630
    %v632 = vpop.f32.mrb[0].mxu0
    %633 = vmatprep.mubr.f32.mxu0 0.0
    %634 = vmatmul.mubr.f32.gmra.mrb[0].mxu0 %v165
    %v635 = vpop.f32.mrb[0].mxu0
    %v636 = vadd.f32 0.0, %v635
    %v637 = vpop.f32.mrb[0].mxu0
    %638 = vmatprep.mubr.f32.mxu0 0.0
    %639 = vmatmul.mubr.f32.gmra.mrb[0].mxu0 %v166
    %v640 = vpop.f32.mrb[0].mxu0
    %v641 = vadd.f32 0.0, %v640
    %v642 = vpop.f32.mrb[0].mxu0
    %643 = vmatprep.mubr.f32.mxu0 0.0
    %644 = vmatmul.mubr.f32.gmra.mrb[0].mxu0 %v167
    %v645 = vpop.f32.mrb[0].mxu0
    %v646 = vadd.f32 0.0, %v645
    %v647 = vpop.f32.mrb[0].mxu0
    %648 = vmatprep.mubr.f32.mxu0 0.0
    %649 = vmatmul.mubr.f32.gmra.mrb[0].mxu0 %v168
    %v650 = vpop.f32.mrb[0].mxu0
    %v651 = vadd.f32 0.0, %v650
    %v652 = vpop.f32.mrb[0].mxu0
    %653 = vmatprep.mubr.f32.mxu0 0.0
    %654 = vmatmul.mubr.f32.gmra.mrb[0].mxu0 %v169
    %v655 = vpop.f32.mrb[0].mxu0
    %v656 = vadd.f32 0.0, %v655
    %v657 = vpop.f32.mrb[0].mxu0
    %658 = vmatprep.mubr.f32.mxu0 0.0
    %659 = vmatmul.mubr.f32.gmra.mrb[0].mxu0 %v170
    %v660 = vpop.f32.mrb[0].mxu0
    %v661 = vadd.f32 0.0, %v660
    %v662 = vpop.f32.mrb[0].mxu0
    %663 = vmatprep.mubr.f32.mxu0 0.0
    %664 = vmatmul.mubr.f32.gmra.mrb[0].mxu0 %v171
    %v665 = vpop.f32.mrb[0].mxu0
    %v666 = vadd.f32 0.0, %v665
    %v667 = vpop.f32.mrb[0].mxu0
    %668 = vmatprep.mubr.f32.mxu0 0.0
    %669 = vmatmul.mubr.f32.gmra.mrb[0].mxu0 %v172
    %v670 = vpop.f32.mrb[0].mxu0
    %v671 = vadd.f32 0.0, %v670
    %v672 = vpop.f32.mrb[0].mxu0
    %673 = vmatprep.mubr.f32.mxu0 0.0
    %674 = vmatmul.mubr.f32.gmra.mrb[0].mxu0 %v173
    %v675 = vpop.f32.mrb[0].mxu0
    %v676 = vadd.f32 0.0, %v675
    %v677 = vpop.f32.mrb[0].mxu0
    %678 = vmatprep.mubr.f32.mxu0 0.0
    %679 = vmatmul.mubr.f32.gmra.mrb[0].mxu0 %v174
    %v680 = vpop.f32.mrb[0].mxu0
    %v681 = vadd.f32 0.0, %v680
    %v682 = vpop.f32.mrb[0].mxu0
    %683 = vmatprep.mubr.f32.mxu0 0.0
    %684 = vmatmul.mubr.f32.gmra.mrb[0].mxu0 %v175
    %v685 = vpop.f32.mrb[0].mxu0
    %v686 = vadd.f32 0.0, %v685
    %v687 = vpop.f32.mrb[0].mxu0
    %688 = vmatprep.mubr.f32.mxu0 0.0
    %689 = vmatmul.mubr.f32.gmra.mrb[0].mxu0 %v176
    %v690 = vpop.f32.mrb[0].mxu0
    %v691 = vadd.f32 0.0, %v690
    %v692 = vpop.f32.mrb[0].mxu0
    %693 = vmatprep.mubr.f32.mxu0 0.0
    %694 = vmatmul.mubr.f32.gmra.mrb[0].mxu0 %v177
    %v695 = vpop.f32.mrb[0].mxu0
    %v696 = vadd.f32 0.0, %v695
    %v697 = vpop.f32.mrb[0].mxu0
    %698 = vmatprep.mubr.f32.mxu0 0.0
    %699 = vmatmul.mubr.f32.gmra.mrb[0].mxu0 %v178
    %v700 = vpop.f32.mrb[0].mxu0
    %v701 = vadd.f32 0.0, %v700
    %v702 = vpop.f32.mrb[0].mxu0
    %703 = vmatprep.mubr.f32.mxu0 0.0
    %704 = vmatmul.mubr.f32.gmra.mrb[0].mxu0 %v179
    %v705 = vpop.f32.mrb[0].mxu0
    %v706 = vadd.f32 0.0, %v705
    %v707 = vpop.f32.mrb[0].mxu0
    %708 = vmatprep.mubr.f32.mxu0 0.0
    %709 = vmatmul.mubr.f32.gmra.mrb[0].mxu0 %v180
    %v710 = vpop.f32.mrb[0].mxu0
    %v711 = vadd.f32 0.0, %v710
    %v712 = vpop.f32.mrb[0].mxu0
    %713 = vmatprep.mubr.f32.mxu0 0.0
    %714 = vmatmul.mubr.f32.gmra.mrb[0].mxu0 %v181
    %v715 = vpop.f32.mrb[0].mxu0
    %v716 = vadd.f32 0.0, %v715
    %v717 = vpop.f32.mrb[0].mxu0
    %718 = vmatprep.mubr.f32.mxu0 0.0
    %719 = vmatmul.mubr.f32.gmra.mrb[0].mxu0 %v182
    %v720 = vpop.f32.mrb[0].mxu0
    %v721 = vadd.f32 0.0, %v720
    %v722 = vpop.f32.mrb[0].mxu0
    %723 = vmatprep.mubr.f32.mxu0 0.0
    %724 = vmatmul.mubr.f32.gmra.mrb[0].mxu0 %v183
    %v725 = vpop.f32.mrb[0].mxu0
    %v726 = vadd.f32 0.0, %v725
    %v727 = vpop.f32.mrb[0].mxu0
    %728 = vdwg.mxu0
    %729 = vmatprep.subr.mxu0 0.0
    %730 = vmatpush1.msra.mxu0 %v251
    %731 = vmatprep.subr.mxu0 0.0
    %732 = vmatpush1.msra.mxu0 %v256
    %733 = vmatprep.subr.mxu0 0.0
    %734 = vmatpush1.msra.mxu0 %v261
    %735 = vmatprep.subr.mxu0 0.0
    %736 = vmatpush1.msra.mxu0 %v266
    %737 = vmatprep.subr.mxu0 0.0
    %738 = vmatpush1.msra.mxu0 %v271
    %739 = vmatprep.subr.mxu0 0.0
    %740 = vmatpush1.msra.mxu0 %v276
    %741 = vmatprep.subr.mxu0 0.0
    %742 = vmatpush1.msra.mxu0 %v281
    %743 = vmatprep.subr.mxu0 0.0
    %744 = vmatpush1.msra.mxu0 %v286
    %745 = vmatprep.subr.mxu0 0.0
    %746 = vmatpush1.msra.mxu0 %v291
    %747 = vmatprep.subr.mxu0 0.0
    %748 = vmatpush1.msra.mxu0 %v296
    %749 = vmatprep.subr.mxu0 0.0
    %750 = vmatpush1.msra.mxu0 %v301
    %751 = vmatprep.subr.mxu0 0.0
    %752 = vmatpush1.msra.mxu0 %v306
    %753 = vmatprep.subr.mxu0 0.0
    %754 = vmatpush1.msra.mxu0 %v311
    %755 = vmatprep.subr.mxu0 0.0
    %756 = vmatpush1.msra.mxu0 %v316
    %757 = vmatprep.subr.mxu0 0.0
    %758 = vmatpush1.msra.mxu0 %v321
    %759 = vmatprep.subr.mxu0 0.0
    %760 = vmatpush1.msra.mxu0 %v326
    %761 = vmatprep.subr.mxu0 0.0
    %762 = vmatpush1.msra.mxu0 0.0
    %763 = vmatprep.subr.mxu0 0.0
    %764 = vmatpush1.msra.mxu0 0.0
    %765 = vmatprep.subr.mxu0 0.0
    %766 = vmatpush1.msra.mxu0 0.0
    %767 = vmatprep.subr.mxu0 0.0
    %768 = vmatpush1.msra.mxu0 0.0
    %769 = vmatprep.subr.mxu0 0.0
    %770 = vmatpush1.msra.mxu0 0.0
    %771 = vmatprep.subr.mxu0 0.0
    %772 = vmatpush1.msra.mxu0 0.0
    %773 = vmatprep.subr.mxu0 0.0
    %774 = vmatpush1.msra.mxu0 0.0
    %775 = vmatprep.subr.mxu0 0.0
    %776 = vmatpush1.msra.mxu0 0.0
    %777 = vmatprep.subr.mxu0 0.0
    %778 = vmatpush1.msra.mxu0 0.0
    %779 = vmatprep.subr.mxu0 0.0
    %780 = vmatpush1.msra.mxu0 0.0
    %781 = vmatprep.subr.mxu0 0.0
    %782 = vmatpush1.msra.mxu0 0.0
    %783 = vmatprep.subr.mxu0 0.0
    %784 = vmatpush1.msra.mxu0 0.0
    %785 = vmatprep.subr.mxu0 0.0
    %786 = vmatpush1.msra.mxu0 0.0
    %787 = vmatprep.subr.mxu0 0.0
    %788 = vmatpush1.msra.mxu0 0.0
    %789 = vmatprep.subr.mxu0 0.0
    %790 = vmatpush1.msra.mxu0 0.0
    %791 = vmatprep.subr.mxu0 0.0
    %792 = vmatpush1.msra.mxu0 0.0
    %793 = vmatprep.mubr.f32.mxu0 0.0
    %794 = vmatmul.mubr.f32.gmra.mrb[0].mxu0 %v56
    %v795 = vpop.f32.mrb[0].mxu0
    %v796 = vadd.f32 0.0, %v795
    %v797 = vpop.f32.mrb[0].mxu0
    %798 = vmatprep.mubr.f32.mxu0 0.0
    %799 = vmatmul.mubr.f32.gmra.mrb[0].mxu0 %v57
    %v800 = vpop.f32.mrb[0].mxu0
    %v801 = vadd.f32 0.0, %v800
    %v802 = vpop.f32.mrb[0].mxu0
    %803 = vmatprep.mubr.f32.mxu0 0.0
    %804 = vmatmul.mubr.f32.gmra.mrb[0].mxu0 %v58
    %v805 = vpop.f32.mrb[0].mxu0
    %v806 = vadd.f32 0.0, %v805
    %v807 = vpop.f32.mrb[0].mxu0
    %808 = vmatprep.mubr.f32.mxu0 0.0
    %809 = vmatmul.mubr.f32.gmra.mrb[0].mxu0 %v59
    %v810 = vpop.f32.mrb[0].mxu0
    %v811 = vadd.f32 0.0, %v810
    %v812 = vpop.f32.mrb[0].mxu0
    %813 = vmatprep.mubr.f32.mxu0 0.0
    %814 = vmatmul.mubr.f32.gmra.mrb[0].mxu0 %v60
    %v815 = vpop.f32.mrb[0].mxu0
    %v816 = vadd.f32 0.0, %v815
    %v817 = vpop.f32.mrb[0].mxu0
    %818 = vmatprep.mubr.f32.mxu0 0.0
    %819 = vmatmul.mubr.f32.gmra.mrb[0].mxu0 %v61
    %v820 = vpop.f32.mrb[0].mxu0
    %v821 = vadd.f32 0.0, %v820
    %v822 = vpop.f32.mrb[0].mxu0
    %823 = vmatprep.mubr.f32.mxu0 0.0
    %824 = vmatmul.mubr.f32.gmra.mrb[0].mxu0 %v62
    %v825 = vpop.f32.mrb[0].mxu0
    %v826 = vadd.f32 0.0, %v825
    %v827 = vpop.f32.mrb[0].mxu0
    %828 = vmatprep.mubr.f32.mxu0 0.0
    %829 = vmatmul.mubr.f32.gmra.mrb[0].mxu0 %v63
    %v830 = vpop.f32.mrb[0].mxu0
    %v831 = vadd.f32 0.0, %v830
    %v832 = vpop.f32.mrb[0].mxu0
    %833 = vmatprep.mubr.f32.mxu0 0.0
    %834 = vmatmul.mubr.f32.gmra.mrb[0].mxu0 %v64
    %v835 = vpop.f32.mrb[0].mxu0
    %v836 = vadd.f32 0.0, %v835
    %v837 = vpop.f32.mrb[0].mxu0
    %838 = vmatprep.mubr.f32.mxu0 0.0
    %839 = vmatmul.mubr.f32.gmra.mrb[0].mxu0 %v65
    %v840 = vpop.f32.mrb[0].mxu0
    %v841 = vadd.f32 0.0, %v840
    %v842 = vpop.f32.mrb[0].mxu0
    %843 = vmatprep.mubr.f32.mxu0 0.0
    %844 = vmatmul.mubr.f32.gmra.mrb[0].mxu0 %v66
    %v845 = vpop.f32.mrb[0].mxu0
    %v846 = vadd.f32 0.0, %v845
    %v847 = vpop.f32.mrb[0].mxu0
    %848 = vmatprep.mubr.f32.mxu0 0.0
    %849 = vmatmul.mubr.f32.gmra.mrb[0].mxu0 %v67
    %v850 = vpop.f32.mrb[0].mxu0
    %v851 = vadd.f32 0.0, %v850
    %v852 = vpop.f32.mrb[0].mxu0
    %853 = vmatprep.mubr.f32.mxu0 0.0
    %854 = vmatmul.mubr.f32.gmra.mrb[0].mxu0 %v68
    %v855 = vpop.f32.mrb[0].mxu0
    %v856 = vadd.f32 0.0, %v855
    %v857 = vpop.f32.mrb[0].mxu0
    %858 = vmatprep.mubr.f32.mxu0 0.0
    %859 = vmatmul.mubr.f32.gmra.mrb[0].mxu0 %v69
    %v860 = vpop.f32.mrb[0].mxu0
    %v861 = vadd.f32 0.0, %v860
    %v862 = vpop.f32.mrb[0].mxu0
    %863 = vmatprep.mubr.f32.mxu0 0.0
    %864 = vmatmul.mubr.f32.gmra.mrb[0].mxu0 %v70
    %v865 = vpop.f32.mrb[0].mxu0
    %v866 = vadd.f32 0.0, %v865
    %v867 = vpop.f32.mrb[0].mxu0
    %868 = vmatprep.mubr.f32.mxu0 0.0
    %869 = vmatmul.mubr.f32.gmra.mrb[0].mxu0 %v71
    %v870 = vpop.f32.mrb[0].mxu0
    %v871 = vadd.f32 0.0, %v870
    %v872 = vpop.f32.mrb[0].mxu0
    %873 = vdwg.mxu0
    %874 = vst [vmem:[#allocation2] sm:$0xff] %v796
    %875 = vst [vmem:[#allocation2 + $0x8] sm:$0xff] %v801
    %876 = vst [vmem:[#allocation2 + $0x10] sm:$0xff] %v806
    %877 = vst [vmem:[#allocation2 + $0x18] sm:$0xff] %v811
    %878 = vst [vmem:[#allocation2 + $0x20] sm:$0xff] %v816
    %879 = vst [vmem:[#allocation2 + $0x28] sm:$0xff] %v821
    %880 = vst [vmem:[#allocation2 + $0x30] sm:$0xff] %v826
    %881 = vst [vmem:[#allocation2 + $0x38] sm:$0xff] %v831
    %882 = vst [vmem:[#allocation2 + $0x40] sm:$0xff] %v836
    %883 = vst [vmem:[#allocation2 + $0x48] sm:$0xff] %v841
    %884 = vst [vmem:[#allocation2 + $0x50] sm:$0xff] %v846
    %885 = vst [vmem:[#allocation2 + $0x58] sm:$0xff] %v851
    %886 = vst [vmem:[#allocation2 + $0x60] sm:$0xff] %v856
    %887 = vst [vmem:[#allocation2 + $0x68] sm:$0xff] %v861
    %888 = vst [vmem:[#allocation2 + $0x70] sm:$0xff] %v866
    %889 = vst [vmem:[#allocation2 + $0x78] sm:$0xff] %v871
    %890 = vmatprep.subr.mxu0 0.0
    %891 = vmatpush1.msra.mxu0 %v331
    %892 = vmatprep.subr.mxu0 0.0
    %893 = vmatpush1.msra.mxu0 %v336
    %894 = vmatprep.subr.mxu0 0.0
    %895 = vmatpush1.msra.mxu0 %v341
    %896 = vmatprep.subr.mxu0 0.0
    %897 = vmatpush1.msra.mxu0 %v346
    %898 = vmatprep.subr.mxu0 0.0
    %899 = vmatpush1.msra.mxu0 %v351
    %900 = vmatprep.subr.mxu0 0.0
    %901 = vmatpush1.msra.mxu0 %v356
    %902 = vmatprep.subr.mxu0 0.0
    %903 = vmatpush1.msra.mxu0 %v361
    %904 = vmatprep.subr.mxu0 0.0
    %905 = vmatpush1.msra.mxu0 %v366
    %906 = vmatprep.subr.mxu0 0.0
    %907 = vmatpush1.msra.mxu0 %v371
    %908 = vmatprep.subr.mxu0 0.0
    %909 = vmatpush1.msra.mxu0 %v376
    %910 = vmatprep.subr.mxu0 0.0
    %911 = vmatpush1.msra.mxu0 %v381
    %912 = vmatprep.subr.mxu0 0.0
    %913 = vmatpush1.msra.mxu0 %v386
    %914 = vmatprep.subr.mxu0 0.0
    %915 = vmatpush1.msra.mxu0 %v391
    %916 = vmatprep.subr.mxu0 0.0
    %917 = vmatpush1.msra.mxu0 %v396
    %918 = vmatprep.subr.mxu0 0.0
    %919 = vmatpush1.msra.mxu0 %v401
    %920 = vmatprep.subr.mxu0 0.0
    %921 = vmatpush1.msra.mxu0 %v406
    %922 = vmatprep.subr.mxu0 0.0
    %923 = vmatpush1.msra.mxu0 0.0
    %924 = vmatprep.subr.mxu0 0.0
    %925 = vmatpush1.msra.mxu0 0.0
    %926 = vmatprep.subr.mxu0 0.0
    %927 = vmatpush1.msra.mxu0 0.0
    %928 = vmatprep.subr.mxu0 0.0
    %929 = vmatpush1.msra.mxu0 0.0
    %930 = vmatprep.subr.mxu0 0.0
    %931 = vmatpush1.msra.mxu0 0.0
    %932 = vmatprep.subr.mxu0 0.0
    %933 = vmatpush1.msra.mxu0 0.0
    %934 = vmatprep.subr.mxu0 0.0
    %935 = vmatpush1.msra.mxu0 0.0
    %936 = vmatprep.subr.mxu0 0.0
    %937 = vmatpush1.msra.mxu0 0.0
    %938 = vmatprep.subr.mxu0 0.0
    %939 = vmatpush1.msra.mxu0 0.0
    %940 = vmatprep.subr.mxu0 0.0
    %941 = vmatpush1.msra.mxu0 0.0
    %942 = vmatprep.subr.mxu0 0.0
    %943 = vmatpush1.msra.mxu0 0.0
    %944 = vmatprep.subr.mxu0 0.0
    %945 = vmatpush1.msra.mxu0 0.0
    %946 = vmatprep.subr.mxu0 0.0
    %947 = vmatpush1.msra.mxu0 0.0
    %948 = vmatprep.subr.mxu0 0.0
    %949 = vmatpush1.msra.mxu0 0.0
    %950 = vmatprep.subr.mxu0 0.0
    %951 = vmatpush1.msra.mxu0 0.0
    %952 = vmatprep.subr.mxu0 0.0
    %953 = vmatpush1.msra.mxu0 0.0
    %954 = vmatprep.mubr.f32.mxu0 0.0
    %955 = vmatmul.mubr.f32.gmra.mrb[0].mxu0 %v56
    %v956 = vpop.f32.mrb[0].mxu0
    %v957 = vadd.f32 0.0, %v956
    %v958 = vpop.f32.mrb[0].mxu0
    %959 = vmatprep.mubr.f32.mxu0 0.0
    %960 = vmatmul.mubr.f32.gmra.mrb[0].mxu0 %v57
    %v961 = vpop.f32.mrb[0].mxu0
    %v962 = vadd.f32 0.0, %v961
    %v963 = vpop.f32.mrb[0].mxu0
    %964 = vmatprep.mubr.f32.mxu0 0.0
    %965 = vmatmul.mubr.f32.gmra.mrb[0].mxu0 %v58
    %v966 = vpop.f32.mrb[0].mxu0
    %v967 = vadd.f32 0.0, %v966
    %v968 = vpop.f32.mrb[0].mxu0
    %969 = vmatprep.mubr.f32.mxu0 0.0
    %970 = vmatmul.mubr.f32.gmra.mrb[0].mxu0 %v59
    %v971 = vpop.f32.mrb[0].mxu0
    %v972 = vadd.f32 0.0, %v971
    %v973 = vpop.f32.mrb[0].mxu0
    %974 = vmatprep.mubr.f32.mxu0 0.0
    %975 = vmatmul.mubr.f32.gmra.mrb[0].mxu0 %v60
    %v976 = vpop.f32.mrb[0].mxu0
    %v977 = vadd.f32 0.0, %v976
    %v978 = vpop.f32.mrb[0].mxu0
    %979 = vmatprep.mubr.f32.mxu0 0.0
    %980 = vmatmul.mubr.f32.gmra.mrb[0].mxu0 %v61
    %v981 = vpop.f32.mrb[0].mxu0
    %v982 = vadd.f32 0.0, %v981
    %v983 = vpop.f32.mrb[0].mxu0
    %984 = vmatprep.mubr.f32.mxu0 0.0
    %985 = vmatmul.mubr.f32.gmra.mrb[0].mxu0 %v62
    %v986 = vpop.f32.mrb[0].mxu0
    %v987 = vadd.f32 0.0, %v986
    %v988 = vpop.f32.mrb[0].mxu0
    %989 = vmatprep.mubr.f32.mxu0 0.0
    %990 = vmatmul.mubr.f32.gmra.mrb[0].mxu0 %v63
    %v991 = vpop.f32.mrb[0].mxu0
    %v992 = vadd.f32 0.0, %v991
    %v993 = vpop.f32.mrb[0].mxu0
    %994 = vmatprep.mubr.f32.mxu0 0.0
    %995 = vmatmul.mubr.f32.gmra.mrb[0].mxu0 %v64
    %v996 = vpop.f32.mrb[0].mxu0
    %v997 = vadd.f32 0.0, %v996
    %v998 = vpop.f32.mrb[0].mxu0
    %999 = vmatprep.mubr.f32.mxu0 0.0
    %1000 = vmatmul.mubr.f32.gmra.mrb[0].mxu0 %v65
    %v1001 = vpop.f32.mrb[0].mxu0
    %v1002 = vadd.f32 0.0, %v1001
    %v1003 = vpop.f32.mrb[0].mxu0
    %1004 = vmatprep.mubr.f32.mxu0 0.0
    %1005 = vmatmul.mubr.f32.gmra.mrb[0].mxu0 %v66
    %v1006 = vpop.f32.mrb[0].mxu0
    %v1007 = vadd.f32 0.0, %v1006
    %v1008 = vpop.f32.mrb[0].mxu0
    %1009 = vmatprep.mubr.f32.mxu0 0.0
    %1010 = vmatmul.mubr.f32.gmra.mrb[0].mxu0 %v67
    %v1011 = vpop.f32.mrb[0].mxu0
    %v1012 = vadd.f32 0.0, %v1011
    %v1013 = vpop.f32.mrb[0].mxu0
    %1014 = vmatprep.mubr.f32.mxu0 0.0
    %1015 = vmatmul.mubr.f32.gmra.mrb[0].mxu0 %v68
    %v1016 = vpop.f32.mrb[0].mxu0
    %v1017 = vadd.f32 0.0, %v1016
    %v1018 = vpop.f32.mrb[0].mxu0
    %1019 = vmatprep.mubr.f32.mxu0 0.0
    %1020 = vmatmul.mubr.f32.gmra.mrb[0].mxu0 %v69
    %v1021 = vpop.f32.mrb[0].mxu0
    %v1022 = vadd.f32 0.0, %v1021
    %v1023 = vpop.f32.mrb[0].mxu0
    %1024 = vmatprep.mubr.f32.mxu0 0.0
    %1025 = vmatmul.mubr.f32.gmra.mrb[0].mxu0 %v70
    %v1026 = vpop.f32.mrb[0].mxu0
    %v1027 = vadd.f32 0.0, %v1026
    %v1028 = vpop.f32.mrb[0].mxu0
    %1029 = vmatprep.mubr.f32.mxu0 0.0
    %1030 = vmatmul.mubr.f32.gmra.mrb[0].mxu0 %v71
    %v1031 = vpop.f32.mrb[0].mxu0
    %v1032 = vadd.f32 0.0, %v1031
    %v1033 = vpop.f32.mrb[0].mxu0
    %1034 = vdwg.mxu0
    %s1035 = scalar_lea.vmem [#allocation2], 128
    %1036 = vst [vmem:[%s1035] sm:$0xff] %v957
    %1037 = vst [vmem:[%s1035 + $0x8] sm:$0xff] %v962
    %1038 = vst [vmem:[%s1035 + $0x10] sm:$0xff] %v967
    %1039 = vst [vmem:[%s1035 + $0x18] sm:$0xff] %v972
    %1040 = vst [vmem:[%s1035 + $0x20] sm:$0xff] %v977
    %1041 = vst [vmem:[%s1035 + $0x28] sm:$0xff] %v982
    %1042 = vst [vmem:[%s1035 + $0x30] sm:$0xff] %v987
    %1043 = vst [vmem:[%s1035 + $0x38] sm:$0xff] %v992
    %1044 = vst [vmem:[%s1035 + $0x40] sm:$0xff] %v997
    %1045 = vst [vmem:[%s1035 + $0x48] sm:$0xff] %v1002
    %1046 = vst [vmem:[%s1035 + $0x50] sm:$0xff] %v1007
    %1047 = vst [vmem:[%s1035 + $0x58] sm:$0xff] %v1012
    %1048 = vst [vmem:[%s1035 + $0x60] sm:$0xff] %v1017
    %1049 = vst [vmem:[%s1035 + $0x68] sm:$0xff] %v1022
    %1050 = vst [vmem:[%s1035 + $0x70] sm:$0xff] %v1027
    %1051 = vst [vmem:[%s1035 + $0x78] sm:$0xff] %v1032
    %1052 = vmatprep.subr.mxu0 0.0
    %1053 = vmatpush1.msra.mxu0 %v411
    %1054 = vmatprep.subr.mxu0 0.0
    %1055 = vmatpush1.msra.mxu0 %v416
    %1056 = vmatprep.subr.mxu0 0.0
    %1057 = vmatpush1.msra.mxu0 %v421
    %1058 = vmatprep.subr.mxu0 0.0
    %1059 = vmatpush1.msra.mxu0 %v426
    %1060 = vmatprep.subr.mxu0 0.0
    %1061 = vmatpush1.msra.mxu0 %v431
    %1062 = vmatprep.subr.mxu0 0.0
    %1063 = vmatpush1.msra.mxu0 %v436
    %1064 = vmatprep.subr.mxu0 0.0
    %1065 = vmatpush1.msra.mxu0 %v441
    %1066 = vmatprep.subr.mxu0 0.0
    %1067 = vmatpush1.msra.mxu0 %v446
    %1068 = vmatprep.subr.mxu0 0.0
    %1069 = vmatpush1.msra.mxu0 %v451
    %1070 = vmatprep.subr.mxu0 0.0
    %1071 = vmatpush1.msra.mxu0 %v456
    %1072 = vmatprep.subr.mxu0 0.0
    %1073 = vmatpush1.msra.mxu0 %v461
    %1074 = vmatprep.subr.mxu0 0.0
    %1075 = vmatpush1.msra.mxu0 %v466
    %1076 = vmatprep.subr.mxu0 0.0
    %1077 = vmatpush1.msra.mxu0 %v471
    %1078 = vmatprep.subr.mxu0 0.0
    %1079 = vmatpush1.msra.mxu0 %v476
    %1080 = vmatprep.subr.mxu0 0.0
    %1081 = vmatpush1.msra.mxu0 %v481
    %1082 = vmatprep.subr.mxu0 0.0
    %1083 = vmatpush1.msra.mxu0 %v486
    %1084 = vmatprep.subr.mxu0 0.0
    %1085 = vmatpush1.msra.mxu0 0.0
    %1086 = vmatprep.subr.mxu0 0.0
    %1087 = vmatpush1.msra.mxu0 0.0
    %1088 = vmatprep.subr.mxu0 0.0
    %1089 = vmatpush1.msra.mxu0 0.0
    %1090 = vmatprep.subr.mxu0 0.0
    %1091 = vmatpush1.msra.mxu0 0.0
    %1092 = vmatprep.subr.mxu0 0.0
    %1093 = vmatpush1.msra.mxu0 0.0
    %1094 = vmatprep.subr.mxu0 0.0
    %1095 = vmatpush1.msra.mxu0 0.0
    %1096 = vmatprep.subr.mxu0 0.0
    %1097 = vmatpush1.msra.mxu0 0.0
    %1098 = vmatprep.subr.mxu0 0.0
    %1099 = vmatpush1.msra.mxu0 0.0
    %1100 = vmatprep.subr.mxu0 0.0
    %1101 = vmatpush1.msra.mxu0 0.0
    %1102 = vmatprep.subr.mxu0 0.0
    %1103 = vmatpush1.msra.mxu0 0.0
    %1104 = vmatprep.subr.mxu0 0.0
    %1105 = vmatpush1.msra.mxu0 0.0
    %1106 = vmatprep.subr.mxu0 0.0
    %1107 = vmatpush1.msra.mxu0 0.0
    %1108 = vmatprep.subr.mxu0 0.0
    %1109 = vmatpush1.msra.mxu0 0.0
    %1110 = vmatprep.subr.mxu0 0.0
    %1111 = vmatpush1.msra.mxu0 0.0
    %1112 = vmatprep.subr.mxu0 0.0
    %1113 = vmatpush1.msra.mxu0 0.0
    %1114 = vmatprep.subr.mxu0 0.0
    %1115 = vmatpush1.msra.mxu0 0.0
    %1116 = vmatprep.mubr.f32.mxu0 0.0
    %1117 = vmatmul.mubr.f32.gmra.mrb[0].mxu0 %v56
    %v1118 = vpop.f32.mrb[0].mxu0
    %v1119 = vadd.f32 0.0, %v1118
    %v1120 = vpop.f32.mrb[0].mxu0
    %1121 = vmatprep.mubr.f32.mxu0 0.0
    %1122 = vmatmul.mubr.f32.gmra.mrb[0].mxu0 %v57
    %v1123 = vpop.f32.mrb[0].mxu0
    %v1124 = vadd.f32 0.0, %v1123
    %v1125 = vpop.f32.mrb[0].mxu0
    %1126 = vmatprep.mubr.f32.mxu0 0.0
    %1127 = vmatmul.mubr.f32.gmra.mrb[0].mxu0 %v58
    %v1128 = vpop.f32.mrb[0].mxu0
    %v1129 = vadd.f32 0.0, %v1128
    %v1130 = vpop.f32.mrb[0].mxu0
    %1131 = vmatprep.mubr.f32.mxu0 0.0
    %1132 = vmatmul.mubr.f32.gmra.mrb[0].mxu0 %v59
    %v1133 = vpop.f32.mrb[0].mxu0
    %v1134 = vadd.f32 0.0, %v1133
    %v1135 = vpop.f32.mrb[0].mxu0
    %1136 = vmatprep.mubr.f32.mxu0 0.0
    %1137 = vmatmul.mubr.f32.gmra.mrb[0].mxu0 %v60
    %v1138 = vpop.f32.mrb[0].mxu0
    %v1139 = vadd.f32 0.0, %v1138
    %v1140 = vpop.f32.mrb[0].mxu0
    %1141 = vmatprep.mubr.f32.mxu0 0.0
    %1142 = vmatmul.mubr.f32.gmra.mrb[0].mxu0 %v61
    %v1143 = vpop.f32.mrb[0].mxu0
    %v1144 = vadd.f32 0.0, %v1143
    %v1145 = vpop.f32.mrb[0].mxu0
    %1146 = vmatprep.mubr.f32.mxu0 0.0
    %1147 = vmatmul.mubr.f32.gmra.mrb[0].mxu0 %v62
    %v1148 = vpop.f32.mrb[0].mxu0
    %v1149 = vadd.f32 0.0, %v1148
    %v1150 = vpop.f32.mrb[0].mxu0
    %1151 = vmatprep.mubr.f32.mxu0 0.0
    %1152 = vmatmul.mubr.f32.gmra.mrb[0].mxu0 %v63
    %v1153 = vpop.f32.mrb[0].mxu0
    %v1154 = vadd.f32 0.0, %v1153
    %v1155 = vpop.f32.mrb[0].mxu0
    %1156 = vmatprep.mubr.f32.mxu0 0.0
    %1157 = vmatmul.mubr.f32.gmra.mrb[0].mxu0 %v64
    %v1158 = vpop.f32.mrb[0].mxu0
    %v1159 = vadd.f32 0.0, %v1158
    %v1160 = vpop.f32.mrb[0].mxu0
    %1161 = vmatprep.mubr.f32.mxu0 0.0
    %1162 = vmatmul.mubr.f32.gmra.mrb[0].mxu0 %v65
    %v1163 = vpop.f32.mrb[0].mxu0
    %v1164 = vadd.f32 0.0, %v1163
    %v1165 = vpop.f32.mrb[0].mxu0
    %1166 = vmatprep.mubr.f32.mxu0 0.0
    %1167 = vmatmul.mubr.f32.gmra.mrb[0].mxu0 %v66
    %v1168 = vpop.f32.mrb[0].mxu0
    %v1169 = vadd.f32 0.0, %v1168
    %v1170 = vpop.f32.mrb[0].mxu0
    %1171 = vmatprep.mubr.f32.mxu0 0.0
    %1172 = vmatmul.mubr.f32.gmra.mrb[0].mxu0 %v67
    %v1173 = vpop.f32.mrb[0].mxu0
    %v1174 = vadd.f32 0.0, %v1173
    %v1175 = vpop.f32.mrb[0].mxu0
    %1176 = vmatprep.mubr.f32.mxu0 0.0
    %1177 = vmatmul.mubr.f32.gmra.mrb[0].mxu0 %v68
    %v1178 = vpop.f32.mrb[0].mxu0
    %v1179 = vadd.f32 0.0, %v1178
    %v1180 = vpop.f32.mrb[0].mxu0
    %1181 = vmatprep.mubr.f32.mxu0 0.0
    %1182 = vmatmul.mubr.f32.gmra.mrb[0].mxu0 %v69
    %v1183 = vpop.f32.mrb[0].mxu0
    %v1184 = vadd.f32 0.0, %v1183
    %v1185 = vpop.f32.mrb[0].mxu0
    %1186 = vmatprep.mubr.f32.mxu0 0.0
    %1187 = vmatmul.mubr.f32.gmra.mrb[0].mxu0 %v70
    %v1188 = vpop.f32.mrb[0].mxu0
    %v1189 = vadd.f32 0.0, %v1188
    %v1190 = vpop.f32.mrb[0].mxu0
    %1191 = vmatprep.mubr.f32.mxu0 0.0
    %1192 = vmatmul.mubr.f32.gmra.mrb[0].mxu0 %v71
    %v1193 = vpop.f32.mrb[0].mxu0
    %v1194 = vadd.f32 0.0, %v1193
    %v1195 = vpop.f32.mrb[0].mxu0
    %1196 = vdwg.mxu0
    %s1197 = scalar_lea.vmem [#allocation2], 256
    %1198 = vst [vmem:[%s1197] sm:$0xff] %v1119
    %1199 = vst [vmem:[%s1197 + $0x8] sm:$0xff] %v1124
    %1200 = vst [vmem:[%s1197 + $0x10] sm:$0xff] %v1129
    %1201 = vst [vmem:[%s1197 + $0x18] sm:$0xff] %v1134
    %1202 = vst [vmem:[%s1197 + $0x20] sm:$0xff] %v1139
    %1203 = vst [vmem:[%s1197 + $0x28] sm:$0xff] %v1144
    %1204 = vst [vmem:[%s1197 + $0x30] sm:$0xff] %v1149
    %1205 = vst [vmem:[%s1197 + $0x38] sm:$0xff] %v1154
    %1206 = vst [vmem:[%s1197 + $0x40] sm:$0xff] %v1159
    %1207 = vst [vmem:[%s1197 + $0x48] sm:$0xff] %v1164
    %1208 = vst [vmem:[%s1197 + $0x50] sm:$0xff] %v1169
    %1209 = vst [vmem:[%s1197 + $0x58] sm:$0xff] %v1174
    %1210 = vst [vmem:[%s1197 + $0x60] sm:$0xff] %v1179
    %1211 = vst [vmem:[%s1197 + $0x68] sm:$0xff] %v1184
    %1212 = vst [vmem:[%s1197 + $0x70] sm:$0xff] %v1189
    %1213 = vst [vmem:[%s1197 + $0x78] sm:$0xff] %v1194
    %1214 = vmatprep.subr.mxu0 0.0
    %1215 = vmatpush1.msra.mxu0 %v491
    %1216 = vmatprep.subr.mxu0 0.0
    %1217 = vmatpush1.msra.mxu0 %v496
    %1218 = vmatprep.subr.mxu0 0.0
    %1219 = vmatpush1.msra.mxu0 %v501
    %1220 = vmatprep.subr.mxu0 0.0
    %1221 = vmatpush1.msra.mxu0 %v506
    %1222 = vmatprep.subr.mxu0 0.0
    %1223 = vmatpush1.msra.mxu0 %v511
    %1224 = vmatprep.subr.mxu0 0.0
    %1225 = vmatpush1.msra.mxu0 %v516
    %1226 = vmatprep.subr.mxu0 0.0
    %1227 = vmatpush1.msra.mxu0 %v521
    %1228 = vmatprep.subr.mxu0 0.0
    %1229 = vmatpush1.msra.mxu0 %v526
    %1230 = vmatprep.subr.mxu0 0.0
    %1231 = vmatpush1.msra.mxu0 %v531
    %1232 = vmatprep.subr.mxu0 0.0
    %1233 = vmatpush1.msra.mxu0 %v536
    %1234 = vmatprep.subr.mxu0 0.0
    %1235 = vmatpush1.msra.mxu0 %v541
    %1236 = vmatprep.subr.mxu0 0.0
    %1237 = vmatpush1.msra.mxu0 %v546
    %1238 = vmatprep.subr.mxu0 0.0
    %1239 = vmatpush1.msra.mxu0 %v551
    %1240 = vmatprep.subr.mxu0 0.0
    %1241 = vmatpush1.msra.mxu0 %v556
    %1242 = vmatprep.subr.mxu0 0.0
    %1243 = vmatpush1.msra.mxu0 %v561
    %1244 = vmatprep.subr.mxu0 0.0
    %1245 = vmatpush1.msra.mxu0 %v566
    %1246 = vmatprep.subr.mxu0 0.0
    %1247 = vmatpush1.msra.mxu0 0.0
    %1248 = vmatprep.subr.mxu0 0.0
    %1249 = vmatpush1.msra.mxu0 0.0
    %1250 = vmatprep.subr.mxu0 0.0
    %1251 = vmatpush1.msra.mxu0 0.0
    %1252 = vmatprep.subr.mxu0 0.0
    %1253 = vmatpush1.msra.mxu0 0.0
    %1254 = vmatprep.subr.mxu0 0.0
    %1255 = vmatpush1.msra.mxu0 0.0
    %1256 = vmatprep.subr.mxu0 0.0
    %1257 = vmatpush1.msra.mxu0 0.0
    %1258 = vmatprep.subr.mxu0 0.0
    %1259 = vmatpush1.msra.mxu0 0.0
    %1260 = vmatprep.subr.mxu0 0.0
    %1261 = vmatpush1.msra.mxu0 0.0
    %1262 = vmatprep.subr.mxu0 0.0
    %1263 = vmatpush1.msra.mxu0 0.0
    %1264 = vmatprep.subr.mxu0 0.0
    %1265 = vmatpush1.msra.mxu0 0.0
    %1266 = vmatprep.subr.mxu0 0.0
    %1267 = vmatpush1.msra.mxu0 0.0
    %1268 = vmatprep.subr.mxu0 0.0
    %1269 = vmatpush1.msra.mxu0 0.0
    %1270 = vmatprep.subr.mxu0 0.0
    %1271 = vmatpush1.msra.mxu0 0.0
    %1272 = vmatprep.subr.mxu0 0.0
    %1273 = vmatpush1.msra.mxu0 0.0
    %1274 = vmatprep.subr.mxu0 0.0
    %1275 = vmatpush1.msra.mxu0 0.0
    %1276 = vmatprep.subr.mxu0 0.0
    %1277 = vmatpush1.msra.mxu0 0.0
    %1278 = vmatprep.mubr.f32.mxu0 0.0
    %1279 = vmatmul.mubr.f32.gmra.mrb[0].mxu0 %v56
    %v1280 = vpop.f32.mrb[0].mxu0
    %v1281 = vadd.f32 0.0, %v1280
    %v1282 = vpop.f32.mrb[0].mxu0
    %1283 = vmatprep.mubr.f32.mxu0 0.0
    %1284 = vmatmul.mubr.f32.gmra.mrb[0].mxu0 %v57
    %v1285 = vpop.f32.mrb[0].mxu0
    %v1286 = vadd.f32 0.0, %v1285
    %v1287 = vpop.f32.mrb[0].mxu0
    %1288 = vmatprep.mubr.f32.mxu0 0.0
    %1289 = vmatmul.mubr.f32.gmra.mrb[0].mxu0 %v58
    %v1290 = vpop.f32.mrb[0].mxu0
    %v1291 = vadd.f32 0.0, %v1290
    %v1292 = vpop.f32.mrb[0].mxu0
    %1293 = vmatprep.mubr.f32.mxu0 0.0
    %1294 = vmatmul.mubr.f32.gmra.mrb[0].mxu0 %v59
    %v1295 = vpop.f32.mrb[0].mxu0
    %v1296 = vadd.f32 0.0, %v1295
    %v1297 = vpop.f32.mrb[0].mxu0
    %1298 = vmatprep.mubr.f32.mxu0 0.0
    %1299 = vmatmul.mubr.f32.gmra.mrb[0].mxu0 %v60
    %v1300 = vpop.f32.mrb[0].mxu0
    %v1301 = vadd.f32 0.0, %v1300
    %v1302 = vpop.f32.mrb[0].mxu0
    %1303 = vmatprep.mubr.f32.mxu0 0.0
    %1304 = vmatmul.mubr.f32.gmra.mrb[0].mxu0 %v61
    %v1305 = vpop.f32.mrb[0].mxu0
    %v1306 = vadd.f32 0.0, %v1305
    %v1307 = vpop.f32.mrb[0].mxu0
    %1308 = vmatprep.mubr.f32.mxu0 0.0
    %1309 = vmatmul.mubr.f32.gmra.mrb[0].mxu0 %v62
    %v1310 = vpop.f32.mrb[0].mxu0
    %v1311 = vadd.f32 0.0, %v1310
    %v1312 = vpop.f32.mrb[0].mxu0
    %1313 = vmatprep.mubr.f32.mxu0 0.0
    %1314 = vmatmul.mubr.f32.gmra.mrb[0].mxu0 %v63
    %v1315 = vpop.f32.mrb[0].mxu0
    %v1316 = vadd.f32 0.0, %v1315
    %v1317 = vpop.f32.mrb[0].mxu0
    %1318 = vmatprep.mubr.f32.mxu0 0.0
    %1319 = vmatmul.mubr.f32.gmra.mrb[0].mxu0 %v64
    %v1320 = vpop.f32.mrb[0].mxu0
    %v1321 = vadd.f32 0.0, %v1320
    %v1322 = vpop.f32.mrb[0].mxu0
    %1323 = vmatprep.mubr.f32.mxu0 0.0
    %1324 = vmatmul.mubr.f32.gmra.mrb[0].mxu0 %v65
    %v1325 = vpop.f32.mrb[0].mxu0
    %v1326 = vadd.f32 0.0, %v1325
    %v1327 = vpop.f32.mrb[0].mxu0
    %1328 = vmatprep.mubr.f32.mxu0 0.0
    %1329 = vmatmul.mubr.f32.gmra.mrb[0].mxu0 %v66
    %v1330 = vpop.f32.mrb[0].mxu0
    %v1331 = vadd.f32 0.0, %v1330
    %v1332 = vpop.f32.mrb[0].mxu0
    %1333 = vmatprep.mubr.f32.mxu0 0.0
    %1334 = vmatmul.mubr.f32.gmra.mrb[0].mxu0 %v67
    %v1335 = vpop.f32.mrb[0].mxu0
    %v1336 = vadd.f32 0.0, %v1335
    %v1337 = vpop.f32.mrb[0].mxu0
    %1338 = vmatprep.mubr.f32.mxu0 0.0
    %1339 = vmatmul.mubr.f32.gmra.mrb[0].mxu0 %v68
    %v1340 = vpop.f32.mrb[0].mxu0
    %v1341 = vadd.f32 0.0, %v1340
    %v1342 = vpop.f32.mrb[0].mxu0
    %1343 = vmatprep.mubr.f32.mxu0 0.0
    %1344 = vmatmul.mubr.f32.gmra.mrb[0].mxu0 %v69
    %v1345 = vpop.f32.mrb[0].mxu0
    %v1346 = vadd.f32 0.0, %v1345
    %v1347 = vpop.f32.mrb[0].mxu0
    %1348 = vmatprep.mubr.f32.mxu0 0.0
    %1349 = vmatmul.mubr.f32.gmra.mrb[0].mxu0 %v70
    %v1350 = vpop.f32.mrb[0].mxu0
    %v1351 = vadd.f32 0.0, %v1350
    %v1352 = vpop.f32.mrb[0].mxu0
    %1353 = vmatprep.mubr.f32.mxu0 0.0
    %1354 = vmatmul.mubr.f32.gmra.mrb[0].mxu0 %v71
    %v1355 = vpop.f32.mrb[0].mxu0
    %v1356 = vadd.f32 0.0, %v1355
    %v1357 = vpop.f32.mrb[0].mxu0
    %1358 = vdwg.mxu0
    %s1359 = scalar_lea.vmem [#allocation2], 384
    %1360 = vst [vmem:[%s1359] sm:$0xff] %v1281
    %1361 = vst [vmem:[%s1359 + $0x8] sm:$0xff] %v1286
    %1362 = vst [vmem:[%s1359 + $0x10] sm:$0xff] %v1291
    %1363 = vst [vmem:[%s1359 + $0x18] sm:$0xff] %v1296
    %1364 = vst [vmem:[%s1359 + $0x20] sm:$0xff] %v1301
    %1365 = vst [vmem:[%s1359 + $0x28] sm:$0xff] %v1306
    %1366 = vst [vmem:[%s1359 + $0x30] sm:$0xff] %v1311
    %1367 = vst [vmem:[%s1359 + $0x38] sm:$0xff] %v1316
    %1368 = vst [vmem:[%s1359 + $0x40] sm:$0xff] %v1321
    %1369 = vst [vmem:[%s1359 + $0x48] sm:$0xff] %v1326
    %1370 = vst [vmem:[%s1359 + $0x50] sm:$0xff] %v1331
    %1371 = vst [vmem:[%s1359 + $0x58] sm:$0xff] %v1336
    %1372 = vst [vmem:[%s1359 + $0x60] sm:$0xff] %v1341
    %1373 = vst [vmem:[%s1359 + $0x68] sm:$0xff] %v1346
    %1374 = vst [vmem:[%s1359 + $0x70] sm:$0xff] %v1351
    %1375 = vst [vmem:[%s1359 + $0x78] sm:$0xff] %v1356
    %1376 = vmatprep.subr.mxu0 0.0
    %1377 = vmatpush1.msra.mxu0 %v571
    %1378 = vmatprep.subr.mxu0 0.0
    %1379 = vmatpush1.msra.mxu0 %v576
    %1380 = vmatprep.subr.mxu0 0.0
    %1381 = vmatpush1.msra.mxu0 %v581
    %1382 = vmatprep.subr.mxu0 0.0
    %1383 = vmatpush1.msra.mxu0 %v586
    %1384 = vmatprep.subr.mxu0 0.0
    %1385 = vmatpush1.msra.mxu0 %v591
    %1386 = vmatprep.subr.mxu0 0.0
    %1387 = vmatpush1.msra.mxu0 %v596
    %1388 = vmatprep.subr.mxu0 0.0
    %1389 = vmatpush1.msra.mxu0 %v601
    %1390 = vmatprep.subr.mxu0 0.0
    %1391 = vmatpush1.msra.mxu0 %v606
    %1392 = vmatprep.subr.mxu0 0.0
    %1393 = vmatpush1.msra.mxu0 %v611
    %1394 = vmatprep.subr.mxu0 0.0
    %1395 = vmatpush1.msra.mxu0 %v616
    %1396 = vmatprep.subr.mxu0 0.0
    %1397 = vmatpush1.msra.mxu0 %v621
    %1398 = vmatprep.subr.mxu0 0.0
    %1399 = vmatpush1.msra.mxu0 %v626
    %1400 = vmatprep.subr.mxu0 0.0
    %1401 = vmatpush1.msra.mxu0 %v631
    %1402 = vmatprep.subr.mxu0 0.0
    %1403 = vmatpush1.msra.mxu0 %v636
    %1404 = vmatprep.subr.mxu0 0.0
    %1405 = vmatpush1.msra.mxu0 %v641
    %1406 = vmatprep.subr.mxu0 0.0
    %1407 = vmatpush1.msra.mxu0 %v646
    %1408 = vmatprep.subr.mxu0 0.0
    %1409 = vmatpush1.msra.mxu0 0.0
    %1410 = vmatprep.subr.mxu0 0.0
    %1411 = vmatpush1.msra.mxu0 0.0
    %1412 = vmatprep.subr.mxu0 0.0
    %1413 = vmatpush1.msra.mxu0 0.0
    %1414 = vmatprep.subr.mxu0 0.0
    %1415 = vmatpush1.msra.mxu0 0.0
    %1416 = vmatprep.subr.mxu0 0.0
    %1417 = vmatpush1.msra.mxu0 0.0
    %1418 = vmatprep.subr.mxu0 0.0
    %1419 = vmatpush1.msra.mxu0 0.0
    %1420 = vmatprep.subr.mxu0 0.0
    %1421 = vmatpush1.msra.mxu0 0.0
    %1422 = vmatprep.subr.mxu0 0.0
    %1423 = vmatpush1.msra.mxu0 0.0
    %1424 = vmatprep.subr.mxu0 0.0
    %1425 = vmatpush1.msra.mxu0 0.0
    %1426 = vmatprep.subr.mxu0 0.0
    %1427 = vmatpush1.msra.mxu0 0.0
    %1428 = vmatprep.subr.mxu0 0.0
    %1429 = vmatpush1.msra.mxu0 0.0
    %1430 = vmatprep.subr.mxu0 0.0
    %1431 = vmatpush1.msra.mxu0 0.0
    %1432 = vmatprep.subr.mxu0 0.0
    %1433 = vmatpush1.msra.mxu0 0.0
    %1434 = vmatprep.subr.mxu0 0.0
    %1435 = vmatpush1.msra.mxu0 0.0
    %1436 = vmatprep.subr.mxu0 0.0
    %1437 = vmatpush1.msra.mxu0 0.0
    %1438 = vmatprep.subr.mxu0 0.0
    %1439 = vmatpush1.msra.mxu0 0.0
    %1440 = vmatprep.mubr.f32.mxu0 0.0
    %1441 = vmatmul.mubr.f32.gmra.mrb[0].mxu0 %v56
    %v1442 = vpop.f32.mrb[0].mxu0
    %v1443 = vadd.f32 0.0, %v1442
    %v1444 = vpop.f32.mrb[0].mxu0
    %1445 = vmatprep.mubr.f32.mxu0 0.0
    %1446 = vmatmul.mubr.f32.gmra.mrb[0].mxu0 %v57
    %v1447 = vpop.f32.mrb[0].mxu0
    %v1448 = vadd.f32 0.0, %v1447
    %v1449 = vpop.f32.mrb[0].mxu0
    %1450 = vmatprep.mubr.f32.mxu0 0.0
    %1451 = vmatmul.mubr.f32.gmra.mrb[0].mxu0 %v58
    %v1452 = vpop.f32.mrb[0].mxu0
    %v1453 = vadd.f32 0.0, %v1452
    %v1454 = vpop.f32.mrb[0].mxu0
    %1455 = vmatprep.mubr.f32.mxu0 0.0
    %1456 = vmatmul.mubr.f32.gmra.mrb[0].mxu0 %v59
    %v1457 = vpop.f32.mrb[0].mxu0
    %v1458 = vadd.f32 0.0, %v1457
    %v1459 = vpop.f32.mrb[0].mxu0
    %1460 = vmatprep.mubr.f32.mxu0 0.0
    %1461 = vmatmul.mubr.f32.gmra.mrb[0].mxu0 %v60
    %v1462 = vpop.f32.mrb[0].mxu0
    %v1463 = vadd.f32 0.0, %v1462
    %v1464 = vpop.f32.mrb[0].mxu0
    %1465 = vmatprep.mubr.f32.mxu0 0.0
    %1466 = vmatmul.mubr.f32.gmra.mrb[0].mxu0 %v61
    %v1467 = vpop.f32.mrb[0].mxu0
    %v1468 = vadd.f32 0.0, %v1467
    %v1469 = vpop.f32.mrb[0].mxu0
    %1470 = vmatprep.mubr.f32.mxu0 0.0
    %1471 = vmatmul.mubr.f32.gmra.mrb[0].mxu0 %v62
    %v1472 = vpop.f32.mrb[0].mxu0
    %v1473 = vadd.f32 0.0, %v1472
    %v1474 = vpop.f32.mrb[0].mxu0
    %1475 = vmatprep.mubr.f32.mxu0 0.0
    %1476 = vmatmul.mubr.f32.gmra.mrb[0].mxu0 %v63
    %v1477 = vpop.f32.mrb[0].mxu0
    %v1478 = vadd.f32 0.0, %v1477
    %v1479 = vpop.f32.mrb[0].mxu0
    %1480 = vmatprep.mubr.f32.mxu0 0.0
    %1481 = vmatmul.mubr.f32.gmra.mrb[0].mxu0 %v64
    %v1482 = vpop.f32.mrb[0].mxu0
    %v1483 = vadd.f32 0.0, %v1482
    %v1484 = vpop.f32.mrb[0].mxu0
    %1485 = vmatprep.mubr.f32.mxu0 0.0
    %1486 = vmatmul.mubr.f32.gmra.mrb[0].mxu0 %v65
    %v1487 = vpop.f32.mrb[0].mxu0
    %v1488 = vadd.f32 0.0, %v1487
    %v1489 = vpop.f32.mrb[0].mxu0
    %1490 = vmatprep.mubr.f32.mxu0 0.0
    %1491 = vmatmul.mubr.f32.gmra.mrb[0].mxu0 %v66
    %v1492 = vpop.f32.mrb[0].mxu0
    %v1493 = vadd.f32 0.0, %v1492
    %v1494 = vpop.f32.mrb[0].mxu0
    %1495 = vmatprep.mubr.f32.mxu0 0.0
    %1496 = vmatmul.mubr.f32.gmra.mrb[0].mxu0 %v67
    %v1497 = vpop.f32.mrb[0].mxu0
    %v1498 = vadd.f32 0.0, %v1497
    %v1499 = vpop.f32.mrb[0].mxu0
    %1500 = vmatprep.mubr.f32.mxu0 0.0
    %1501 = vmatmul.mubr.f32.gmra.mrb[0].mxu0 %v68
    %v1502 = vpop.f32.mrb[0].mxu0
    %v1503 = vadd.f32 0.0, %v1502
    %v1504 = vpop.f32.mrb[0].mxu0
    %1505 = vmatprep.mubr.f32.mxu0 0.0
    %1506 = vmatmul.mubr.f32.gmra.mrb[0].mxu0 %v69
    %v1507 = vpop.f32.mrb[0].mxu0
    %v1508 = vadd.f32 0.0, %v1507
    %v1509 = vpop.f32.mrb[0].mxu0
    %1510 = vmatprep.mubr.f32.mxu0 0.0
    %1511 = vmatmul.mubr.f32.gmra.mrb[0].mxu0 %v70
    %v1512 = vpop.f32.mrb[0].mxu0
    %v1513 = vadd.f32 0.0, %v1512
    %v1514 = vpop.f32.mrb[0].mxu0
    %1515 = vmatprep.mubr.f32.mxu0 0.0
    %1516 = vmatmul.mubr.f32.gmra.mrb[0].mxu0 %v71
    %v1517 = vpop.f32.mrb[0].mxu0
    %v1518 = vadd.f32 0.0, %v1517
    %v1519 = vpop.f32.mrb[0].mxu0
    %1520 = vdwg.mxu0
    %s1521 = scalar_lea.vmem [#allocation2], 512
    %1522 = vst [vmem:[%s1521] sm:$0xff] %v1443
    %1523 = vst [vmem:[%s1521 + $0x8] sm:$0xff] %v1448
    %1524 = vst [vmem:[%s1521 + $0x10] sm:$0xff] %v1453
    %1525 = vst [vmem:[%s1521 + $0x18] sm:$0xff] %v1458
    %1526 = vst [vmem:[%s1521 + $0x20] sm:$0xff] %v1463
    %1527 = vst [vmem:[%s1521 + $0x28] sm:$0xff] %v1468
    %1528 = vst [vmem:[%s1521 + $0x30] sm:$0xff] %v1473
    %1529 = vst [vmem:[%s1521 + $0x38] sm:$0xff] %v1478
    %1530 = vst [vmem:[%s1521 + $0x40] sm:$0xff] %v1483
    %1531 = vst [vmem:[%s1521 + $0x48] sm:$0xff] %v1488
    %1532 = vst [vmem:[%s1521 + $0x50] sm:$0xff] %v1493
    %1533 = vst [vmem:[%s1521 + $0x58] sm:$0xff] %v1498
    %1534 = vst [vmem:[%s1521 + $0x60] sm:$0xff] %v1503
    %1535 = vst [vmem:[%s1521 + $0x68] sm:$0xff] %v1508
    %1536 = vst [vmem:[%s1521 + $0x70] sm:$0xff] %v1513
    %1537 = vst [vmem:[%s1521 + $0x78] sm:$0xff] %v1518
    %1538 = vmatprep.subr.mxu0 0.0
    %1539 = vmatpush1.msra.mxu0 %v651
    %1540 = vmatprep.subr.mxu0 0.0
    %1541 = vmatpush1.msra.mxu0 %v656
    %1542 = vmatprep.subr.mxu0 0.0
    %1543 = vmatpush1.msra.mxu0 %v661
    %1544 = vmatprep.subr.mxu0 0.0
    %1545 = vmatpush1.msra.mxu0 %v666
    %1546 = vmatprep.subr.mxu0 0.0
    %1547 = vmatpush1.msra.mxu0 %v671
    %1548 = vmatprep.subr.mxu0 0.0
    %1549 = vmatpush1.msra.mxu0 %v676
    %1550 = vmatprep.subr.mxu0 0.0
    %1551 = vmatpush1.msra.mxu0 %v681
    %1552 = vmatprep.subr.mxu0 0.0
    %1553 = vmatpush1.msra.mxu0 %v686
    %1554 = vmatprep.subr.mxu0 0.0
    %1555 = vmatpush1.msra.mxu0 %v691
    %1556 = vmatprep.subr.mxu0 0.0
    %1557 = vmatpush1.msra.mxu0 %v696
    %1558 = vmatprep.subr.mxu0 0.0
    %1559 = vmatpush1.msra.mxu0 %v701
    %1560 = vmatprep.subr.mxu0 0.0
    %1561 = vmatpush1.msra.mxu0 %v706
    %1562 = vmatprep.subr.mxu0 0.0
    %1563 = vmatpush1.msra.mxu0 %v711
    %1564 = vmatprep.subr.mxu0 0.0
    %1565 = vmatpush1.msra.mxu0 %v716
    %1566 = vmatprep.subr.mxu0 0.0
    %1567 = vmatpush1.msra.mxu0 %v721
    %1568 = vmatprep.subr.mxu0 0.0
    %1569 = vmatpush1.msra.mxu0 %v726
    %1570 = vmatprep.subr.mxu0 0.0
    %1571 = vmatpush1.msra.mxu0 0.0
    %1572 = vmatprep.subr.mxu0 0.0
    %1573 = vmatpush1.msra.mxu0 0.0
    %1574 = vmatprep.subr.mxu0 0.0
    %1575 = vmatpush1.msra.mxu0 0.0
    %1576 = vmatprep.subr.mxu0 0.0
    %1577 = vmatpush1.msra.mxu0 0.0
    %1578 = vmatprep.subr.mxu0 0.0
    %1579 = vmatpush1.msra.mxu0 0.0
    %1580 = vmatprep.subr.mxu0 0.0
    %1581 = vmatpush1.msra.mxu0 0.0
    %1582 = vmatprep.subr.mxu0 0.0
    %1583 = vmatpush1.msra.mxu0 0.0
    %1584 = vmatprep.subr.mxu0 0.0
    %1585 = vmatpush1.msra.mxu0 0.0
    %1586 = vmatprep.subr.mxu0 0.0
    %1587 = vmatpush1.msra.mxu0 0.0
    %1588 = vmatprep.subr.mxu0 0.0
    %1589 = vmatpush1.msra.mxu0 0.0
    %1590 = vmatprep.subr.mxu0 0.0
    %1591 = vmatpush1.msra.mxu0 0.0
    %1592 = vmatprep.subr.mxu0 0.0
    %1593 = vmatpush1.msra.mxu0 0.0
    %1594 = vmatprep.subr.mxu0 0.0
    %1595 = vmatpush1.msra.mxu0 0.0
    %1596 = vmatprep.subr.mxu0 0.0
    %1597 = vmatpush1.msra.mxu0 0.0
    %1598 = vmatprep.subr.mxu0 0.0
    %1599 = vmatpush1.msra.mxu0 0.0
    %1600 = vmatprep.subr.mxu0 0.0
    %1601 = vmatpush1.msra.mxu0 0.0
    %1602 = vmatprep.mubr.f32.mxu0 0.0
    %1603 = vmatmul.mubr.f32.gmra.mrb[0].mxu0 %v56
    %v1604 = vpop.f32.mrb[0].mxu0
    %v1605 = vadd.f32 0.0, %v1604
    %v1606 = vpop.f32.mrb[0].mxu0
    %1607 = vmatprep.mubr.f32.mxu0 0.0
    %1608 = vmatmul.mubr.f32.gmra.mrb[0].mxu0 %v57
    %v1609 = vpop.f32.mrb[0].mxu0
    %v1610 = vadd.f32 0.0, %v1609
    %v1611 = vpop.f32.mrb[0].mxu0
    %1612 = vmatprep.mubr.f32.mxu0 0.0
    %1613 = vmatmul.mubr.f32.gmra.mrb[0].mxu0 %v58
    %v1614 = vpop.f32.mrb[0].mxu0
    %v1615 = vadd.f32 0.0, %v1614
    %v1616 = vpop.f32.mrb[0].mxu0
    %1617 = vmatprep.mubr.f32.mxu0 0.0
    %1618 = vmatmul.mubr.f32.gmra.mrb[0].mxu0 %v59
    %v1619 = vpop.f32.mrb[0].mxu0
    %v1620 = vadd.f32 0.0, %v1619
    %v1621 = vpop.f32.mrb[0].mxu0
    %1622 = vmatprep.mubr.f32.mxu0 0.0
    %1623 = vmatmul.mubr.f32.gmra.mrb[0].mxu0 %v60
    %v1624 = vpop.f32.mrb[0].mxu0
    %v1625 = vadd.f32 0.0, %v1624
    %v1626 = vpop.f32.mrb[0].mxu0
    %1627 = vmatprep.mubr.f32.mxu0 0.0
    %1628 = vmatmul.mubr.f32.gmra.mrb[0].mxu0 %v61
    %v1629 = vpop.f32.mrb[0].mxu0
    %v1630 = vadd.f32 0.0, %v1629
    %v1631 = vpop.f32.mrb[0].mxu0
    %1632 = vmatprep.mubr.f32.mxu0 0.0
    %1633 = vmatmul.mubr.f32.gmra.mrb[0].mxu0 %v62
    %v1634 = vpop.f32.mrb[0].mxu0
    %v1635 = vadd.f32 0.0, %v1634
    %v1636 = vpop.f32.mrb[0].mxu0
    %1637 = vmatprep.mubr.f32.mxu0 0.0
    %1638 = vmatmul.mubr.f32.gmra.mrb[0].mxu0 %v63
    %v1639 = vpop.f32.mrb[0].mxu0
    %v1640 = vadd.f32 0.0, %v1639
    %v1641 = vpop.f32.mrb[0].mxu0
    %1642 = vmatprep.mubr.f32.mxu0 0.0
    %1643 = vmatmul.mubr.f32.gmra.mrb[0].mxu0 %v64
    %v1644 = vpop.f32.mrb[0].mxu0
    %v1645 = vadd.f32 0.0, %v1644
    %v1646 = vpop.f32.mrb[0].mxu0
    %1647 = vmatprep.mubr.f32.mxu0 0.0
    %1648 = vmatmul.mubr.f32.gmra.mrb[0].mxu0 %v65
    %v1649 = vpop.f32.mrb[0].mxu0
    %v1650 = vadd.f32 0.0, %v1649
    %v1651 = vpop.f32.mrb[0].mxu0
    %1652 = vmatprep.mubr.f32.mxu0 0.0
    %1653 = vmatmul.mubr.f32.gmra.mrb[0].mxu0 %v66
    %v1654 = vpop.f32.mrb[0].mxu0
    %v1655 = vadd.f32 0.0, %v1654
    %v1656 = vpop.f32.mrb[0].mxu0
    %1657 = vmatprep.mubr.f32.mxu0 0.0
    %1658 = vmatmul.mubr.f32.gmra.mrb[0].mxu0 %v67
    %v1659 = vpop.f32.mrb[0].mxu0
    %v1660 = vadd.f32 0.0, %v1659
    %v1661 = vpop.f32.mrb[0].mxu0
    %1662 = vmatprep.mubr.f32.mxu0 0.0
    %1663 = vmatmul.mubr.f32.gmra.mrb[0].mxu0 %v68
    %v1664 = vpop.f32.mrb[0].mxu0
    %v1665 = vadd.f32 0.0, %v1664
    %v1666 = vpop.f32.mrb[0].mxu0
    %1667 = vmatprep.mubr.f32.mxu0 0.0
    %1668 = vmatmul.mubr.f32.gmra.mrb[0].mxu0 %v69
    %v1669 = vpop.f32.mrb[0].mxu0
    %v1670 = vadd.f32 0.0, %v1669
    %v1671 = vpop.f32.mrb[0].mxu0
    %1672 = vmatprep.mubr.f32.mxu0 0.0
    %1673 = vmatmul.mubr.f32.gmra.mrb[0].mxu0 %v70
    %v1674 = vpop.f32.mrb[0].mxu0
    %v1675 = vadd.f32 0.0, %v1674
    %v1676 = vpop.f32.mrb[0].mxu0
    %1677 = vmatprep.mubr.f32.mxu0 0.0
    %1678 = vmatmul.mubr.f32.gmra.mrb[0].mxu0 %v71
    %v1679 = vpop.f32.mrb[0].mxu0
    %v1680 = vadd.f32 0.0, %v1679
    %v1681 = vpop.f32.mrb[0].mxu0
    %1682 = vdwg.mxu0
    %s1683 = scalar_lea.vmem [#allocation2], 640
    %1684 = vst [vmem:[%s1683] sm:$0xff] %v1605
    %1685 = vst [vmem:[%s1683 + $0x8] sm:$0xff] %v1610
    %1686 = vst [vmem:[%s1683 + $0x10] sm:$0xff] %v1615
    %1687 = vst [vmem:[%s1683 + $0x18] sm:$0xff] %v1620
    %1688 = vst [vmem:[%s1683 + $0x20] sm:$0xff] %v1625
    %1689 = vst [vmem:[%s1683 + $0x28] sm:$0xff] %v1630
    %1690 = vst [vmem:[%s1683 + $0x30] sm:$0xff] %v1635
    %1691 = vst [vmem:[%s1683 + $0x38] sm:$0xff] %v1640
    %1692 = vst [vmem:[%s1683 + $0x40] sm:$0xff] %v1645
    %1693 = vst [vmem:[%s1683 + $0x48] sm:$0xff] %v1650
    %1694 = vst [vmem:[%s1683 + $0x50] sm:$0xff] %v1655
    %1695 = vst [vmem:[%s1683 + $0x58] sm:$0xff] %v1660
    %1696 = vst [vmem:[%s1683 + $0x60] sm:$0xff] %v1665
    %1697 = vst [vmem:[%s1683 + $0x68] sm:$0xff] %v1670
    %1698 = vst [vmem:[%s1683 + $0x70] sm:$0xff] %v1675
    %1699 = vst [vmem:[%s1683 + $0x78] sm:$0xff] %v1680
    %v1700 = vld [vmem:[#allocation2] sm:$0xff]
    %v1701 = vld [vmem:[#allocation2 + $0x8] sm:$0xff]
    %v1702 = vld [vmem:[#allocation2 + $0x10] sm:$0xff]
    %v1703 = vld [vmem:[#allocation2 + $0x18] sm:$0xff]
    %v1704 = vld [vmem:[#allocation2 + $0x20] sm:$0xff]
    %v1705 = vld [vmem:[#allocation2 + $0x28] sm:$0xff]
    %v1706 = vld [vmem:[#allocation2 + $0x30] sm:$0xff]
    %v1707 = vld [vmem:[#allocation2 + $0x38] sm:$0xff]
    %v1708 = vld [vmem:[#allocation2 + $0x40] sm:$0xff]
    %v1709 = vld [vmem:[#allocation2 + $0x48] sm:$0xff]
    %v1710 = vld [vmem:[#allocation2 + $0x50] sm:$0xff]
    %v1711 = vld [vmem:[#allocation2 + $0x58] sm:$0xff]
    %v1712 = vld [vmem:[#allocation2 + $0x60] sm:$0xff]
    %v1713 = vld [vmem:[#allocation2 + $0x68] sm:$0xff]
    %v1714 = vld [vmem:[#allocation2 + $0x70] sm:$0xff]
    %v1715 = vld [vmem:[#allocation2 + $0x78] sm:$0xff]
    %v1716 = vld [vmem:[#allocation2 + $0x80] sm:$0xff]
    %v1717 = vld [vmem:[#allocation2 + $0x88] sm:$0xff]
    %v1718 = vld [vmem:[#allocation2 + $0x90] sm:$0xff]
    %v1719 = vld [vmem:[#allocation2 + $0x98] sm:$0xff]
    %v1720 = vld [vmem:[#allocation2 + $0xa0] sm:$0xff]
    %v1721 = vld [vmem:[#allocation2 + $0xa8] sm:$0xff]
    %v1722 = vld [vmem:[#allocation2 + $0xb0] sm:$0xff]
    %v1723 = vld [vmem:[#allocation2 + $0xb8] sm:$0xff]
    %v1724 = vld [vmem:[#allocation2 + $0xc0] sm:$0xff]
    %v1725 = vld [vmem:[#allocation2 + $0xc8] sm:$0xff]
    %v1726 = vld [vmem:[#allocation2 + $0xd0] sm:$0xff]
    %v1727 = vld [vmem:[#allocation2 + $0xd8] sm:$0xff]
    %v1728 = vld [vmem:[#allocation2 + $0xe0] sm:$0xff]
    %v1729 = vld [vmem:[#allocation2 + $0xe8] sm:$0xff]
    %v1730 = vld [vmem:[#allocation2 + $0xf0] sm:$0xff]
    %v1731 = vld [vmem:[#allocation2 + $0xf8] sm:$0xff]
    %v1732 = vld [vmem:[#allocation2 + $0x100] sm:$0xff]
    %v1733 = vld [vmem:[#allocation2 + $0x108] sm:$0xff]
    %v1734 = vld [vmem:[#allocation2 + $0x110] sm:$0xff]
    %v1735 = vld [vmem:[#allocation2 + $0x118] sm:$0xff]
    %v1736 = vld [vmem:[#allocation2 + $0x120] sm:$0xff]
    %v1737 = vld [vmem:[#allocation2 + $0x128] sm:$0xff]
    %v1738 = vld [vmem:[#allocation2 + $0x130] sm:$0xff]
    %v1739 = vld [vmem:[#allocation2 + $0x138] sm:$0xff]
    %v1740 = vld [vmem:[#allocation2 + $0x140] sm:$0xff]
    %v1741 = vld [vmem:[#allocation2 + $0x148] sm:$0xff]
    %v1742 = vld [vmem:[#allocation2 + $0x150] sm:$0xff]
    %v1743 = vld [vmem:[#allocation2 + $0x158] sm:$0xff]
    %v1744 = vld [vmem:[#allocation2 + $0x160] sm:$0xff]
    %v1745 = vld [vmem:[#allocation2 + $0x168] sm:$0xff]
    %v1746 = vld [vmem:[#allocation2 + $0x170] sm:$0xff]
    %v1747 = vld [vmem:[#allocation2 + $0x178] sm:$0xff]
    %v1748 = vld [vmem:[#allocation2 + $0x180] sm:$0xff]
    %v1749 = vld [vmem:[#allocation2 + $0x188] sm:$0xff]
    %v1750 = vld [vmem:[#allocation2 + $0x190] sm:$0xff]
    %v1751 = vld [vmem:[#allocation2 + $0x198] sm:$0xff]
    %v1752 = vld [vmem:[#allocation2 + $0x1a0] sm:$0xff]
    %v1753 = vld [vmem:[#allocation2 + $0x1a8] sm:$0xff]
    %v1754 = vld [vmem:[#allocation2 + $0x1b0] sm:$0xff]
    %v1755 = vld [vmem:[#allocation2 + $0x1b8] sm:$0xff]
    %v1756 = vld [vmem:[#allocation2 + $0x1c0] sm:$0xff]
    %v1757 = vld [vmem:[#allocation2 + $0x1c8] sm:$0xff]
    %v1758 = vld [vmem:[#allocation2 + $0x1d0] sm:$0xff]
    %v1759 = vld [vmem:[#allocation2 + $0x1d8] sm:$0xff]
    %v1760 = vld [vmem:[#allocation2 + $0x1e0] sm:$0xff]
    %v1761 = vld [vmem:[#allocation2 + $0x1e8] sm:$0xff]
    %v1762 = vld [vmem:[#allocation2 + $0x1f0] sm:$0xff]
    %v1763 = vld [vmem:[#allocation2 + $0x1f8] sm:$0xff]
    %v1764 = vld [vmem:[#allocation2 + $0x200] sm:$0xff]
    %v1765 = vld [vmem:[#allocation2 + $0x208] sm:$0xff]
    %v1766 = vld [vmem:[#allocation2 + $0x210] sm:$0xff]
    %v1767 = vld [vmem:[#allocation2 + $0x218] sm:$0xff]
    %v1768 = vld [vmem:[#allocation2 + $0x220] sm:$0xff]
    %v1769 = vld [vmem:[#allocation2 + $0x228] sm:$0xff]
    %v1770 = vld [vmem:[#allocation2 + $0x230] sm:$0xff]
    %v1771 = vld [vmem:[#allocation2 + $0x238] sm:$0xff]
    %v1772 = vld [vmem:[#allocation2 + $0x240] sm:$0xff]
    %v1773 = vld [vmem:[#allocation2 + $0x248] sm:$0xff]
    %v1774 = vld [vmem:[#allocation2 + $0x250] sm:$0xff]
    %v1775 = vld [vmem:[#allocation2 + $0x258] sm:$0xff]
    %v1776 = vld [vmem:[#allocation2 + $0x260] sm:$0xff]
    %v1777 = vld [vmem:[#allocation2 + $0x268] sm:$0xff]
    %v1778 = vld [vmem:[#allocation2 + $0x270] sm:$0xff]
    %v1779 = vld [vmem:[#allocation2 + $0x278] sm:$0xff]
    %v1780 = vld [vmem:[#allocation2 + $0x280] sm:$0xff]
    %v1781 = vld [vmem:[#allocation2 + $0x288] sm:$0xff]
    %v1782 = vld [vmem:[#allocation2 + $0x290] sm:$0xff]
    %v1783 = vld [vmem:[#allocation2 + $0x298] sm:$0xff]
    %v1784 = vld [vmem:[#allocation2 + $0x2a0] sm:$0xff]
    %v1785 = vld [vmem:[#allocation2 + $0x2a8] sm:$0xff]
    %v1786 = vld [vmem:[#allocation2 + $0x2b0] sm:$0xff]
    %v1787 = vld [vmem:[#allocation2 + $0x2b8] sm:$0xff]
    %v1788 = vld [vmem:[#allocation2 + $0x2c0] sm:$0xff]
    %v1789 = vld [vmem:[#allocation2 + $0x2c8] sm:$0xff]
    %v1790 = vld [vmem:[#allocation2 + $0x2d0] sm:$0xff]
    %v1791 = vld [vmem:[#allocation2 + $0x2d8] sm:$0xff]
    %v1792 = vld [vmem:[#allocation2 + $0x2e0] sm:$0xff]
    %v1793 = vld [vmem:[#allocation2 + $0x2e8] sm:$0xff]
    %v1794 = vld [vmem:[#allocation2 + $0x2f0] sm:$0xff]
    %v1795 = vld [vmem:[#allocation2 + $0x2f8] sm:$0xff]
    %v1796 = vsub.f32 %v88, %v1700
    %v1797 = vsub.f32 %v89, %v1701
    %v1798 = vsub.f32 %v90, %v1702
    %v1799 = vsub.f32 %v91, %v1703
    %v1800 = vsub.f32 %v92, %v1704
    %v1801 = vsub.f32 %v93, %v1705
    %v1802 = vsub.f32 %v94, %v1706
    %v1803 = vsub.f32 %v95, %v1707
    %v1804 = vsub.f32 %v96, %v1708
    %v1805 = vsub.f32 %v97, %v1709
    %v1806 = vsub.f32 %v98, %v1710
    %v1807 = vsub.f32 %v99, %v1711
    %v1808 = vsub.f32 %v100, %v1712
    %v1809 = vsub.f32 %v101, %v1713
    %v1810 = vsub.f32 %v102, %v1714
    %v1811 = vsub.f32 %v103, %v1715
    %v1812 = vsub.f32 %v104, %v1716
    %v1813 = vsub.f32 %v105, %v1717
    %v1814 = vsub.f32 %v106, %v1718
    %v1815 = vsub.f32 %v107, %v1719
    %v1816 = vsub.f32 %v108, %v1720
    %v1817 = vsub.f32 %v109, %v1721
    %v1818 = vsub.f32 %v110, %v1722
    %v1819 = vsub.f32 %v111, %v1723
    %v1820 = vsub.f32 %v112, %v1724
    %v1821 = vsub.f32 %v113, %v1725
    %v1822 = vsub.f32 %v114, %v1726
    %v1823 = vsub.f32 %v115, %v1727
    %v1824 = vsub.f32 %v116, %v1728
    %v1825 = vsub.f32 %v117, %v1729
    %v1826 = vsub.f32 %v118, %v1730
    %v1827 = vsub.f32 %v119, %v1731
    %v1828 = vsub.f32 %v120, %v1732
    %v1829 = vsub.f32 %v121, %v1733
    %v1830 = vsub.f32 %v122, %v1734
    %v1831 = vsub.f32 %v123, %v1735
    %v1832 = vsub.f32 %v124, %v1736
    %v1833 = vsub.f32 %v125, %v1737
    %v1834 = vsub.f32 %v126, %v1738
    %v1835 = vsub.f32 %v127, %v1739
    %v1836 = vsub.f32 %v128, %v1740
    %v1837 = vsub.f32 %v129, %v1741
    %v1838 = vsub.f32 %v130, %v1742
    %v1839 = vsub.f32 %v131, %v1743
    %v1840 = vsub.f32 %v132, %v1744
    %v1841 = vsub.f32 %v133, %v1745
    %v1842 = vsub.f32 %v134, %v1746
    %v1843 = vsub.f32 %v135, %v1747
    %v1844 = vsub.f32 %v136, %v1748
    %v1845 = vsub.f32 %v137, %v1749
    %v1846 = vsub.f32 %v138, %v1750
    %v1847 = vsub.f32 %v139, %v1751
    %v1848 = vsub.f32 %v140, %v1752
    %v1849 = vsub.f32 %v141, %v1753
    %v1850 = vsub.f32 %v142, %v1754
    %v1851 = vsub.f32 %v143, %v1755
    %v1852 = vsub.f32 %v144, %v1756
    %v1853 = vsub.f32 %v145, %v1757
    %v1854 = vsub.f32 %v146, %v1758
    %v1855 = vsub.f32 %v147, %v1759
    %v1856 = vsub.f32 %v148, %v1760
    %v1857 = vsub.f32 %v149, %v1761
    %v1858 = vsub.f32 %v150, %v1762
    %v1859 = vsub.f32 %v151, %v1763
    %v1860 = vsub.f32 %v152, %v1764
    %v1861 = vsub.f32 %v153, %v1765
    %v1862 = vsub.f32 %v154, %v1766
    %v1863 = vsub.f32 %v155, %v1767
    %v1864 = vsub.f32 %v156, %v1768
    %v1865 = vsub.f32 %v157, %v1769
    %v1866 = vsub.f32 %v158, %v1770
    %v1867 = vsub.f32 %v159, %v1771
    %v1868 = vsub.f32 %v160, %v1772
    %v1869 = vsub.f32 %v161, %v1773
    %v1870 = vsub.f32 %v162, %v1774
    %v1871 = vsub.f32 %v163, %v1775
    %v1872 = vsub.f32 %v164, %v1776
    %v1873 = vsub.f32 %v165, %v1777
    %v1874 = vsub.f32 %v166, %v1778
    %v1875 = vsub.f32 %v167, %v1779
    %v1876 = vsub.f32 %v168, %v1780
    %v1877 = vsub.f32 %v169, %v1781
    %v1878 = vsub.f32 %v170, %v1782
    %v1879 = vsub.f32 %v171, %v1783
    %v1880 = vsub.f32 %v172, %v1784
    %v1881 = vsub.f32 %v173, %v1785
    %v1882 = vsub.f32 %v174, %v1786
    %v1883 = vsub.f32 %v175, %v1787
    %v1884 = vsub.f32 %v176, %v1788
    %v1885 = vsub.f32 %v177, %v1789
    %v1886 = vsub.f32 %v178, %v1790
    %v1887 = vsub.f32 %v179, %v1791
    %v1888 = vsub.f32 %v180, %v1792
    %v1889 = vsub.f32 %v181, %v1793
    %v1890 = vsub.f32 %v182, %v1794
    %v1891 = vsub.f32 %v183, %v1795
    %v1892 = vand.u32 2147483647, %v1796
    %v1893 = vand.u32 2147483647, %v1797
    %v1894 = vand.u32 2147483647, %v1798
    %v1895 = vand.u32 2147483647, %v1799
    %v1896 = vand.u32 2147483647, %v1800
    %v1897 = vand.u32 2147483647, %v1801
    %v1898 = vand.u32 2147483647, %v1802
    %v1899 = vand.u32 2147483647, %v1803
    %v1900 = vand.u32 2147483647, %v1804
    %v1901 = vand.u32 2147483647, %v1805
    %v1902 = vand.u32 2147483647, %v1806
    %v1903 = vand.u32 2147483647, %v1807
    %v1904 = vand.u32 2147483647, %v1808
    %v1905 = vand.u32 2147483647, %v1809
    %v1906 = vand.u32 2147483647, %v1810
    %v1907 = vand.u32 2147483647, %v1811
    %v1908 = vand.u32 2147483647, %v1812
    %v1909 = vand.u32 2147483647, %v1813
    %v1910 = vand.u32 2147483647, %v1814
    %v1911 = vand.u32 2147483647, %v1815
    %v1912 = vand.u32 2147483647, %v1816
    %v1913 = vand.u32 2147483647, %v1817
    %v1914 = vand.u32 2147483647, %v1818
    %v1915 = vand.u32 2147483647, %v1819
    %v1916 = vand.u32 2147483647, %v1820
    %v1917 = vand.u32 2147483647, %v1821
    %v1918 = vand.u32 2147483647, %v1822
    %v1919 = vand.u32 2147483647, %v1823
    %v1920 = vand.u32 2147483647, %v1824
    %v1921 = vand.u32 2147483647, %v1825
    %v1922 = vand.u32 2147483647, %v1826
    %v1923 = vand.u32 2147483647, %v1827
    %v1924 = vand.u32 2147483647, %v1828
    %v1925 = vand.u32 2147483647, %v1829
    %v1926 = vand.u32 2147483647, %v1830
    %v1927 = vand.u32 2147483647, %v1831
    %v1928 = vand.u32 2147483647, %v1832
    %v1929 = vand.u32 2147483647, %v1833
    %v1930 = vand.u32 2147483647, %v1834
    %v1931 = vand.u32 2147483647, %v1835
    %v1932 = vand.u32 2147483647, %v1836
    %v1933 = vand.u32 2147483647, %v1837
    %v1934 = vand.u32 2147483647, %v1838
    %v1935 = vand.u32 2147483647, %v1839
    %v1936 = vand.u32 2147483647, %v1840
    %v1937 = vand.u32 2147483647, %v1841
    %v1938 = vand.u32 2147483647, %v1842
    %v1939 = vand.u32 2147483647, %v1843
    %v1940 = vand.u32 2147483647, %v1844
    %v1941 = vand.u32 2147483647, %v1845
    %v1942 = vand.u32 2147483647, %v1846
    %v1943 = vand.u32 2147483647, %v1847
    %v1944 = vand.u32 2147483647, %v1848
    %v1945 = vand.u32 2147483647, %v1849
    %v1946 = vand.u32 2147483647, %v1850
    %v1947 = vand.u32 2147483647, %v1851
    %v1948 = vand.u32 2147483647, %v1852
    %v1949 = vand.u32 2147483647, %v1853
    %v1950 = vand.u32 2147483647, %v1854
    %v1951 = vand.u32 2147483647, %v1855
    %v1952 = vand.u32 2147483647, %v1856
    %v1953 = vand.u32 2147483647, %v1857
    %v1954 = vand.u32 2147483647, %v1858
    %v1955 = vand.u32 2147483647, %v1859
    %v1956 = vand.u32 2147483647, %v1860
    %v1957 = vand.u32 2147483647, %v1861
    %v1958 = vand.u32 2147483647, %v1862
    %v1959 = vand.u32 2147483647, %v1863
    %v1960 = vand.u32 2147483647, %v1864
    %v1961 = vand.u32 2147483647, %v1865
    %v1962 = vand.u32 2147483647, %v1866
    %v1963 = vand.u32 2147483647, %v1867
    %v1964 = vand.u32 2147483647, %v1868
    %v1965 = vand.u32 2147483647, %v1869
    %v1966 = vand.u32 2147483647, %v1870
    %v1967 = vand.u32 2147483647, %v1871
    %v1968 = vand.u32 2147483647, %v1872
    %v1969 = vand.u32 2147483647, %v1873
    %v1970 = vand.u32 2147483647, %v1874
    %v1971 = vand.u32 2147483647, %v1875
    %v1972 = vand.u32 2147483647, %v1876
    %v1973 = vand.u32 2147483647, %v1877
    %v1974 = vand.u32 2147483647, %v1878
    %v1975 = vand.u32 2147483647, %v1879
    %v1976 = vand.u32 2147483647, %v1880
    %v1977 = vand.u32 2147483647, %v1881
    %v1978 = vand.u32 2147483647, %v1882
    %v1979 = vand.u32 2147483647, %v1883
    %v1980 = vand.u32 2147483647, %v1884
    %v1981 = vand.u32 2147483647, %v1885
    %v1982 = vand.u32 2147483647, %v1886
    %v1983 = vand.u32 2147483647, %v1887
    %v1984 = vand.u32 2147483647, %v1888
    %v1985 = vand.u32 2147483647, %v1889
    %v1986 = vand.u32 2147483647, %v1890
    %v1987 = vand.u32 2147483647, %v1891
    %vm1988 = vcmp.gt.f32.partialorder %v1892, 0.11764706
    %vm1989 = vcmp.gt.f32.partialorder %v1893, 0.11764706
    %vm1990 = vcmp.gt.f32.partialorder %v1894, 0.11764706
    %vm1991 = vcmp.gt.f32.partialorder %v1895, 0.11764706
    %vm1992 = vcmp.gt.f32.partialorder %v1896, 0.11764706
    %vm1993 = vcmp.gt.f32.partialorder %v1897, 0.11764706
    %vm1994 = vcmp.gt.f32.partialorder %v1898, 0.11764706
    %vm1995 = vcmp.gt.f32.partialorder %v1899, 0.11764706
    %vm1996 = vcmp.gt.f32.partialorder %v1900, 0.11764706
    %vm1997 = vcmp.gt.f32.partialorder %v1901, 0.11764706
    %vm1998 = vcmp.gt.f32.partialorder %v1902, 0.11764706
    %vm1999 = vcmp.gt.f32.partialorder %v1903, 0.11764706
    %vm2000 = vcmp.gt.f32.partialorder %v1904, 0.11764706
    %vm2001 = vcmp.gt.f32.partialorder %v1905, 0.11764706
    %vm2002 = vcmp.gt.f32.partialorder %v1906, 0.11764706
    %vm2003 = vcmp.gt.f32.partialorder %v1907, 0.11764706
    %vm2004 = vcmp.gt.f32.partialorder %v1908, 0.11764706
    %vm2005 = vcmp.gt.f32.partialorder %v1909, 0.11764706
    %vm2006 = vcmp.gt.f32.partialorder %v1910, 0.11764706
    %vm2007 = vcmp.gt.f32.partialorder %v1911, 0.11764706
    %vm2008 = vcmp.gt.f32.partialorder %v1912, 0.11764706
    %vm2009 = vcmp.gt.f32.partialorder %v1913, 0.11764706
    %vm2010 = vcmp.gt.f32.partialorder %v1914, 0.11764706
    %vm2011 = vcmp.gt.f32.partialorder %v1915, 0.11764706
    %vm2012 = vcmp.gt.f32.partialorder %v1916, 0.11764706
    %vm2013 = vcmp.gt.f32.partialorder %v1917, 0.11764706
    %vm2014 = vcmp.gt.f32.partialorder %v1918, 0.11764706
    %vm2015 = vcmp.gt.f32.partialorder %v1919, 0.11764706
    %vm2016 = vcmp.gt.f32.partialorder %v1920, 0.11764706
    %vm2017 = vcmp.gt.f32.partialorder %v1921, 0.11764706
    %vm2018 = vcmp.gt.f32.partialorder %v1922, 0.11764706
    %vm2019 = vcmp.gt.f32.partialorder %v1923, 0.11764706
    %vm2020 = vcmp.gt.f32.partialorder %v1924, 0.11764706
    %vm2021 = vcmp.gt.f32.partialorder %v1925, 0.11764706
    %vm2022 = vcmp.gt.f32.partialorder %v1926, 0.11764706
    %vm2023 = vcmp.gt.f32.partialorder %v1927, 0.11764706
    %vm2024 = vcmp.gt.f32.partialorder %v1928, 0.11764706
    %vm2025 = vcmp.gt.f32.partialorder %v1929, 0.11764706
    %vm2026 = vcmp.gt.f32.partialorder %v1930, 0.11764706
    %vm2027 = vcmp.gt.f32.partialorder %v1931, 0.11764706
    %vm2028 = vcmp.gt.f32.partialorder %v1932, 0.11764706
    %vm2029 = vcmp.gt.f32.partialorder %v1933, 0.11764706
    %vm2030 = vcmp.gt.f32.partialorder %v1934, 0.11764706
    %vm2031 = vcmp.gt.f32.partialorder %v1935, 0.11764706
    %vm2032 = vcmp.gt.f32.partialorder %v1936, 0.11764706
    %vm2033 = vcmp.gt.f32.partialorder %v1937, 0.11764706
    %vm2034 = vcmp.gt.f32.partialorder %v1938, 0.11764706
    %vm2035 = vcmp.gt.f32.partialorder %v1939, 0.11764706
    %vm2036 = vcmp.gt.f32.partialorder %v1940, 0.11764706
    %vm2037 = vcmp.gt.f32.partialorder %v1941, 0.11764706
    %vm2038 = vcmp.gt.f32.partialorder %v1942, 0.11764706
    %vm2039 = vcmp.gt.f32.partialorder %v1943, 0.11764706
    %vm2040 = vcmp.gt.f32.partialorder %v1944, 0.11764706
    %vm2041 = vcmp.gt.f32.partialorder %v1945, 0.11764706
    %vm2042 = vcmp.gt.f32.partialorder %v1946, 0.11764706
    %vm2043 = vcmp.gt.f32.partialorder %v1947, 0.11764706
    %vm2044 = vcmp.gt.f32.partialorder %v1948, 0.11764706
    %vm2045 = vcmp.gt.f32.partialorder %v1949, 0.11764706
    %vm2046 = vcmp.gt.f32.partialorder %v1950, 0.11764706
    %vm2047 = vcmp.gt.f32.partialorder %v1951, 0.11764706
    %vm2048 = vcmp.gt.f32.partialorder %v1952, 0.11764706
    %vm2049 = vcmp.gt.f32.partialorder %v1953, 0.11764706
    %vm2050 = vcmp.gt.f32.partialorder %v1954, 0.11764706
    %vm2051 = vcmp.gt.f32.partialorder %v1955, 0.11764706
    %vm2052 = vcmp.gt.f32.partialorder %v1956, 0.11764706
    %vm2053 = vcmp.gt.f32.partialorder %v1957, 0.11764706
    %vm2054 = vcmp.gt.f32.partialorder %v1958, 0.11764706
    %vm2055 = vcmp.gt.f32.partialorder %v1959, 0.11764706
    %vm2056 = vcmp.gt.f32.partialorder %v1960, 0.11764706
    %vm2057 = vcmp.gt.f32.partialorder %v1961, 0.11764706
    %vm2058 = vcmp.gt.f32.partialorder %v1962, 0.11764706
    %vm2059 = vcmp.gt.f32.partialorder %v1963, 0.11764706
    %vm2060 = vcmp.gt.f32.partialorder %v1964, 0.11764706
    %vm2061 = vcmp.gt.f32.partialorder %v1965, 0.11764706
    %vm2062 = vcmp.gt.f32.partialorder %v1966, 0.11764706
    %vm2063 = vcmp.gt.f32.partialorder %v1967, 0.11764706
    %vm2064 = vcmp.gt.f32.partialorder %v1968, 0.11764706
    %vm2065 = vcmp.gt.f32.partialorder %v1969, 0.11764706
    %vm2066 = vcmp.gt.f32.partialorder %v1970, 0.11764706
    %vm2067 = vcmp.gt.f32.partialorder %v1971, 0.11764706
    %vm2068 = vcmp.gt.f32.partialorder %v1972, 0.11764706
    %vm2069 = vcmp.gt.f32.partialorder %v1973, 0.11764706
    %vm2070 = vcmp.gt.f32.partialorder %v1974, 0.11764706
    %vm2071 = vcmp.gt.f32.partialorder %v1975, 0.11764706
    %vm2072 = vcmp.gt.f32.partialorder %v1976, 0.11764706
    %vm2073 = vcmp.gt.f32.partialorder %v1977, 0.11764706
    %vm2074 = vcmp.gt.f32.partialorder %v1978, 0.11764706
    %vm2075 = vcmp.gt.f32.partialorder %v1979, 0.11764706
    %vm2076 = vcmp.gt.f32.partialorder %v1980, 0.11764706
    %vm2077 = vcmp.gt.f32.partialorder %v1981, 0.11764706
    %vm2078 = vcmp.gt.f32.partialorder %v1982, 0.11764706
    %vm2079 = vcmp.gt.f32.partialorder %v1983, 0.11764706
    %vm2080 = vcmp.gt.f32.partialorder %v1984, 0.11764706
    %vm2081 = vcmp.gt.f32.partialorder %v1985, 0.11764706
    %vm2082 = vcmp.gt.f32.partialorder %v1986, 0.11764706
    %vm2083 = vcmp.gt.f32.partialorder %v1987, 0.11764706
    %v2084 = vsel %vm1988, 1, 0
    %v2085 = vsel %vm1989, 1, 0
    %v2086 = vsel %vm1990, 1, 0
    %v2087 = vsel %vm1991, 1, 0
    %v2088 = vsel %vm1992, 1, 0
    %v2089 = vsel %vm1993, 1, 0
    %v2090 = vsel %vm1994, 1, 0
    %v2091 = vsel %vm1995, 1, 0
    %v2092 = vsel %vm1996, 1, 0
    %v2093 = vsel %vm1997, 1, 0
    %v2094 = vsel %vm1998, 1, 0
    %v2095 = vsel %vm1999, 1, 0
    %v2096 = vsel %vm2000, 1, 0
    %v2097 = vsel %vm2001, 1, 0
    %v2098 = vsel %vm2002, 1, 0
    %v2099 = vsel %vm2003, 1, 0
    %v2100 = vsel %vm2004, 1, 0
    %v2101 = vsel %vm2005, 1, 0
    %v2102 = vsel %vm2006, 1, 0
    %v2103 = vsel %vm2007, 1, 0
    %v2104 = vsel %vm2008, 1, 0
    %v2105 = vsel %vm2009, 1, 0
    %v2106 = vsel %vm2010, 1, 0
    %v2107 = vsel %vm2011, 1, 0
    %v2108 = vsel %vm2012, 1, 0
    %v2109 = vsel %vm2013, 1, 0
    %v2110 = vsel %vm2014, 1, 0
    %v2111 = vsel %vm2015, 1, 0
    %v2112 = vsel %vm2016, 1, 0
    %v2113 = vsel %vm2017, 1, 0
    %v2114 = vsel %vm2018, 1, 0
    %v2115 = vsel %vm2019, 1, 0
    %v2116 = vsel %vm2020, 1, 0
    %v2117 = vsel %vm2021, 1, 0
    %v2118 = vsel %vm2022, 1, 0
    %v2119 = vsel %vm2023, 1, 0
    %v2120 = vsel %vm2024, 1, 0
    %v2121 = vsel %vm2025, 1, 0
    %v2122 = vsel %vm2026, 1, 0
    %v2123 = vsel %vm2027, 1, 0
    %v2124 = vsel %vm2028, 1, 0
    %v2125 = vsel %vm2029, 1, 0
    %v2126 = vsel %vm2030, 1, 0
    %v2127 = vsel %vm2031, 1, 0
    %v2128 = vsel %vm2032, 1, 0
    %v2129 = vsel %vm2033, 1, 0
    %v2130 = vsel %vm2034, 1, 0
    %v2131 = vsel %vm2035, 1, 0
    %v2132 = vsel %vm2036, 1, 0
    %v2133 = vsel %vm2037, 1, 0
    %v2134 = vsel %vm2038, 1, 0
    %v2135 = vsel %vm2039, 1, 0
    %v2136 = vsel %vm2040, 1, 0
    %v2137 = vsel %vm2041, 1, 0
    %v2138 = vsel %vm2042, 1, 0
    %v2139 = vsel %vm2043, 1, 0
    %v2140 = vsel %vm2044, 1, 0
    %v2141 = vsel %vm2045, 1, 0
    %v2142 = vsel %vm2046, 1, 0
    %v2143 = vsel %vm2047, 1, 0
    %v2144 = vsel %vm2048, 1, 0
    %v2145 = vsel %vm2049, 1, 0
    %v2146 = vsel %vm2050, 1, 0
    %v2147 = vsel %vm2051, 1, 0
    %v2148 = vsel %vm2052, 1, 0
    %v2149 = vsel %vm2053, 1, 0
    %v2150 = vsel %vm2054, 1, 0
    %v2151 = vsel %vm2055, 1, 0
    %v2152 = vsel %vm2056, 1, 0
    %v2153 = vsel %vm2057, 1, 0
    %v2154 = vsel %vm2058, 1, 0
    %v2155 = vsel %vm2059, 1, 0
    %v2156 = vsel %vm2060, 1, 0
    %v2157 = vsel %vm2061, 1, 0
    %v2158 = vsel %vm2062, 1, 0
    %v2159 = vsel %vm2063, 1, 0
    %v2160 = vsel %vm2064, 1, 0
    %v2161 = vsel %vm2065, 1, 0
    %v2162 = vsel %vm2066, 1, 0
    %v2163 = vsel %vm2067, 1, 0
    %v2164 = vsel %vm2068, 1, 0
    %v2165 = vsel %vm2069, 1, 0
    %v2166 = vsel %vm2070, 1, 0
    %v2167 = vsel %vm2071, 1, 0
    %v2168 = vsel %vm2072, 1, 0
    %v2169 = vsel %vm2073, 1, 0
    %v2170 = vsel %vm2074, 1, 0
    %v2171 = vsel %vm2075, 1, 0
    %v2172 = vsel %vm2076, 1, 0
    %v2173 = vsel %vm2077, 1, 0
    %v2174 = vsel %vm2078, 1, 0
    %v2175 = vsel %vm2079, 1, 0
    %v2176 = vsel %vm2080, 1, 0
    %v2177 = vsel %vm2081, 1, 0
    %v2178 = vsel %vm2082, 1, 0
    %v2179 = vsel %vm2083, 1, 0
    %v2180 = vcvt.s32.f32 %v2084
    %v2181 = vcvt.s32.f32 %v2085
    %v2182 = vcvt.s32.f32 %v2086
    %v2183 = vcvt.s32.f32 %v2087
    %v2184 = vcvt.s32.f32 %v2088
    %v2185 = vcvt.s32.f32 %v2089
    %v2186 = vcvt.s32.f32 %v2090
    %v2187 = vcvt.s32.f32 %v2091
    %v2188 = vcvt.s32.f32 %v2092
    %v2189 = vcvt.s32.f32 %v2093
    %v2190 = vcvt.s32.f32 %v2094
    %v2191 = vcvt.s32.f32 %v2095
    %v2192 = vcvt.s32.f32 %v2096
    %v2193 = vcvt.s32.f32 %v2097
    %v2194 = vcvt.s32.f32 %v2098
    %v2195 = vcvt.s32.f32 %v2099
    %v2196 = vcvt.s32.f32 %v2100
    %v2197 = vcvt.s32.f32 %v2101
    %v2198 = vcvt.s32.f32 %v2102
    %v2199 = vcvt.s32.f32 %v2103
    %v2200 = vcvt.s32.f32 %v2104
    %v2201 = vcvt.s32.f32 %v2105
    %v2202 = vcvt.s32.f32 %v2106
    %v2203 = vcvt.s32.f32 %v2107
    %v2204 = vcvt.s32.f32 %v2108
    %v2205 = vcvt.s32.f32 %v2109
    %v2206 = vcvt.s32.f32 %v2110
    %v2207 = vcvt.s32.f32 %v2111
    %v2208 = vcvt.s32.f32 %v2112
    %v2209 = vcvt.s32.f32 %v2113
    %v2210 = vcvt.s32.f32 %v2114
    %v2211 = vcvt.s32.f32 %v2115
    %v2212 = vcvt.s32.f32 %v2116
    %v2213 = vcvt.s32.f32 %v2117
    %v2214 = vcvt.s32.f32 %v2118
    %v2215 = vcvt.s32.f32 %v2119
    %v2216 = vcvt.s32.f32 %v2120
    %v2217 = vcvt.s32.f32 %v2121
    %v2218 = vcvt.s32.f32 %v2122
    %v2219 = vcvt.s32.f32 %v2123
    %v2220 = vcvt.s32.f32 %v2124
    %v2221 = vcvt.s32.f32 %v2125
    %v2222 = vcvt.s32.f32 %v2126
    %v2223 = vcvt.s32.f32 %v2127
    %v2224 = vcvt.s32.f32 %v2128
    %v2225 = vcvt.s32.f32 %v2129
    %v2226 = vcvt.s32.f32 %v2130
    %v2227 = vcvt.s32.f32 %v2131
    %v2228 = vcvt.s32.f32 %v2132
    %v2229 = vcvt.s32.f32 %v2133
    %v2230 = vcvt.s32.f32 %v2134
    %v2231 = vcvt.s32.f32 %v2135
    %v2232 = vcvt.s32.f32 %v2136
    %v2233 = vcvt.s32.f32 %v2137
    %v2234 = vcvt.s32.f32 %v2138
    %v2235 = vcvt.s32.f32 %v2139
    %v2236 = vcvt.s32.f32 %v2140
    %v2237 = vcvt.s32.f32 %v2141
    %v2238 = vcvt.s32.f32 %v2142
    %v2239 = vcvt.s32.f32 %v2143
    %v2240 = vcvt.s32.f32 %v2144
    %v2241 = vcvt.s32.f32 %v2145
    %v2242 = vcvt.s32.f32 %v2146
    %v2243 = vcvt.s32.f32 %v2147
    %v2244 = vcvt.s32.f32 %v2148
    %v2245 = vcvt.s32.f32 %v2149
    %v2246 = vcvt.s32.f32 %v2150
    %v2247 = vcvt.s32.f32 %v2151
    %v2248 = vcvt.s32.f32 %v2152
    %v2249 = vcvt.s32.f32 %v2153
    %v2250 = vcvt.s32.f32 %v2154
    %v2251 = vcvt.s32.f32 %v2155
    %v2252 = vcvt.s32.f32 %v2156
    %v2253 = vcvt.s32.f32 %v2157
    %v2254 = vcvt.s32.f32 %v2158
    %v2255 = vcvt.s32.f32 %v2159
    %v2256 = vcvt.s32.f32 %v2160
    %v2257 = vcvt.s32.f32 %v2161
    %v2258 = vcvt.s32.f32 %v2162
    %v2259 = vcvt.s32.f32 %v2163
    %v2260 = vcvt.s32.f32 %v2164
    %v2261 = vcvt.s32.f32 %v2165
    %v2262 = vcvt.s32.f32 %v2166
    %v2263 = vcvt.s32.f32 %v2167
    %v2264 = vcvt.s32.f32 %v2168
    %v2265 = vcvt.s32.f32 %v2169
    %v2266 = vcvt.s32.f32 %v2170
    %v2267 = vcvt.s32.f32 %v2171
    %v2268 = vcvt.s32.f32 %v2172
    %v2269 = vcvt.s32.f32 %v2173
    %v2270 = vcvt.s32.f32 %v2174
    %v2271 = vcvt.s32.f32 %v2175
    %v2272 = vcvt.s32.f32 %v2176
    %v2273 = vcvt.s32.f32 %v2177
    %v2274 = vcvt.s32.f32 %v2178
    %v2275 = vcvt.s32.f32 %v2179
    %2276 = vmatprep.subr.mxu0 0.0
    %2277 = vmatpush1.msra.mxu0 %v72
    %2278 = vmatprep.subr.mxu0 0.0
    %2279 = vmatpush1.msra.mxu0 %v73
    %2280 = vmatprep.subr.mxu0 0.0
    %2281 = vmatpush1.msra.mxu0 %v74
    %2282 = vmatprep.subr.mxu0 0.0
    %2283 = vmatpush1.msra.mxu0 %v75
    %2284 = vmatprep.subr.mxu0 0.0
    %2285 = vmatpush1.msra.mxu0 %v76
    %2286 = vmatprep.subr.mxu0 0.0
    %2287 = vmatpush1.msra.mxu0 %v77
    %2288 = vmatprep.subr.mxu0 0.0
    %2289 = vmatpush1.msra.mxu0 %v78
    %2290 = vmatprep.subr.mxu0 0.0
    %2291 = vmatpush1.msra.mxu0 %v79
    %2292 = vmatprep.subr.mxu0 0.0
    %2293 = vmatpush1.msra.mxu0 %v80
    %2294 = vmatprep.subr.mxu0 0.0
    %2295 = vmatpush1.msra.mxu0 %v81
    %2296 = vmatprep.subr.mxu0 0.0
    %2297 = vmatpush1.msra.mxu0 %v82
    %2298 = vmatprep.subr.mxu0 0.0
    %2299 = vmatpush1.msra.mxu0 %v83
    %2300 = vmatprep.subr.mxu0 0.0
    %2301 = vmatpush1.msra.mxu0 %v84
    %2302 = vmatprep.subr.mxu0 0.0
    %2303 = vmatpush1.msra.mxu0 %v85
    %2304 = vmatprep.subr.mxu0 0.0
    %2305 = vmatpush1.msra.mxu0 %v86
    %2306 = vmatprep.subr.mxu0 0.0
    %2307 = vmatpush1.msra.mxu0 %v87
    %2308 = vmatprep.subr.mxu0 0.0
    %2309 = vmatpush1.msra.mxu0 0.0
    %2310 = vmatprep.subr.mxu0 0.0
    %2311 = vmatpush1.msra.mxu0 0.0
    %2312 = vmatprep.subr.mxu0 0.0
    %2313 = vmatpush1.msra.mxu0 0.0
    %2314 = vmatprep.subr.mxu0 0.0
    %2315 = vmatpush1.msra.mxu0 0.0
    %2316 = vmatprep.subr.mxu0 0.0
    %2317 = vmatpush1.msra.mxu0 0.0
    %2318 = vmatprep.subr.mxu0 0.0
    %2319 = vmatpush1.msra.mxu0 0.0
    %2320 = vmatprep.subr.mxu0 0.0
    %2321 = vmatpush1.msra.mxu0 0.0
    %2322 = vmatprep.subr.mxu0 0.0
    %2323 = vmatpush1.msra.mxu0 0.0
    %2324 = vmatprep.subr.mxu0 0.0
    %2325 = vmatpush1.msra.mxu0 0.0
    %2326 = vmatprep.subr.mxu0 0.0
    %2327 = vmatpush1.msra.mxu0 0.0
    %2328 = vmatprep.subr.mxu0 0.0
    %2329 = vmatpush1.msra.mxu0 0.0
    %2330 = vmatprep.subr.mxu0 0.0
    %2331 = vmatpush1.msra.mxu0 0.0
    %2332 = vmatprep.subr.mxu0 0.0
    %2333 = vmatpush1.msra.mxu0 0.0
    %2334 = vmatprep.subr.mxu0 0.0
    %2335 = vmatpush1.msra.mxu0 0.0
    %2336 = vmatprep.subr.mxu0 0.0
    %2337 = vmatpush1.msra.mxu0 0.0
    %2338 = vmatprep.subr.mxu0 0.0
    %2339 = vmatpush1.msra.mxu0 0.0
    %2340 = vmatprep.mubr.f32.mxu0 0.0
    %2341 = vmatmul.mubr.f32.gmra.mrb[0].mxu0 %v2180
    %v2342 = vpop.f32.mrb[0].mxu0
    %v2343 = vadd.f32 0.0, %v2342
    %v2344 = vpop.f32.mrb[0].mxu0
    %2345 = vmatprep.mubr.f32.mxu0 0.0
    %2346 = vmatmul.mubr.f32.gmra.mrb[0].mxu0 %v2181
    %v2347 = vpop.f32.mrb[0].mxu0
    %v2348 = vadd.f32 0.0, %v2347
    %v2349 = vpop.f32.mrb[0].mxu0
    %2350 = vmatprep.mubr.f32.mxu0 0.0
    %2351 = vmatmul.mubr.f32.gmra.mrb[0].mxu0 %v2182
    %v2352 = vpop.f32.mrb[0].mxu0
    %v2353 = vadd.f32 0.0, %v2352
    %v2354 = vpop.f32.mrb[0].mxu0
    %2355 = vmatprep.mubr.f32.mxu0 0.0
    %2356 = vmatmul.mubr.f32.gmra.mrb[0].mxu0 %v2183
    %v2357 = vpop.f32.mrb[0].mxu0
    %v2358 = vadd.f32 0.0, %v2357
    %v2359 = vpop.f32.mrb[0].mxu0
    %2360 = vmatprep.mubr.f32.mxu0 0.0
    %2361 = vmatmul.mubr.f32.gmra.mrb[0].mxu0 %v2184
    %v2362 = vpop.f32.mrb[0].mxu0
    %v2363 = vadd.f32 0.0, %v2362
    %v2364 = vpop.f32.mrb[0].mxu0
    %2365 = vmatprep.mubr.f32.mxu0 0.0
    %2366 = vmatmul.mubr.f32.gmra.mrb[0].mxu0 %v2185
    %v2367 = vpop.f32.mrb[0].mxu0
    %v2368 = vadd.f32 0.0, %v2367
    %v2369 = vpop.f32.mrb[0].mxu0
    %2370 = vmatprep.mubr.f32.mxu0 0.0
    %2371 = vmatmul.mubr.f32.gmra.mrb[0].mxu0 %v2186
    %v2372 = vpop.f32.mrb[0].mxu0
    %v2373 = vadd.f32 0.0, %v2372
    %v2374 = vpop.f32.mrb[0].mxu0
    %2375 = vmatprep.mubr.f32.mxu0 0.0
    %2376 = vmatmul.mubr.f32.gmra.mrb[0].mxu0 %v2187
    %v2377 = vpop.f32.mrb[0].mxu0
    %v2378 = vadd.f32 0.0, %v2377
    %v2379 = vpop.f32.mrb[0].mxu0
    %2380 = vmatprep.mubr.f32.mxu0 0.0
    %2381 = vmatmul.mubr.f32.gmra.mrb[0].mxu0 %v2188
    %v2382 = vpop.f32.mrb[0].mxu0
    %v2383 = vadd.f32 0.0, %v2382
    %v2384 = vpop.f32.mrb[0].mxu0
    %2385 = vmatprep.mubr.f32.mxu0 0.0
    %2386 = vmatmul.mubr.f32.gmra.mrb[0].mxu0 %v2189
    %v2387 = vpop.f32.mrb[0].mxu0
    %v2388 = vadd.f32 0.0, %v2387
    %v2389 = vpop.f32.mrb[0].mxu0
    %2390 = vmatprep.mubr.f32.mxu0 0.0
    %2391 = vmatmul.mubr.f32.gmra.mrb[0].mxu0 %v2190
    %v2392 = vpop.f32.mrb[0].mxu0
    %v2393 = vadd.f32 0.0, %v2392
    %v2394 = vpop.f32.mrb[0].mxu0
    %2395 = vmatprep.mubr.f32.mxu0 0.0
    %2396 = vmatmul.mubr.f32.gmra.mrb[0].mxu0 %v2191
    %v2397 = vpop.f32.mrb[0].mxu0
    %v2398 = vadd.f32 0.0, %v2397
    %v2399 = vpop.f32.mrb[0].mxu0
    %2400 = vmatprep.mubr.f32.mxu0 0.0
    %2401 = vmatmul.mubr.f32.gmra.mrb[0].mxu0 %v2192
    %v2402 = vpop.f32.mrb[0].mxu0
    %v2403 = vadd.f32 0.0, %v2402
    %v2404 = vpop.f32.mrb[0].mxu0
    %2405 = vmatprep.mubr.f32.mxu0 0.0
    %2406 = vmatmul.mubr.f32.gmra.mrb[0].mxu0 %v2193
    %v2407 = vpop.f32.mrb[0].mxu0
    %v2408 = vadd.f32 0.0, %v2407
    %v2409 = vpop.f32.mrb[0].mxu0
    %2410 = vmatprep.mubr.f32.mxu0 0.0
    %2411 = vmatmul.mubr.f32.gmra.mrb[0].mxu0 %v2194
    %v2412 = vpop.f32.mrb[0].mxu0
    %v2413 = vadd.f32 0.0, %v2412
    %v2414 = vpop.f32.mrb[0].mxu0
    %2415 = vmatprep.mubr.f32.mxu0 0.0
    %2416 = vmatmul.mubr.f32.gmra.mrb[0].mxu0 %v2195
    %v2417 = vpop.f32.mrb[0].mxu0
    %v2418 = vadd.f32 0.0, %v2417
    %v2419 = vpop.f32.mrb[0].mxu0
    %2420 = vmatprep.mubr.f32.mxu0 0.0
    %2421 = vmatmul.mubr.f32.gmra.mrb[0].mxu0 %v2196
    %v2422 = vpop.f32.mrb[0].mxu0
    %v2423 = vadd.f32 0.0, %v2422
    %v2424 = vpop.f32.mrb[0].mxu0
    %2425 = vmatprep.mubr.f32.mxu0 0.0
    %2426 = vmatmul.mubr.f32.gmra.mrb[0].mxu0 %v2197
    %v2427 = vpop.f32.mrb[0].mxu0
    %v2428 = vadd.f32 0.0, %v2427
    %v2429 = vpop.f32.mrb[0].mxu0
    %2430 = vmatprep.mubr.f32.mxu0 0.0
    %2431 = vmatmul.mubr.f32.gmra.mrb[0].mxu0 %v2198
    %v2432 = vpop.f32.mrb[0].mxu0
    %v2433 = vadd.f32 0.0, %v2432
    %v2434 = vpop.f32.mrb[0].mxu0
    %2435 = vmatprep.mubr.f32.mxu0 0.0
    %2436 = vmatmul.mubr.f32.gmra.mrb[0].mxu0 %v2199
    %v2437 = vpop.f32.mrb[0].mxu0
    %v2438 = vadd.f32 0.0, %v2437
    %v2439 = vpop.f32.mrb[0].mxu0
    %2440 = vmatprep.mubr.f32.mxu0 0.0
    %2441 = vmatmul.mubr.f32.gmra.mrb[0].mxu0 %v2200
    %v2442 = vpop.f32.mrb[0].mxu0
    %v2443 = vadd.f32 0.0, %v2442
    %v2444 = vpop.f32.mrb[0].mxu0
    %2445 = vmatprep.mubr.f32.mxu0 0.0
    %2446 = vmatmul.mubr.f32.gmra.mrb[0].mxu0 %v2201
    %v2447 = vpop.f32.mrb[0].mxu0
    %v2448 = vadd.f32 0.0, %v2447
    %v2449 = vpop.f32.mrb[0].mxu0
    %2450 = vmatprep.mubr.f32.mxu0 0.0
    %2451 = vmatmul.mubr.f32.gmra.mrb[0].mxu0 %v2202
    %v2452 = vpop.f32.mrb[0].mxu0
    %v2453 = vadd.f32 0.0, %v2452
    %v2454 = vpop.f32.mrb[0].mxu0
    %2455 = vmatprep.mubr.f32.mxu0 0.0
    %2456 = vmatmul.mubr.f32.gmra.mrb[0].mxu0 %v2203
    %v2457 = vpop.f32.mrb[0].mxu0
    %v2458 = vadd.f32 0.0, %v2457
    %v2459 = vpop.f32.mrb[0].mxu0
    %2460 = vmatprep.mubr.f32.mxu0 0.0
    %2461 = vmatmul.mubr.f32.gmra.mrb[0].mxu0 %v2204
    %v2462 = vpop.f32.mrb[0].mxu0
    %v2463 = vadd.f32 0.0, %v2462
    %v2464 = vpop.f32.mrb[0].mxu0
    %2465 = vmatprep.mubr.f32.mxu0 0.0
    %2466 = vmatmul.mubr.f32.gmra.mrb[0].mxu0 %v2205
    %v2467 = vpop.f32.mrb[0].mxu0
    %v2468 = vadd.f32 0.0, %v2467
    %v2469 = vpop.f32.mrb[0].mxu0
    %2470 = vmatprep.mubr.f32.mxu0 0.0
    %2471 = vmatmul.mubr.f32.gmra.mrb[0].mxu0 %v2206
    %v2472 = vpop.f32.mrb[0].mxu0
    %v2473 = vadd.f32 0.0, %v2472
    %v2474 = vpop.f32.mrb[0].mxu0
    %2475 = vmatprep.mubr.f32.mxu0 0.0
    %2476 = vmatmul.mubr.f32.gmra.mrb[0].mxu0 %v2207
    %v2477 = vpop.f32.mrb[0].mxu0
    %v2478 = vadd.f32 0.0, %v2477
    %v2479 = vpop.f32.mrb[0].mxu0
    %2480 = vmatprep.mubr.f32.mxu0 0.0
    %2481 = vmatmul.mubr.f32.gmra.mrb[0].mxu0 %v2208
    %v2482 = vpop.f32.mrb[0].mxu0
    %v2483 = vadd.f32 0.0, %v2482
    %v2484 = vpop.f32.mrb[0].mxu0
    %2485 = vmatprep.mubr.f32.mxu0 0.0
    %2486 = vmatmul.mubr.f32.gmra.mrb[0].mxu0 %v2209
    %v2487 = vpop.f32.mrb[0].mxu0
    %v2488 = vadd.f32 0.0, %v2487
    %v2489 = vpop.f32.mrb[0].mxu0
    %2490 = vmatprep.mubr.f32.mxu0 0.0
    %2491 = vmatmul.mubr.f32.gmra.mrb[0].mxu0 %v2210
    %v2492 = vpop.f32.mrb[0].mxu0
    %v2493 = vadd.f32 0.0, %v2492
    %v2494 = vpop.f32.mrb[0].mxu0
    %2495 = vmatprep.mubr.f32.mxu0 0.0
    %2496 = vmatmul.mubr.f32.gmra.mrb[0].mxu0 %v2211
    %v2497 = vpop.f32.mrb[0].mxu0
    %v2498 = vadd.f32 0.0, %v2497
    %v2499 = vpop.f32.mrb[0].mxu0
    %2500 = vmatprep.mubr.f32.mxu0 0.0
    %2501 = vmatmul.mubr.f32.gmra.mrb[0].mxu0 %v2212
    %v2502 = vpop.f32.mrb[0].mxu0
    %v2503 = vadd.f32 0.0, %v2502
    %v2504 = vpop.f32.mrb[0].mxu0
    %2505 = vmatprep.mubr.f32.mxu0 0.0
    %2506 = vmatmul.mubr.f32.gmra.mrb[0].mxu0 %v2213
    %v2507 = vpop.f32.mrb[0].mxu0
    %v2508 = vadd.f32 0.0, %v2507
    %v2509 = vpop.f32.mrb[0].mxu0
    %2510 = vmatprep.mubr.f32.mxu0 0.0
    %2511 = vmatmul.mubr.f32.gmra.mrb[0].mxu0 %v2214
    %v2512 = vpop.f32.mrb[0].mxu0
    %v2513 = vadd.f32 0.0, %v2512
    %v2514 = vpop.f32.mrb[0].mxu0
    %2515 = vmatprep.mubr.f32.mxu0 0.0
    %2516 = vmatmul.mubr.f32.gmra.mrb[0].mxu0 %v2215
    %v2517 = vpop.f32.mrb[0].mxu0
    %v2518 = vadd.f32 0.0, %v2517
    %v2519 = vpop.f32.mrb[0].mxu0
    %2520 = vmatprep.mubr.f32.mxu0 0.0
    %2521 = vmatmul.mubr.f32.gmra.mrb[0].mxu0 %v2216
    %v2522 = vpop.f32.mrb[0].mxu0
    %v2523 = vadd.f32 0.0, %v2522
    %v2524 = vpop.f32.mrb[0].mxu0
    %2525 = vmatprep.mubr.f32.mxu0 0.0
    %2526 = vmatmul.mubr.f32.gmra.mrb[0].mxu0 %v2217
    %v2527 = vpop.f32.mrb[0].mxu0
    %v2528 = vadd.f32 0.0, %v2527
    %v2529 = vpop.f32.mrb[0].mxu0
    %2530 = vmatprep.mubr.f32.mxu0 0.0
    %2531 = vmatmul.mubr.f32.gmra.mrb[0].mxu0 %v2218
    %v2532 = vpop.f32.mrb[0].mxu0
    %v2533 = vadd.f32 0.0, %v2532
    %v2534 = vpop.f32.mrb[0].mxu0
    %2535 = vmatprep.mubr.f32.mxu0 0.0
    %2536 = vmatmul.mubr.f32.gmra.mrb[0].mxu0 %v2219
    %v2537 = vpop.f32.mrb[0].mxu0
    %v2538 = vadd.f32 0.0, %v2537
    %v2539 = vpop.f32.mrb[0].mxu0
    %2540 = vmatprep.mubr.f32.mxu0 0.0
    %2541 = vmatmul.mubr.f32.gmra.mrb[0].mxu0 %v2220
    %v2542 = vpop.f32.mrb[0].mxu0
    %v2543 = vadd.f32 0.0, %v2542
    %v2544 = vpop.f32.mrb[0].mxu0
    %2545 = vmatprep.mubr.f32.mxu0 0.0
    %2546 = vmatmul.mubr.f32.gmra.mrb[0].mxu0 %v2221
    %v2547 = vpop.f32.mrb[0].mxu0
    %v2548 = vadd.f32 0.0, %v2547
    %v2549 = vpop.f32.mrb[0].mxu0
    %2550 = vmatprep.mubr.f32.mxu0 0.0
    %2551 = vmatmul.mubr.f32.gmra.mrb[0].mxu0 %v2222
    %v2552 = vpop.f32.mrb[0].mxu0
    %v2553 = vadd.f32 0.0, %v2552
    %v2554 = vpop.f32.mrb[0].mxu0
    %2555 = vmatprep.mubr.f32.mxu0 0.0
    %2556 = vmatmul.mubr.f32.gmra.mrb[0].mxu0 %v2223
    %v2557 = vpop.f32.mrb[0].mxu0
    %v2558 = vadd.f32 0.0, %v2557
    %v2559 = vpop.f32.mrb[0].mxu0
    %2560 = vmatprep.mubr.f32.mxu0 0.0
    %2561 = vmatmul.mubr.f32.gmra.mrb[0].mxu0 %v2224
    %v2562 = vpop.f32.mrb[0].mxu0
    %v2563 = vadd.f32 0.0, %v2562
    %v2564 = vpop.f32.mrb[0].mxu0
    %2565 = vmatprep.mubr.f32.mxu0 0.0
    %2566 = vmatmul.mubr.f32.gmra.mrb[0].mxu0 %v2225
    %v2567 = vpop.f32.mrb[0].mxu0
    %v2568 = vadd.f32 0.0, %v2567
    %v2569 = vpop.f32.mrb[0].mxu0
    %2570 = vmatprep.mubr.f32.mxu0 0.0
    %2571 = vmatmul.mubr.f32.gmra.mrb[0].mxu0 %v2226
    %v2572 = vpop.f32.mrb[0].mxu0
    %v2573 = vadd.f32 0.0, %v2572
    %v2574 = vpop.f32.mrb[0].mxu0
    %2575 = vmatprep.mubr.f32.mxu0 0.0
    %2576 = vmatmul.mubr.f32.gmra.mrb[0].mxu0 %v2227
    %v2577 = vpop.f32.mrb[0].mxu0
    %v2578 = vadd.f32 0.0, %v2577
    %v2579 = vpop.f32.mrb[0].mxu0
    %2580 = vmatprep.mubr.f32.mxu0 0.0
    %2581 = vmatmul.mubr.f32.gmra.mrb[0].mxu0 %v2228
    %v2582 = vpop.f32.mrb[0].mxu0
    %v2583 = vadd.f32 0.0, %v2582
    %v2584 = vpop.f32.mrb[0].mxu0
    %2585 = vmatprep.mubr.f32.mxu0 0.0
    %2586 = vmatmul.mubr.f32.gmra.mrb[0].mxu0 %v2229
    %v2587 = vpop.f32.mrb[0].mxu0
    %v2588 = vadd.f32 0.0, %v2587
    %v2589 = vpop.f32.mrb[0].mxu0
    %2590 = vmatprep.mubr.f32.mxu0 0.0
    %2591 = vmatmul.mubr.f32.gmra.mrb[0].mxu0 %v2230
    %v2592 = vpop.f32.mrb[0].mxu0
    %v2593 = vadd.f32 0.0, %v2592
    %v2594 = vpop.f32.mrb[0].mxu0
    %2595 = vmatprep.mubr.f32.mxu0 0.0
    %2596 = vmatmul.mubr.f32.gmra.mrb[0].mxu0 %v2231
    %v2597 = vpop.f32.mrb[0].mxu0
    %v2598 = vadd.f32 0.0, %v2597
    %v2599 = vpop.f32.mrb[0].mxu0
    %2600 = vmatprep.mubr.f32.mxu0 0.0
    %2601 = vmatmul.mubr.f32.gmra.mrb[0].mxu0 %v2232
    %v2602 = vpop.f32.mrb[0].mxu0
    %v2603 = vadd.f32 0.0, %v2602
    %v2604 = vpop.f32.mrb[0].mxu0
    %2605 = vmatprep.mubr.f32.mxu0 0.0
    %2606 = vmatmul.mubr.f32.gmra.mrb[0].mxu0 %v2233
    %v2607 = vpop.f32.mrb[0].mxu0
    %v2608 = vadd.f32 0.0, %v2607
    %v2609 = vpop.f32.mrb[0].mxu0
    %2610 = vmatprep.mubr.f32.mxu0 0.0
    %2611 = vmatmul.mubr.f32.gmra.mrb[0].mxu0 %v2234
    %v2612 = vpop.f32.mrb[0].mxu0
    %v2613 = vadd.f32 0.0, %v2612
    %v2614 = vpop.f32.mrb[0].mxu0
    %2615 = vmatprep.mubr.f32.mxu0 0.0
    %2616 = vmatmul.mubr.f32.gmra.mrb[0].mxu0 %v2235
    %v2617 = vpop.f32.mrb[0].mxu0
    %v2618 = vadd.f32 0.0, %v2617
    %v2619 = vpop.f32.mrb[0].mxu0
    %2620 = vmatprep.mubr.f32.mxu0 0.0
    %2621 = vmatmul.mubr.f32.gmra.mrb[0].mxu0 %v2236
    %v2622 = vpop.f32.mrb[0].mxu0
    %v2623 = vadd.f32 0.0, %v2622
    %v2624 = vpop.f32.mrb[0].mxu0
    %2625 = vmatprep.mubr.f32.mxu0 0.0
    %2626 = vmatmul.mubr.f32.gmra.mrb[0].mxu0 %v2237
    %v2627 = vpop.f32.mrb[0].mxu0
    %v2628 = vadd.f32 0.0, %v2627
    %v2629 = vpop.f32.mrb[0].mxu0
    %2630 = vmatprep.mubr.f32.mxu0 0.0
    %2631 = vmatmul.mubr.f32.gmra.mrb[0].mxu0 %v2238
    %v2632 = vpop.f32.mrb[0].mxu0
    %v2633 = vadd.f32 0.0, %v2632
    %v2634 = vpop.f32.mrb[0].mxu0
    %2635 = vmatprep.mubr.f32.mxu0 0.0
    %2636 = vmatmul.mubr.f32.gmra.mrb[0].mxu0 %v2239
    %v2637 = vpop.f32.mrb[0].mxu0
    %v2638 = vadd.f32 0.0, %v2637
    %v2639 = vpop.f32.mrb[0].mxu0
    %2640 = vmatprep.mubr.f32.mxu0 0.0
    %2641 = vmatmul.mubr.f32.gmra.mrb[0].mxu0 %v2240
    %v2642 = vpop.f32.mrb[0].mxu0
    %v2643 = vadd.f32 0.0, %v2642
    %v2644 = vpop.f32.mrb[0].mxu0
    %2645 = vmatprep.mubr.f32.mxu0 0.0
    %2646 = vmatmul.mubr.f32.gmra.mrb[0].mxu0 %v2241
    %v2647 = vpop.f32.mrb[0].mxu0
    %v2648 = vadd.f32 0.0, %v2647
    %v2649 = vpop.f32.mrb[0].mxu0
    %2650 = vmatprep.mubr.f32.mxu0 0.0
    %2651 = vmatmul.mubr.f32.gmra.mrb[0].mxu0 %v2242
    %v2652 = vpop.f32.mrb[0].mxu0
    %v2653 = vadd.f32 0.0, %v2652
    %v2654 = vpop.f32.mrb[0].mxu0
    %2655 = vmatprep.mubr.f32.mxu0 0.0
    %2656 = vmatmul.mubr.f32.gmra.mrb[0].mxu0 %v2243
    %v2657 = vpop.f32.mrb[0].mxu0
    %v2658 = vadd.f32 0.0, %v2657
    %v2659 = vpop.f32.mrb[0].mxu0
    %2660 = vmatprep.mubr.f32.mxu0 0.0
    %2661 = vmatmul.mubr.f32.gmra.mrb[0].mxu0 %v2244
    %v2662 = vpop.f32.mrb[0].mxu0
    %v2663 = vadd.f32 0.0, %v2662
    %v2664 = vpop.f32.mrb[0].mxu0
    %2665 = vmatprep.mubr.f32.mxu0 0.0
    %2666 = vmatmul.mubr.f32.gmra.mrb[0].mxu0 %v2245
    %v2667 = vpop.f32.mrb[0].mxu0
    %v2668 = vadd.f32 0.0, %v2667
    %v2669 = vpop.f32.mrb[0].mxu0
    %2670 = vmatprep.mubr.f32.mxu0 0.0
    %2671 = vmatmul.mubr.f32.gmra.mrb[0].mxu0 %v2246
    %v2672 = vpop.f32.mrb[0].mxu0
    %v2673 = vadd.f32 0.0, %v2672
    %v2674 = vpop.f32.mrb[0].mxu0
    %2675 = vmatprep.mubr.f32.mxu0 0.0
    %2676 = vmatmul.mubr.f32.gmra.mrb[0].mxu0 %v2247
    %v2677 = vpop.f32.mrb[0].mxu0
    %v2678 = vadd.f32 0.0, %v2677
    %v2679 = vpop.f32.mrb[0].mxu0
    %2680 = vmatprep.mubr.f32.mxu0 0.0
    %2681 = vmatmul.mubr.f32.gmra.mrb[0].mxu0 %v2248
    %v2682 = vpop.f32.mrb[0].mxu0
    %v2683 = vadd.f32 0.0, %v2682
    %v2684 = vpop.f32.mrb[0].mxu0
    %2685 = vmatprep.mubr.f32.mxu0 0.0
    %2686 = vmatmul.mubr.f32.gmra.mrb[0].mxu0 %v2249
    %v2687 = vpop.f32.mrb[0].mxu0
    %v2688 = vadd.f32 0.0, %v2687
    %v2689 = vpop.f32.mrb[0].mxu0
    %2690 = vmatprep.mubr.f32.mxu0 0.0
    %2691 = vmatmul.mubr.f32.gmra.mrb[0].mxu0 %v2250
    %v2692 = vpop.f32.mrb[0].mxu0
    %v2693 = vadd.f32 0.0, %v2692
    %v2694 = vpop.f32.mrb[0].mxu0
    %2695 = vmatprep.mubr.f32.mxu0 0.0
    %2696 = vmatmul.mubr.f32.gmra.mrb[0].mxu0 %v2251
    %v2697 = vpop.f32.mrb[0].mxu0
    %v2698 = vadd.f32 0.0, %v2697
    %v2699 = vpop.f32.mrb[0].mxu0
    %2700 = vmatprep.mubr.f32.mxu0 0.0
    %2701 = vmatmul.mubr.f32.gmra.mrb[0].mxu0 %v2252
    %v2702 = vpop.f32.mrb[0].mxu0
    %v2703 = vadd.f32 0.0, %v2702
    %v2704 = vpop.f32.mrb[0].mxu0
    %2705 = vmatprep.mubr.f32.mxu0 0.0
    %2706 = vmatmul.mubr.f32.gmra.mrb[0].mxu0 %v2253
    %v2707 = vpop.f32.mrb[0].mxu0
    %v2708 = vadd.f32 0.0, %v2707
    %v2709 = vpop.f32.mrb[0].mxu0
    %2710 = vmatprep.mubr.f32.mxu0 0.0
    %2711 = vmatmul.mubr.f32.gmra.mrb[0].mxu0 %v2254
    %v2712 = vpop.f32.mrb[0].mxu0
    %v2713 = vadd.f32 0.0, %v2712
    %v2714 = vpop.f32.mrb[0].mxu0
    %2715 = vmatprep.mubr.f32.mxu0 0.0
    %2716 = vmatmul.mubr.f32.gmra.mrb[0].mxu0 %v2255
    %v2717 = vpop.f32.mrb[0].mxu0
    %v2718 = vadd.f32 0.0, %v2717
    %v2719 = vpop.f32.mrb[0].mxu0
    %2720 = vmatprep.mubr.f32.mxu0 0.0
    %2721 = vmatmul.mubr.f32.gmra.mrb[0].mxu0 %v2256
    %v2722 = vpop.f32.mrb[0].mxu0
    %v2723 = vadd.f32 0.0, %v2722
    %v2724 = vpop.f32.mrb[0].mxu0
    %2725 = vmatprep.mubr.f32.mxu0 0.0
    %2726 = vmatmul.mubr.f32.gmra.mrb[0].mxu0 %v2257
    %v2727 = vpop.f32.mrb[0].mxu0
    %v2728 = vadd.f32 0.0, %v2727
    %v2729 = vpop.f32.mrb[0].mxu0
    %2730 = vmatprep.mubr.f32.mxu0 0.0
    %2731 = vmatmul.mubr.f32.gmra.mrb[0].mxu0 %v2258
    %v2732 = vpop.f32.mrb[0].mxu0
    %v2733 = vadd.f32 0.0, %v2732
    %v2734 = vpop.f32.mrb[0].mxu0
    %2735 = vmatprep.mubr.f32.mxu0 0.0
    %2736 = vmatmul.mubr.f32.gmra.mrb[0].mxu0 %v2259
    %v2737 = vpop.f32.mrb[0].mxu0
    %v2738 = vadd.f32 0.0, %v2737
    %v2739 = vpop.f32.mrb[0].mxu0
    %2740 = vmatprep.mubr.f32.mxu0 0.0
    %2741 = vmatmul.mubr.f32.gmra.mrb[0].mxu0 %v2260
    %v2742 = vpop.f32.mrb[0].mxu0
    %v2743 = vadd.f32 0.0, %v2742
    %v2744 = vpop.f32.mrb[0].mxu0
    %2745 = vmatprep.mubr.f32.mxu0 0.0
    %2746 = vmatmul.mubr.f32.gmra.mrb[0].mxu0 %v2261
    %v2747 = vpop.f32.mrb[0].mxu0
    %v2748 = vadd.f32 0.0, %v2747
    %v2749 = vpop.f32.mrb[0].mxu0
    %2750 = vmatprep.mubr.f32.mxu0 0.0
    %2751 = vmatmul.mubr.f32.gmra.mrb[0].mxu0 %v2262
    %v2752 = vpop.f32.mrb[0].mxu0
    %v2753 = vadd.f32 0.0, %v2752
    %v2754 = vpop.f32.mrb[0].mxu0
    %2755 = vmatprep.mubr.f32.mxu0 0.0
    %2756 = vmatmul.mubr.f32.gmra.mrb[0].mxu0 %v2263
    %v2757 = vpop.f32.mrb[0].mxu0
    %v2758 = vadd.f32 0.0, %v2757
    %v2759 = vpop.f32.mrb[0].mxu0
    %2760 = vmatprep.mubr.f32.mxu0 0.0
    %2761 = vmatmul.mubr.f32.gmra.mrb[0].mxu0 %v2264
    %v2762 = vpop.f32.mrb[0].mxu0
    %v2763 = vadd.f32 0.0, %v2762
    %v2764 = vpop.f32.mrb[0].mxu0
    %2765 = vmatprep.mubr.f32.mxu0 0.0
    %2766 = vmatmul.mubr.f32.gmra.mrb[0].mxu0 %v2265
    %v2767 = vpop.f32.mrb[0].mxu0
    %v2768 = vadd.f32 0.0, %v2767
    %v2769 = vpop.f32.mrb[0].mxu0
    %2770 = vmatprep.mubr.f32.mxu0 0.0
    %2771 = vmatmul.mubr.f32.gmra.mrb[0].mxu0 %v2266
    %v2772 = vpop.f32.mrb[0].mxu0
    %v2773 = vadd.f32 0.0, %v2772
    %v2774 = vpop.f32.mrb[0].mxu0
    %2775 = vmatprep.mubr.f32.mxu0 0.0
    %2776 = vmatmul.mubr.f32.gmra.mrb[0].mxu0 %v2267
    %v2777 = vpop.f32.mrb[0].mxu0
    %v2778 = vadd.f32 0.0, %v2777
    %v2779 = vpop.f32.mrb[0].mxu0
    %2780 = vmatprep.mubr.f32.mxu0 0.0
    %2781 = vmatmul.mubr.f32.gmra.mrb[0].mxu0 %v2268
    %v2782 = vpop.f32.mrb[0].mxu0
    %v2783 = vadd.f32 0.0, %v2782
    %v2784 = vpop.f32.mrb[0].mxu0
    %2785 = vmatprep.mubr.f32.mxu0 0.0
    %2786 = vmatmul.mubr.f32.gmra.mrb[0].mxu0 %v2269
    %v2787 = vpop.f32.mrb[0].mxu0
    %v2788 = vadd.f32 0.0, %v2787
    %v2789 = vpop.f32.mrb[0].mxu0
    %2790 = vmatprep.mubr.f32.mxu0 0.0
    %2791 = vmatmul.mubr.f32.gmra.mrb[0].mxu0 %v2270
    %v2792 = vpop.f32.mrb[0].mxu0
    %v2793 = vadd.f32 0.0, %v2792
    %v2794 = vpop.f32.mrb[0].mxu0
    %2795 = vmatprep.mubr.f32.mxu0 0.0
    %2796 = vmatmul.mubr.f32.gmra.mrb[0].mxu0 %v2271
    %v2797 = vpop.f32.mrb[0].mxu0
    %v2798 = vadd.f32 0.0, %v2797
    %v2799 = vpop.f32.mrb[0].mxu0
    %2800 = vmatprep.mubr.f32.mxu0 0.0
    %2801 = vmatmul.mubr.f32.gmra.mrb[0].mxu0 %v2272
    %v2802 = vpop.f32.mrb[0].mxu0
    %v2803 = vadd.f32 0.0, %v2802
    %v2804 = vpop.f32.mrb[0].mxu0
    %2805 = vmatprep.mubr.f32.mxu0 0.0
    %2806 = vmatmul.mubr.f32.gmra.mrb[0].mxu0 %v2273
    %v2807 = vpop.f32.mrb[0].mxu0
    %v2808 = vadd.f32 0.0, %v2807
    %v2809 = vpop.f32.mrb[0].mxu0
    %2810 = vmatprep.mubr.f32.mxu0 0.0
    %2811 = vmatmul.mubr.f32.gmra.mrb[0].mxu0 %v2274
    %v2812 = vpop.f32.mrb[0].mxu0
    %v2813 = vadd.f32 0.0, %v2812
    %v2814 = vpop.f32.mrb[0].mxu0
    %2815 = vmatprep.mubr.f32.mxu0 0.0
    %2816 = vmatmul.mubr.f32.gmra.mrb[0].mxu0 %v2275
    %v2817 = vpop.f32.mrb[0].mxu0
    %v2818 = vadd.f32 0.0, %v2817
    %v2819 = vpop.f32.mrb[0].mxu0
    %2820 = vdwg.mxu0
    %2821 = vmatprep.subr.mxu0 0.0
    %2822 = vmatpush1.msra.mxu0 %v2343
    %2823 = vmatprep.subr.mxu0 0.0
    %2824 = vmatpush1.msra.mxu0 %v2348
    %2825 = vmatprep.subr.mxu0 0.0
    %2826 = vmatpush1.msra.mxu0 %v2353
    %2827 = vmatprep.subr.mxu0 0.0
    %2828 = vmatpush1.msra.mxu0 %v2358
    %2829 = vmatprep.subr.mxu0 0.0
    %2830 = vmatpush1.msra.mxu0 %v2363
    %2831 = vmatprep.subr.mxu0 0.0
    %2832 = vmatpush1.msra.mxu0 %v2368
    %2833 = vmatprep.subr.mxu0 0.0
    %2834 = vmatpush1.msra.mxu0 %v2373
    %2835 = vmatprep.subr.mxu0 0.0
    %2836 = vmatpush1.msra.mxu0 %v2378
    %2837 = vmatprep.subr.mxu0 0.0
    %2838 = vmatpush1.msra.mxu0 %v2383
    %2839 = vmatprep.subr.mxu0 0.0
    %2840 = vmatpush1.msra.mxu0 %v2388
    %2841 = vmatprep.subr.mxu0 0.0
    %2842 = vmatpush1.msra.mxu0 %v2393
    %2843 = vmatprep.subr.mxu0 0.0
    %2844 = vmatpush1.msra.mxu0 %v2398
    %2845 = vmatprep.subr.mxu0 0.0
    %2846 = vmatpush1.msra.mxu0 %v2403
    %2847 = vmatprep.subr.mxu0 0.0
    %2848 = vmatpush1.msra.mxu0 %v2408
    %2849 = vmatprep.subr.mxu0 0.0
    %2850 = vmatpush1.msra.mxu0 %v2413
    %2851 = vmatprep.subr.mxu0 0.0
    %2852 = vmatpush1.msra.mxu0 %v2418
    %2853 = vmatprep.subr.mxu0 0.0
    %2854 = vmatpush1.msra.mxu0 0.0
    %2855 = vmatprep.subr.mxu0 0.0
    %2856 = vmatpush1.msra.mxu0 0.0
    %2857 = vmatprep.subr.mxu0 0.0
    %2858 = vmatpush1.msra.mxu0 0.0
    %2859 = vmatprep.subr.mxu0 0.0
    %2860 = vmatpush1.msra.mxu0 0.0
    %2861 = vmatprep.subr.mxu0 0.0
    %2862 = vmatpush1.msra.mxu0 0.0
    %2863 = vmatprep.subr.mxu0 0.0
    %2864 = vmatpush1.msra.mxu0 0.0
    %2865 = vmatprep.subr.mxu0 0.0
    %2866 = vmatpush1.msra.mxu0 0.0
    %2867 = vmatprep.subr.mxu0 0.0
    %2868 = vmatpush1.msra.mxu0 0.0
    %2869 = vmatprep.subr.mxu0 0.0
    %2870 = vmatpush1.msra.mxu0 0.0
    %2871 = vmatprep.subr.mxu0 0.0
    %2872 = vmatpush1.msra.mxu0 0.0
    %2873 = vmatprep.subr.mxu0 0.0
    %2874 = vmatpush1.msra.mxu0 0.0
    %2875 = vmatprep.subr.mxu0 0.0
    %2876 = vmatpush1.msra.mxu0 0.0
    %2877 = vmatprep.subr.mxu0 0.0
    %2878 = vmatpush1.msra.mxu0 0.0
    %2879 = vmatprep.subr.mxu0 0.0
    %2880 = vmatpush1.msra.mxu0 0.0
    %2881 = vmatprep.subr.mxu0 0.0
    %2882 = vmatpush1.msra.mxu0 0.0
    %2883 = vmatprep.subr.mxu0 0.0
    %2884 = vmatpush1.msra.mxu0 0.0
    %2885 = vmatprep.mubr.f32.mxu0 0.0
    %2886 = vmatmul.mubr.f32.gmra.mrb[0].mxu0 %v56
    %v2887 = vpop.f32.mrb[0].mxu0
    %v2888 = vadd.f32 0.0, %v2887
    %v2889 = vpop.f32.mrb[0].mxu0
    %2890 = vmatprep.mubr.f32.mxu0 0.0
    %2891 = vmatmul.mubr.f32.gmra.mrb[0].mxu0 %v57
    %v2892 = vpop.f32.mrb[0].mxu0
    %v2893 = vadd.f32 0.0, %v2892
    %v2894 = vpop.f32.mrb[0].mxu0
    %2895 = vmatprep.mubr.f32.mxu0 0.0
    %2896 = vmatmul.mubr.f32.gmra.mrb[0].mxu0 %v58
    %v2897 = vpop.f32.mrb[0].mxu0
    %v2898 = vadd.f32 0.0, %v2897
    %v2899 = vpop.f32.mrb[0].mxu0
    %2900 = vmatprep.mubr.f32.mxu0 0.0
    %2901 = vmatmul.mubr.f32.gmra.mrb[0].mxu0 %v59
    %v2902 = vpop.f32.mrb[0].mxu0
    %v2903 = vadd.f32 0.0, %v2902
    %v2904 = vpop.f32.mrb[0].mxu0
    %2905 = vmatprep.mubr.f32.mxu0 0.0
    %2906 = vmatmul.mubr.f32.gmra.mrb[0].mxu0 %v60
    %v2907 = vpop.f32.mrb[0].mxu0
    %v2908 = vadd.f32 0.0, %v2907
    %v2909 = vpop.f32.mrb[0].mxu0
    %2910 = vmatprep.mubr.f32.mxu0 0.0
    %2911 = vmatmul.mubr.f32.gmra.mrb[0].mxu0 %v61
    %v2912 = vpop.f32.mrb[0].mxu0
    %v2913 = vadd.f32 0.0, %v2912
    %v2914 = vpop.f32.mrb[0].mxu0
    %2915 = vmatprep.mubr.f32.mxu0 0.0
    %2916 = vmatmul.mubr.f32.gmra.mrb[0].mxu0 %v62
    %v2917 = vpop.f32.mrb[0].mxu0
    %v2918 = vadd.f32 0.0, %v2917
    %v2919 = vpop.f32.mrb[0].mxu0
    %2920 = vmatprep.mubr.f32.mxu0 0.0
    %2921 = vmatmul.mubr.f32.gmra.mrb[0].mxu0 %v63
    %v2922 = vpop.f32.mrb[0].mxu0
    %v2923 = vadd.f32 0.0, %v2922
    %v2924 = vpop.f32.mrb[0].mxu0
    %2925 = vmatprep.mubr.f32.mxu0 0.0
    %2926 = vmatmul.mubr.f32.gmra.mrb[0].mxu0 %v64
    %v2927 = vpop.f32.mrb[0].mxu0
    %v2928 = vadd.f32 0.0, %v2927
    %v2929 = vpop.f32.mrb[0].mxu0
    %2930 = vmatprep.mubr.f32.mxu0 0.0
    %2931 = vmatmul.mubr.f32.gmra.mrb[0].mxu0 %v65
    %v2932 = vpop.f32.mrb[0].mxu0
    %v2933 = vadd.f32 0.0, %v2932
    %v2934 = vpop.f32.mrb[0].mxu0
    %2935 = vmatprep.mubr.f32.mxu0 0.0
    %2936 = vmatmul.mubr.f32.gmra.mrb[0].mxu0 %v66
    %v2937 = vpop.f32.mrb[0].mxu0
    %v2938 = vadd.f32 0.0, %v2937
    %v2939 = vpop.f32.mrb[0].mxu0
    %2940 = vmatprep.mubr.f32.mxu0 0.0
    %2941 = vmatmul.mubr.f32.gmra.mrb[0].mxu0 %v67
    %v2942 = vpop.f32.mrb[0].mxu0
    %v2943 = vadd.f32 0.0, %v2942
    %v2944 = vpop.f32.mrb[0].mxu0
    %2945 = vmatprep.mubr.f32.mxu0 0.0
    %2946 = vmatmul.mubr.f32.gmra.mrb[0].mxu0 %v68
    %v2947 = vpop.f32.mrb[0].mxu0
    %v2948 = vadd.f32 0.0, %v2947
    %v2949 = vpop.f32.mrb[0].mxu0
    %2950 = vmatprep.mubr.f32.mxu0 0.0
    %2951 = vmatmul.mubr.f32.gmra.mrb[0].mxu0 %v69
    %v2952 = vpop.f32.mrb[0].mxu0
    %v2953 = vadd.f32 0.0, %v2952
    %v2954 = vpop.f32.mrb[0].mxu0
    %2955 = vmatprep.mubr.f32.mxu0 0.0
    %2956 = vmatmul.mubr.f32.gmra.mrb[0].mxu0 %v70
    %v2957 = vpop.f32.mrb[0].mxu0
    %v2958 = vadd.f32 0.0, %v2957
    %v2959 = vpop.f32.mrb[0].mxu0
    %2960 = vmatprep.mubr.f32.mxu0 0.0
    %2961 = vmatmul.mubr.f32.gmra.mrb[0].mxu0 %v71
    %v2962 = vpop.f32.mrb[0].mxu0
    %v2963 = vadd.f32 0.0, %v2962
    %v2964 = vpop.f32.mrb[0].mxu0
    %2965 = vdwg.mxu0
    %2966 = vst [vmem:[#allocation2] sm:$0xff] %v2888
    %2967 = vst [vmem:[#allocation2 + $0x8] sm:$0xff] %v2893
    %2968 = vst [vmem:[#allocation2 + $0x10] sm:$0xff] %v2898
    %2969 = vst [vmem:[#allocation2 + $0x18] sm:$0xff] %v2903
    %2970 = vst [vmem:[#allocation2 + $0x20] sm:$0xff] %v2908
    %2971 = vst [vmem:[#allocation2 + $0x28] sm:$0xff] %v2913
    %2972 = vst [vmem:[#allocation2 + $0x30] sm:$0xff] %v2918
    %2973 = vst [vmem:[#allocation2 + $0x38] sm:$0xff] %v2923
    %2974 = vst [vmem:[#allocation2 + $0x40] sm:$0xff] %v2928
    %2975 = vst [vmem:[#allocation2 + $0x48] sm:$0xff] %v2933
    %2976 = vst [vmem:[#allocation2 + $0x50] sm:$0xff] %v2938
    %2977 = vst [vmem:[#allocation2 + $0x58] sm:$0xff] %v2943
    %2978 = vst [vmem:[#allocation2 + $0x60] sm:$0xff] %v2948
    %2979 = vst [vmem:[#allocation2 + $0x68] sm:$0xff] %v2953
    %2980 = vst [vmem:[#allocation2 + $0x70] sm:$0xff] %v2958
    %2981 = vst [vmem:[#allocation2 + $0x78] sm:$0xff] %v2963
    %2982 = vmatprep.subr.mxu0 0.0
    %2983 = vmatpush1.msra.mxu0 %v2423
    %2984 = vmatprep.subr.mxu0 0.0
    %2985 = vmatpush1.msra.mxu0 %v2428
    %2986 = vmatprep.subr.mxu0 0.0
    %2987 = vmatpush1.msra.mxu0 %v2433
    %2988 = vmatprep.subr.mxu0 0.0
    %2989 = vmatpush1.msra.mxu0 %v2438
    %2990 = vmatprep.subr.mxu0 0.0
    %2991 = vmatpush1.msra.mxu0 %v2443
    %2992 = vmatprep.subr.mxu0 0.0
    %2993 = vmatpush1.msra.mxu0 %v2448
    %2994 = vmatprep.subr.mxu0 0.0
    %2995 = vmatpush1.msra.mxu0 %v2453
    %2996 = vmatprep.subr.mxu0 0.0
    %2997 = vmatpush1.msra.mxu0 %v2458
    %2998 = vmatprep.subr.mxu0 0.0
    %2999 = vmatpush1.msra.mxu0 %v2463
    %3000 = vmatprep.subr.mxu0 0.0
    %3001 = vmatpush1.msra.mxu0 %v2468
    %3002 = vmatprep.subr.mxu0 0.0
    %3003 = vmatpush1.msra.mxu0 %v2473
    %3004 = vmatprep.subr.mxu0 0.0
    %3005 = vmatpush1.msra.mxu0 %v2478
    %3006 = vmatprep.subr.mxu0 0.0
    %3007 = vmatpush1.msra.mxu0 %v2483
    %3008 = vmatprep.subr.mxu0 0.0
    %3009 = vmatpush1.msra.mxu0 %v2488
    %3010 = vmatprep.subr.mxu0 0.0
    %3011 = vmatpush1.msra.mxu0 %v2493
    %3012 = vmatprep.subr.mxu0 0.0
    %3013 = vmatpush1.msra.mxu0 %v2498
    %3014 = vmatprep.subr.mxu0 0.0
    %3015 = vmatpush1.msra.mxu0 0.0
    %3016 = vmatprep.subr.mxu0 0.0
    %3017 = vmatpush1.msra.mxu0 0.0
    %3018 = vmatprep.subr.mxu0 0.0
    %3019 = vmatpush1.msra.mxu0 0.0
    %3020 = vmatprep.subr.mxu0 0.0
    %3021 = vmatpush1.msra.mxu0 0.0
    %3022 = vmatprep.subr.mxu0 0.0
    %3023 = vmatpush1.msra.mxu0 0.0
    %3024 = vmatprep.subr.mxu0 0.0
    %3025 = vmatpush1.msra.mxu0 0.0
    %3026 = vmatprep.subr.mxu0 0.0
    %3027 = vmatpush1.msra.mxu0 0.0
    %3028 = vmatprep.subr.mxu0 0.0
    %3029 = vmatpush1.msra.mxu0 0.0
    %3030 = vmatprep.subr.mxu0 0.0
    %3031 = vmatpush1.msra.mxu0 0.0
    %3032 = vmatprep.subr.mxu0 0.0
    %3033 = vmatpush1.msra.mxu0 0.0
    %3034 = vmatprep.subr.mxu0 0.0
    %3035 = vmatpush1.msra.mxu0 0.0
    %3036 = vmatprep.subr.mxu0 0.0
    %3037 = vmatpush1.msra.mxu0 0.0
    %3038 = vmatprep.subr.mxu0 0.0
    %3039 = vmatpush1.msra.mxu0 0.0
    %3040 = vmatprep.subr.mxu0 0.0
    %3041 = vmatpush1.msra.mxu0 0.0
    %3042 = vmatprep.subr.mxu0 0.0
    %3043 = vmatpush1.msra.mxu0 0.0
    %3044 = vmatprep.subr.mxu0 0.0
    %3045 = vmatpush1.msra.mxu0 0.0
    %3046 = vmatprep.mubr.f32.mxu0 0.0
    %3047 = vmatmul.mubr.f32.gmra.mrb[0].mxu0 %v56
    %v3048 = vpop.f32.mrb[0].mxu0
    %v3049 = vadd.f32 0.0, %v3048
    %v3050 = vpop.f32.mrb[0].mxu0
    %3051 = vmatprep.mubr.f32.mxu0 0.0
    %3052 = vmatmul.mubr.f32.gmra.mrb[0].mxu0 %v57
    %v3053 = vpop.f32.mrb[0].mxu0
    %v3054 = vadd.f32 0.0, %v3053
    %v3055 = vpop.f32.mrb[0].mxu0
    %3056 = vmatprep.mubr.f32.mxu0 0.0
    %3057 = vmatmul.mubr.f32.gmra.mrb[0].mxu0 %v58
    %v3058 = vpop.f32.mrb[0].mxu0
    %v3059 = vadd.f32 0.0, %v3058
    %v3060 = vpop.f32.mrb[0].mxu0
    %3061 = vmatprep.mubr.f32.mxu0 0.0
    %3062 = vmatmul.mubr.f32.gmra.mrb[0].mxu0 %v59
    %v3063 = vpop.f32.mrb[0].mxu0
    %v3064 = vadd.f32 0.0, %v3063
    %v3065 = vpop.f32.mrb[0].mxu0
    %3066 = vmatprep.mubr.f32.mxu0 0.0
    %3067 = vmatmul.mubr.f32.gmra.mrb[0].mxu0 %v60
    %v3068 = vpop.f32.mrb[0].mxu0
    %v3069 = vadd.f32 0.0, %v3068
    %v3070 = vpop.f32.mrb[0].mxu0
    %3071 = vmatprep.mubr.f32.mxu0 0.0
    %3072 = vmatmul.mubr.f32.gmra.mrb[0].mxu0 %v61
    %v3073 = vpop.f32.mrb[0].mxu0
    %v3074 = vadd.f32 0.0, %v3073
    %v3075 = vpop.f32.mrb[0].mxu0
    %3076 = vmatprep.mubr.f32.mxu0 0.0
    %3077 = vmatmul.mubr.f32.gmra.mrb[0].mxu0 %v62
    %v3078 = vpop.f32.mrb[0].mxu0
    %v3079 = vadd.f32 0.0, %v3078
    %v3080 = vpop.f32.mrb[0].mxu0
    %3081 = vmatprep.mubr.f32.mxu0 0.0
    %3082 = vmatmul.mubr.f32.gmra.mrb[0].mxu0 %v63
    %v3083 = vpop.f32.mrb[0].mxu0
    %v3084 = vadd.f32 0.0, %v3083
    %v3085 = vpop.f32.mrb[0].mxu0
    %3086 = vmatprep.mubr.f32.mxu0 0.0
    %3087 = vmatmul.mubr.f32.gmra.mrb[0].mxu0 %v64
    %v3088 = vpop.f32.mrb[0].mxu0
    %v3089 = vadd.f32 0.0, %v3088
    %v3090 = vpop.f32.mrb[0].mxu0
    %3091 = vmatprep.mubr.f32.mxu0 0.0
    %3092 = vmatmul.mubr.f32.gmra.mrb[0].mxu0 %v65
    %v3093 = vpop.f32.mrb[0].mxu0
    %v3094 = vadd.f32 0.0, %v3093
    %v3095 = vpop.f32.mrb[0].mxu0
    %3096 = vmatprep.mubr.f32.mxu0 0.0
    %3097 = vmatmul.mubr.f32.gmra.mrb[0].mxu0 %v66
    %v3098 = vpop.f32.mrb[0].mxu0
    %v3099 = vadd.f32 0.0, %v3098
    %v3100 = vpop.f32.mrb[0].mxu0
    %3101 = vmatprep.mubr.f32.mxu0 0.0
    %3102 = vmatmul.mubr.f32.gmra.mrb[0].mxu0 %v67
    %v3103 = vpop.f32.mrb[0].mxu0
    %v3104 = vadd.f32 0.0, %v3103
    %v3105 = vpop.f32.mrb[0].mxu0
    %3106 = vmatprep.mubr.f32.mxu0 0.0
    %3107 = vmatmul.mubr.f32.gmra.mrb[0].mxu0 %v68
    %v3108 = vpop.f32.mrb[0].mxu0
    %v3109 = vadd.f32 0.0, %v3108
    %v3110 = vpop.f32.mrb[0].mxu0
    %3111 = vmatprep.mubr.f32.mxu0 0.0
    %3112 = vmatmul.mubr.f32.gmra.mrb[0].mxu0 %v69
    %v3113 = vpop.f32.mrb[0].mxu0
    %v3114 = vadd.f32 0.0, %v3113
    %v3115 = vpop.f32.mrb[0].mxu0
    %3116 = vmatprep.mubr.f32.mxu0 0.0
    %3117 = vmatmul.mubr.f32.gmra.mrb[0].mxu0 %v70
    %v3118 = vpop.f32.mrb[0].mxu0
    %v3119 = vadd.f32 0.0, %v3118
    %v3120 = vpop.f32.mrb[0].mxu0
    %3121 = vmatprep.mubr.f32.mxu0 0.0
    %3122 = vmatmul.mubr.f32.gmra.mrb[0].mxu0 %v71
    %v3123 = vpop.f32.mrb[0].mxu0
    %v3124 = vadd.f32 0.0, %v3123
    %v3125 = vpop.f32.mrb[0].mxu0
    %3126 = vdwg.mxu0
    %3127 = vst [vmem:[%s1035] sm:$0xff] %v3049
    %3128 = vst [vmem:[%s1035 + $0x8] sm:$0xff] %v3054
    %3129 = vst [vmem:[%s1035 + $0x10] sm:$0xff] %v3059
    %3130 = vst [vmem:[%s1035 + $0x18] sm:$0xff] %v3064
    %3131 = vst [vmem:[%s1035 + $0x20] sm:$0xff] %v3069
    %3132 = vst [vmem:[%s1035 + $0x28] sm:$0xff] %v3074
    %3133 = vst [vmem:[%s1035 + $0x30] sm:$0xff] %v3079
    %3134 = vst [vmem:[%s1035 + $0x38] sm:$0xff] %v3084
    %3135 = vst [vmem:[%s1035 + $0x40] sm:$0xff] %v3089
    %3136 = vst [vmem:[%s1035 + $0x48] sm:$0xff] %v3094
    %3137 = vst [vmem:[%s1035 + $0x50] sm:$0xff] %v3099
    %3138 = vst [vmem:[%s1035 + $0x58] sm:$0xff] %v3104
    %3139 = vst [vmem:[%s1035 + $0x60] sm:$0xff] %v3109
    %3140 = vst [vmem:[%s1035 + $0x68] sm:$0xff] %v3114
    %3141 = vst [vmem:[%s1035 + $0x70] sm:$0xff] %v3119
    %3142 = vst [vmem:[%s1035 + $0x78] sm:$0xff] %v3124
    %3143 = vmatprep.subr.mxu0 0.0
    %3144 = vmatpush1.msra.mxu0 %v2503
    %3145 = vmatprep.subr.mxu0 0.0
    %3146 = vmatpush1.msra.mxu0 %v2508
    %3147 = vmatprep.subr.mxu0 0.0
    %3148 = vmatpush1.msra.mxu0 %v2513
    %3149 = vmatprep.subr.mxu0 0.0
    %3150 = vmatpush1.msra.mxu0 %v2518
    %3151 = vmatprep.subr.mxu0 0.0
    %3152 = vmatpush1.msra.mxu0 %v2523
    %3153 = vmatprep.subr.mxu0 0.0
    %3154 = vmatpush1.msra.mxu0 %v2528
    %3155 = vmatprep.subr.mxu0 0.0
    %3156 = vmatpush1.msra.mxu0 %v2533
    %3157 = vmatprep.subr.mxu0 0.0
    %3158 = vmatpush1.msra.mxu0 %v2538
    %3159 = vmatprep.subr.mxu0 0.0
    %3160 = vmatpush1.msra.mxu0 %v2543
    %3161 = vmatprep.subr.mxu0 0.0
    %3162 = vmatpush1.msra.mxu0 %v2548
    %3163 = vmatprep.subr.mxu0 0.0
    %3164 = vmatpush1.msra.mxu0 %v2553
    %3165 = vmatprep.subr.mxu0 0.0
    %3166 = vmatpush1.msra.mxu0 %v2558
    %3167 = vmatprep.subr.mxu0 0.0
    %3168 = vmatpush1.msra.mxu0 %v2563
    %3169 = vmatprep.subr.mxu0 0.0
    %3170 = vmatpush1.msra.mxu0 %v2568
    %3171 = vmatprep.subr.mxu0 0.0
    %3172 = vmatpush1.msra.mxu0 %v2573
    %3173 = vmatprep.subr.mxu0 0.0
    %3174 = vmatpush1.msra.mxu0 %v2578
    %3175 = vmatprep.subr.mxu0 0.0
    %3176 = vmatpush1.msra.mxu0 0.0
    %3177 = vmatprep.subr.mxu0 0.0
    %3178 = vmatpush1.msra.mxu0 0.0
    %3179 = vmatprep.subr.mxu0 0.0
    %3180 = vmatpush1.msra.mxu0 0.0
    %3181 = vmatprep.subr.mxu0 0.0
    %3182 = vmatpush1.msra.mxu0 0.0
    %3183 = vmatprep.subr.mxu0 0.0
    %3184 = vmatpush1.msra.mxu0 0.0
    %3185 = vmatprep.subr.mxu0 0.0
    %3186 = vmatpush1.msra.mxu0 0.0
    %3187 = vmatprep.subr.mxu0 0.0
    %3188 = vmatpush1.msra.mxu0 0.0
    %3189 = vmatprep.subr.mxu0 0.0
    %3190 = vmatpush1.msra.mxu0 0.0
    %3191 = vmatprep.subr.mxu0 0.0
    %3192 = vmatpush1.msra.mxu0 0.0
    %3193 = vmatprep.subr.mxu0 0.0
    %3194 = vmatpush1.msra.mxu0 0.0
    %3195 = vmatprep.subr.mxu0 0.0
    %3196 = vmatpush1.msra.mxu0 0.0
    %3197 = vmatprep.subr.mxu0 0.0
    %3198 = vmatpush1.msra.mxu0 0.0
    %3199 = vmatprep.subr.mxu0 0.0
    %3200 = vmatpush1.msra.mxu0 0.0
    %3201 = vmatprep.subr.mxu0 0.0
    %3202 = vmatpush1.msra.mxu0 0.0
    %3203 = vmatprep.subr.mxu0 0.0
    %3204 = vmatpush1.msra.mxu0 0.0
    %3205 = vmatprep.subr.mxu0 0.0
    %3206 = vmatpush1.msra.mxu0 0.0
    %3207 = vmatprep.mubr.f32.mxu0 0.0
    %3208 = vmatmul.mubr.f32.gmra.mrb[0].mxu0 %v56
    %v3209 = vpop.f32.mrb[0].mxu0
    %v3210 = vadd.f32 0.0, %v3209
    %v3211 = vpop.f32.mrb[0].mxu0
    %3212 = vmatprep.mubr.f32.mxu0 0.0
    %3213 = vmatmul.mubr.f32.gmra.mrb[0].mxu0 %v57
    %v3214 = vpop.f32.mrb[0].mxu0
    %v3215 = vadd.f32 0.0, %v3214
    %v3216 = vpop.f32.mrb[0].mxu0
    %3217 = vmatprep.mubr.f32.mxu0 0.0
    %3218 = vmatmul.mubr.f32.gmra.mrb[0].mxu0 %v58
    %v3219 = vpop.f32.mrb[0].mxu0
    %v3220 = vadd.f32 0.0, %v3219
    %v3221 = vpop.f32.mrb[0].mxu0
    %3222 = vmatprep.mubr.f32.mxu0 0.0
    %3223 = vmatmul.mubr.f32.gmra.mrb[0].mxu0 %v59
    %v3224 = vpop.f32.mrb[0].mxu0
    %v3225 = vadd.f32 0.0, %v3224
    %v3226 = vpop.f32.mrb[0].mxu0
    %3227 = vmatprep.mubr.f32.mxu0 0.0
    %3228 = vmatmul.mubr.f32.gmra.mrb[0].mxu0 %v60
    %v3229 = vpop.f32.mrb[0].mxu0
    %v3230 = vadd.f32 0.0, %v3229
    %v3231 = vpop.f32.mrb[0].mxu0
    %3232 = vmatprep.mubr.f32.mxu0 0.0
    %3233 = vmatmul.mubr.f32.gmra.mrb[0].mxu0 %v61
    %v3234 = vpop.f32.mrb[0].mxu0
    %v3235 = vadd.f32 0.0, %v3234
    %v3236 = vpop.f32.mrb[0].mxu0
    %3237 = vmatprep.mubr.f32.mxu0 0.0
    %3238 = vmatmul.mubr.f32.gmra.mrb[0].mxu0 %v62
    %v3239 = vpop.f32.mrb[0].mxu0
    %v3240 = vadd.f32 0.0, %v3239
    %v3241 = vpop.f32.mrb[0].mxu0
    %3242 = vmatprep.mubr.f32.mxu0 0.0
    %3243 = vmatmul.mubr.f32.gmra.mrb[0].mxu0 %v63
    %v3244 = vpop.f32.mrb[0].mxu0
    %v3245 = vadd.f32 0.0, %v3244
    %v3246 = vpop.f32.mrb[0].mxu0
    %3247 = vmatprep.mubr.f32.mxu0 0.0
    %3248 = vmatmul.mubr.f32.gmra.mrb[0].mxu0 %v64
    %v3249 = vpop.f32.mrb[0].mxu0
    %v3250 = vadd.f32 0.0, %v3249
    %v3251 = vpop.f32.mrb[0].mxu0
    %3252 = vmatprep.mubr.f32.mxu0 0.0
    %3253 = vmatmul.mubr.f32.gmra.mrb[0].mxu0 %v65
    %v3254 = vpop.f32.mrb[0].mxu0
    %v3255 = vadd.f32 0.0, %v3254
    %v3256 = vpop.f32.mrb[0].mxu0
    %3257 = vmatprep.mubr.f32.mxu0 0.0
    %3258 = vmatmul.mubr.f32.gmra.mrb[0].mxu0 %v66
    %v3259 = vpop.f32.mrb[0].mxu0
    %v3260 = vadd.f32 0.0, %v3259
    %v3261 = vpop.f32.mrb[0].mxu0
    %3262 = vmatprep.mubr.f32.mxu0 0.0
    %3263 = vmatmul.mubr.f32.gmra.mrb[0].mxu0 %v67
    %v3264 = vpop.f32.mrb[0].mxu0
    %v3265 = vadd.f32 0.0, %v3264
    %v3266 = vpop.f32.mrb[0].mxu0
    %3267 = vmatprep.mubr.f32.mxu0 0.0
    %3268 = vmatmul.mubr.f32.gmra.mrb[0].mxu0 %v68
    %v3269 = vpop.f32.mrb[0].mxu0
    %v3270 = vadd.f32 0.0, %v3269
    %v3271 = vpop.f32.mrb[0].mxu0
    %3272 = vmatprep.mubr.f32.mxu0 0.0
    %3273 = vmatmul.mubr.f32.gmra.mrb[0].mxu0 %v69
    %v3274 = vpop.f32.mrb[0].mxu0
    %v3275 = vadd.f32 0.0, %v3274
    %v3276 = vpop.f32.mrb[0].mxu0
    %3277 = vmatprep.mubr.f32.mxu0 0.0
    %3278 = vmatmul.mubr.f32.gmra.mrb[0].mxu0 %v70
    %v3279 = vpop.f32.mrb[0].mxu0
    %v3280 = vadd.f32 0.0, %v3279
    %v3281 = vpop.f32.mrb[0].mxu0
    %3282 = vmatprep.mubr.f32.mxu0 0.0
    %3283 = vmatmul.mubr.f32.gmra.mrb[0].mxu0 %v71
    %v3284 = vpop.f32.mrb[0].mxu0
    %v3285 = vadd.f32 0.0, %v3284
    %v3286 = vpop.f32.mrb[0].mxu0
    %3287 = vdwg.mxu0
    %3288 = vst [vmem:[%s1197] sm:$0xff] %v3210
    %3289 = vst [vmem:[%s1197 + $0x8] sm:$0xff] %v3215
    %3290 = vst [vmem:[%s1197 + $0x10] sm:$0xff] %v3220
    %3291 = vst [vmem:[%s1197 + $0x18] sm:$0xff] %v3225
    %3292 = vst [vmem:[%s1197 + $0x20] sm:$0xff] %v3230
    %3293 = vst [vmem:[%s1197 + $0x28] sm:$0xff] %v3235
    %3294 = vst [vmem:[%s1197 + $0x30] sm:$0xff] %v3240
    %3295 = vst [vmem:[%s1197 + $0x38] sm:$0xff] %v3245
    %3296 = vst [vmem:[%s1197 + $0x40] sm:$0xff] %v3250
    %3297 = vst [vmem:[%s1197 + $0x48] sm:$0xff] %v3255
    %3298 = vst [vmem:[%s1197 + $0x50] sm:$0xff] %v3260
    %3299 = vst [vmem:[%s1197 + $0x58] sm:$0xff] %v3265
    %3300 = vst [vmem:[%s1197 + $0x60] sm:$0xff] %v3270
    %3301 = vst [vmem:[%s1197 + $0x68] sm:$0xff] %v3275
    %3302 = vst [vmem:[%s1197 + $0x70] sm:$0xff] %v3280
    %3303 = vst [vmem:[%s1197 + $0x78] sm:$0xff] %v3285
    %3304 = vmatprep.subr.mxu0 0.0
    %3305 = vmatpush1.msra.mxu0 %v2583
    %3306 = vmatprep.subr.mxu0 0.0
    %3307 = vmatpush1.msra.mxu0 %v2588
    %3308 = vmatprep.subr.mxu0 0.0
    %3309 = vmatpush1.msra.mxu0 %v2593
    %3310 = vmatprep.subr.mxu0 0.0
    %3311 = vmatpush1.msra.mxu0 %v2598
    %3312 = vmatprep.subr.mxu0 0.0
    %3313 = vmatpush1.msra.mxu0 %v2603
    %3314 = vmatprep.subr.mxu0 0.0
    %3315 = vmatpush1.msra.mxu0 %v2608
    %3316 = vmatprep.subr.mxu0 0.0
    %3317 = vmatpush1.msra.mxu0 %v2613
    %3318 = vmatprep.subr.mxu0 0.0
    %3319 = vmatpush1.msra.mxu0 %v2618
    %3320 = vmatprep.subr.mxu0 0.0
    %3321 = vmatpush1.msra.mxu0 %v2623
    %3322 = vmatprep.subr.mxu0 0.0
    %3323 = vmatpush1.msra.mxu0 %v2628
    %3324 = vmatprep.subr.mxu0 0.0
    %3325 = vmatpush1.msra.mxu0 %v2633
    %3326 = vmatprep.subr.mxu0 0.0
    %3327 = vmatpush1.msra.mxu0 %v2638
    %3328 = vmatprep.subr.mxu0 0.0
    %3329 = vmatpush1.msra.mxu0 %v2643
    %3330 = vmatprep.subr.mxu0 0.0
    %3331 = vmatpush1.msra.mxu0 %v2648
    %3332 = vmatprep.subr.mxu0 0.0
    %3333 = vmatpush1.msra.mxu0 %v2653
    %3334 = vmatprep.subr.mxu0 0.0
    %3335 = vmatpush1.msra.mxu0 %v2658
    %3336 = vmatprep.subr.mxu0 0.0
    %3337 = vmatpush1.msra.mxu0 0.0
    %3338 = vmatprep.subr.mxu0 0.0
    %3339 = vmatpush1.msra.mxu0 0.0
    %3340 = vmatprep.subr.mxu0 0.0
    %3341 = vmatpush1.msra.mxu0 0.0
    %3342 = vmatprep.subr.mxu0 0.0
    %3343 = vmatpush1.msra.mxu0 0.0
    %3344 = vmatprep.subr.mxu0 0.0
    %3345 = vmatpush1.msra.mxu0 0.0
    %3346 = vmatprep.subr.mxu0 0.0
    %3347 = vmatpush1.msra.mxu0 0.0
    %3348 = vmatprep.subr.mxu0 0.0
    %3349 = vmatpush1.msra.mxu0 0.0
    %3350 = vmatprep.subr.mxu0 0.0
    %3351 = vmatpush1.msra.mxu0 0.0
    %3352 = vmatprep.subr.mxu0 0.0
    %3353 = vmatpush1.msra.mxu0 0.0
    %3354 = vmatprep.subr.mxu0 0.0
    %3355 = vmatpush1.msra.mxu0 0.0
    %3356 = vmatprep.subr.mxu0 0.0
    %3357 = vmatpush1.msra.mxu0 0.0
    %3358 = vmatprep.subr.mxu0 0.0
    %3359 = vmatpush1.msra.mxu0 0.0
    %3360 = vmatprep.subr.mxu0 0.0
    %3361 = vmatpush1.msra.mxu0 0.0
    %3362 = vmatprep.subr.mxu0 0.0
    %3363 = vmatpush1.msra.mxu0 0.0
    %3364 = vmatprep.subr.mxu0 0.0
    %3365 = vmatpush1.msra.mxu0 0.0
    %3366 = vmatprep.subr.mxu0 0.0
    %3367 = vmatpush1.msra.mxu0 0.0
    %3368 = vmatprep.mubr.f32.mxu0 0.0
    %3369 = vmatmul.mubr.f32.gmra.mrb[0].mxu0 %v56
    %v3370 = vpop.f32.mrb[0].mxu0
    %v3371 = vadd.f32 0.0, %v3370
    %v3372 = vpop.f32.mrb[0].mxu0
    %3373 = vmatprep.mubr.f32.mxu0 0.0
    %3374 = vmatmul.mubr.f32.gmra.mrb[0].mxu0 %v57
    %v3375 = vpop.f32.mrb[0].mxu0
    %v3376 = vadd.f32 0.0, %v3375
    %v3377 = vpop.f32.mrb[0].mxu0
    %3378 = vmatprep.mubr.f32.mxu0 0.0
    %3379 = vmatmul.mubr.f32.gmra.mrb[0].mxu0 %v58
    %v3380 = vpop.f32.mrb[0].mxu0
    %v3381 = vadd.f32 0.0, %v3380
    %v3382 = vpop.f32.mrb[0].mxu0
    %3383 = vmatprep.mubr.f32.mxu0 0.0
    %3384 = vmatmul.mubr.f32.gmra.mrb[0].mxu0 %v59
    %v3385 = vpop.f32.mrb[0].mxu0
    %v3386 = vadd.f32 0.0, %v3385
    %v3387 = vpop.f32.mrb[0].mxu0
    %3388 = vmatprep.mubr.f32.mxu0 0.0
    %3389 = vmatmul.mubr.f32.gmra.mrb[0].mxu0 %v60
    %v3390 = vpop.f32.mrb[0].mxu0
    %v3391 = vadd.f32 0.0, %v3390
    %v3392 = vpop.f32.mrb[0].mxu0
    %3393 = vmatprep.mubr.f32.mxu0 0.0
    %3394 = vmatmul.mubr.f32.gmra.mrb[0].mxu0 %v61
    %v3395 = vpop.f32.mrb[0].mxu0
    %v3396 = vadd.f32 0.0, %v3395
    %v3397 = vpop.f32.mrb[0].mxu0
    %3398 = vmatprep.mubr.f32.mxu0 0.0
    %3399 = vmatmul.mubr.f32.gmra.mrb[0].mxu0 %v62
    %v3400 = vpop.f32.mrb[0].mxu0
    %v3401 = vadd.f32 0.0, %v3400
    %v3402 = vpop.f32.mrb[0].mxu0
    %3403 = vmatprep.mubr.f32.mxu0 0.0
    %3404 = vmatmul.mubr.f32.gmra.mrb[0].mxu0 %v63
    %v3405 = vpop.f32.mrb[0].mxu0
    %v3406 = vadd.f32 0.0, %v3405
    %v3407 = vpop.f32.mrb[0].mxu0
    %3408 = vmatprep.mubr.f32.mxu0 0.0
    %3409 = vmatmul.mubr.f32.gmra.mrb[0].mxu0 %v64
    %v3410 = vpop.f32.mrb[0].mxu0
    %v3411 = vadd.f32 0.0, %v3410
    %v3412 = vpop.f32.mrb[0].mxu0
    %3413 = vmatprep.mubr.f32.mxu0 0.0
    %3414 = vmatmul.mubr.f32.gmra.mrb[0].mxu0 %v65
    %v3415 = vpop.f32.mrb[0].mxu0
    %v3416 = vadd.f32 0.0, %v3415
    %v3417 = vpop.f32.mrb[0].mxu0
    %3418 = vmatprep.mubr.f32.mxu0 0.0
    %3419 = vmatmul.mubr.f32.gmra.mrb[0].mxu0 %v66
    %v3420 = vpop.f32.mrb[0].mxu0
    %v3421 = vadd.f32 0.0, %v3420
    %v3422 = vpop.f32.mrb[0].mxu0
    %3423 = vmatprep.mubr.f32.mxu0 0.0
    %3424 = vmatmul.mubr.f32.gmra.mrb[0].mxu0 %v67
    %v3425 = vpop.f32.mrb[0].mxu0
    %v3426 = vadd.f32 0.0, %v3425
    %v3427 = vpop.f32.mrb[0].mxu0
    %3428 = vmatprep.mubr.f32.mxu0 0.0
    %3429 = vmatmul.mubr.f32.gmra.mrb[0].mxu0 %v68
    %v3430 = vpop.f32.mrb[0].mxu0
    %v3431 = vadd.f32 0.0, %v3430
    %v3432 = vpop.f32.mrb[0].mxu0
    %3433 = vmatprep.mubr.f32.mxu0 0.0
    %3434 = vmatmul.mubr.f32.gmra.mrb[0].mxu0 %v69
    %v3435 = vpop.f32.mrb[0].mxu0
    %v3436 = vadd.f32 0.0, %v3435
    %v3437 = vpop.f32.mrb[0].mxu0
    %3438 = vmatprep.mubr.f32.mxu0 0.0
    %3439 = vmatmul.mubr.f32.gmra.mrb[0].mxu0 %v70
    %v3440 = vpop.f32.mrb[0].mxu0
    %v3441 = vadd.f32 0.0, %v3440
    %v3442 = vpop.f32.mrb[0].mxu0
    %3443 = vmatprep.mubr.f32.mxu0 0.0
    %3444 = vmatmul.mubr.f32.gmra.mrb[0].mxu0 %v71
    %v3445 = vpop.f32.mrb[0].mxu0
    %v3446 = vadd.f32 0.0, %v3445
    %v3447 = vpop.f32.mrb[0].mxu0
    %3448 = vdwg.mxu0
    %3449 = vst [vmem:[%s1359] sm:$0xff] %v3371
    %3450 = vst [vmem:[%s1359 + $0x8] sm:$0xff] %v3376
    %3451 = vst [vmem:[%s1359 + $0x10] sm:$0xff] %v3381
    %3452 = vst [vmem:[%s1359 + $0x18] sm:$0xff] %v3386
    %3453 = vst [vmem:[%s1359 + $0x20] sm:$0xff] %v3391
    %3454 = vst [vmem:[%s1359 + $0x28] sm:$0xff] %v3396
    %3455 = vst [vmem:[%s1359 + $0x30] sm:$0xff] %v3401
    %3456 = vst [vmem:[%s1359 + $0x38] sm:$0xff] %v3406
    %3457 = vst [vmem:[%s1359 + $0x40] sm:$0xff] %v3411
    %3458 = vst [vmem:[%s1359 + $0x48] sm:$0xff] %v3416
    %3459 = vst [vmem:[%s1359 + $0x50] sm:$0xff] %v3421
    %3460 = vst [vmem:[%s1359 + $0x58] sm:$0xff] %v3426
    %3461 = vst [vmem:[%s1359 + $0x60] sm:$0xff] %v3431
    %3462 = vst [vmem:[%s1359 + $0x68] sm:$0xff] %v3436
    %3463 = vst [vmem:[%s1359 + $0x70] sm:$0xff] %v3441
    %3464 = vst [vmem:[%s1359 + $0x78] sm:$0xff] %v3446
    %3465 = vmatprep.subr.mxu0 0.0
    %3466 = vmatpush1.msra.mxu0 %v2663
    %3467 = vmatprep.subr.mxu0 0.0
    %3468 = vmatpush1.msra.mxu0 %v2668
    %3469 = vmatprep.subr.mxu0 0.0
    %3470 = vmatpush1.msra.mxu0 %v2673
    %3471 = vmatprep.subr.mxu0 0.0
    %3472 = vmatpush1.msra.mxu0 %v2678
    %3473 = vmatprep.subr.mxu0 0.0
    %3474 = vmatpush1.msra.mxu0 %v2683
    %3475 = vmatprep.subr.mxu0 0.0
    %3476 = vmatpush1.msra.mxu0 %v2688
    %3477 = vmatprep.subr.mxu0 0.0
    %3478 = vmatpush1.msra.mxu0 %v2693
    %3479 = vmatprep.subr.mxu0 0.0
    %3480 = vmatpush1.msra.mxu0 %v2698
    %3481 = vmatprep.subr.mxu0 0.0
    %3482 = vmatpush1.msra.mxu0 %v2703
    %3483 = vmatprep.subr.mxu0 0.0
    %3484 = vmatpush1.msra.mxu0 %v2708
    %3485 = vmatprep.subr.mxu0 0.0
    %3486 = vmatpush1.msra.mxu0 %v2713
    %3487 = vmatprep.subr.mxu0 0.0
    %3488 = vmatpush1.msra.mxu0 %v2718
    %3489 = vmatprep.subr.mxu0 0.0
    %3490 = vmatpush1.msra.mxu0 %v2723
    %3491 = vmatprep.subr.mxu0 0.0
    %3492 = vmatpush1.msra.mxu0 %v2728
    %3493 = vmatprep.subr.mxu0 0.0
    %3494 = vmatpush1.msra.mxu0 %v2733
    %3495 = vmatprep.subr.mxu0 0.0
    %3496 = vmatpush1.msra.mxu0 %v2738
    %3497 = vmatprep.subr.mxu0 0.0
    %3498 = vmatpush1.msra.mxu0 0.0
    %3499 = vmatprep.subr.mxu0 0.0
    %3500 = vmatpush1.msra.mxu0 0.0
    %3501 = vmatprep.subr.mxu0 0.0
    %3502 = vmatpush1.msra.mxu0 0.0
    %3503 = vmatprep.subr.mxu0 0.0
    %3504 = vmatpush1.msra.mxu0 0.0
    %3505 = vmatprep.subr.mxu0 0.0
    %3506 = vmatpush1.msra.mxu0 0.0
    %3507 = vmatprep.subr.mxu0 0.0
    %3508 = vmatpush1.msra.mxu0 0.0
    %3509 = vmatprep.subr.mxu0 0.0
    %3510 = vmatpush1.msra.mxu0 0.0
    %3511 = vmatprep.subr.mxu0 0.0
    %3512 = vmatpush1.msra.mxu0 0.0
    %3513 = vmatprep.subr.mxu0 0.0
    %3514 = vmatpush1.msra.mxu0 0.0
    %3515 = vmatprep.subr.mxu0 0.0
    %3516 = vmatpush1.msra.mxu0 0.0
    %3517 = vmatprep.subr.mxu0 0.0
    %3518 = vmatpush1.msra.mxu0 0.0
    %3519 = vmatprep.subr.mxu0 0.0
    %3520 = vmatpush1.msra.mxu0 0.0
    %3521 = vmatprep.subr.mxu0 0.0
    %3522 = vmatpush1.msra.mxu0 0.0
    %3523 = vmatprep.subr.mxu0 0.0
    %3524 = vmatpush1.msra.mxu0 0.0
    %3525 = vmatprep.subr.mxu0 0.0
    %3526 = vmatpush1.msra.mxu0 0.0
    %3527 = vmatprep.subr.mxu0 0.0
    %3528 = vmatpush1.msra.mxu0 0.0
    %3529 = vmatprep.mubr.f32.mxu0 0.0
    %3530 = vmatmul.mubr.f32.gmra.mrb[0].mxu0 %v56
    %v3531 = vpop.f32.mrb[0].mxu0
    %v3532 = vadd.f32 0.0, %v3531
    %v3533 = vpop.f32.mrb[0].mxu0
    %3534 = vmatprep.mubr.f32.mxu0 0.0
    %3535 = vmatmul.mubr.f32.gmra.mrb[0].mxu0 %v57
    %v3536 = vpop.f32.mrb[0].mxu0
    %v3537 = vadd.f32 0.0, %v3536
    %v3538 = vpop.f32.mrb[0].mxu0
    %3539 = vmatprep.mubr.f32.mxu0 0.0
    %3540 = vmatmul.mubr.f32.gmra.mrb[0].mxu0 %v58
    %v3541 = vpop.f32.mrb[0].mxu0
    %v3542 = vadd.f32 0.0, %v3541
    %v3543 = vpop.f32.mrb[0].mxu0
    %3544 = vmatprep.mubr.f32.mxu0 0.0
    %3545 = vmatmul.mubr.f32.gmra.mrb[0].mxu0 %v59
    %v3546 = vpop.f32.mrb[0].mxu0
    %v3547 = vadd.f32 0.0, %v3546
    %v3548 = vpop.f32.mrb[0].mxu0
    %3549 = vmatprep.mubr.f32.mxu0 0.0
    %3550 = vmatmul.mubr.f32.gmra.mrb[0].mxu0 %v60
    %v3551 = vpop.f32.mrb[0].mxu0
    %v3552 = vadd.f32 0.0, %v3551
    %v3553 = vpop.f32.mrb[0].mxu0
    %3554 = vmatprep.mubr.f32.mxu0 0.0
    %3555 = vmatmul.mubr.f32.gmra.mrb[0].mxu0 %v61
    %v3556 = vpop.f32.mrb[0].mxu0
    %v3557 = vadd.f32 0.0, %v3556
    %v3558 = vpop.f32.mrb[0].mxu0
    %3559 = vmatprep.mubr.f32.mxu0 0.0
    %3560 = vmatmul.mubr.f32.gmra.mrb[0].mxu0 %v62
    %v3561 = vpop.f32.mrb[0].mxu0
    %v3562 = vadd.f32 0.0, %v3561
    %v3563 = vpop.f32.mrb[0].mxu0
    %3564 = vmatprep.mubr.f32.mxu0 0.0
    %3565 = vmatmul.mubr.f32.gmra.mrb[0].mxu0 %v63
    %v3566 = vpop.f32.mrb[0].mxu0
    %v3567 = vadd.f32 0.0, %v3566
    %v3568 = vpop.f32.mrb[0].mxu0
    %3569 = vmatprep.mubr.f32.mxu0 0.0
    %3570 = vmatmul.mubr.f32.gmra.mrb[0].mxu0 %v64
    %v3571 = vpop.f32.mrb[0].mxu0
    %v3572 = vadd.f32 0.0, %v3571
    %v3573 = vpop.f32.mrb[0].mxu0
    %3574 = vmatprep.mubr.f32.mxu0 0.0
    %3575 = vmatmul.mubr.f32.gmra.mrb[0].mxu0 %v65
    %v3576 = vpop.f32.mrb[0].mxu0
    %v3577 = vadd.f32 0.0, %v3576
    %v3578 = vpop.f32.mrb[0].mxu0
    %3579 = vmatprep.mubr.f32.mxu0 0.0
    %3580 = vmatmul.mubr.f32.gmra.mrb[0].mxu0 %v66
    %v3581 = vpop.f32.mrb[0].mxu0
    %v3582 = vadd.f32 0.0, %v3581
    %v3583 = vpop.f32.mrb[0].mxu0
    %3584 = vmatprep.mubr.f32.mxu0 0.0
    %3585 = vmatmul.mubr.f32.gmra.mrb[0].mxu0 %v67
    %v3586 = vpop.f32.mrb[0].mxu0
    %v3587 = vadd.f32 0.0, %v3586
    %v3588 = vpop.f32.mrb[0].mxu0
    %3589 = vmatprep.mubr.f32.mxu0 0.0
    %3590 = vmatmul.mubr.f32.gmra.mrb[0].mxu0 %v68
    %v3591 = vpop.f32.mrb[0].mxu0
    %v3592 = vadd.f32 0.0, %v3591
    %v3593 = vpop.f32.mrb[0].mxu0
    %3594 = vmatprep.mubr.f32.mxu0 0.0
    %3595 = vmatmul.mubr.f32.gmra.mrb[0].mxu0 %v69
    %v3596 = vpop.f32.mrb[0].mxu0
    %v3597 = vadd.f32 0.0, %v3596
    %v3598 = vpop.f32.mrb[0].mxu0
    %3599 = vmatprep.mubr.f32.mxu0 0.0
    %3600 = vmatmul.mubr.f32.gmra.mrb[0].mxu0 %v70
    %v3601 = vpop.f32.mrb[0].mxu0
    %v3602 = vadd.f32 0.0, %v3601
    %v3603 = vpop.f32.mrb[0].mxu0
    %3604 = vmatprep.mubr.f32.mxu0 0.0
    %3605 = vmatmul.mubr.f32.gmra.mrb[0].mxu0 %v71
    %v3606 = vpop.f32.mrb[0].mxu0
    %v3607 = vadd.f32 0.0, %v3606
    %v3608 = vpop.f32.mrb[0].mxu0
    %3609 = vdwg.mxu0
    %3610 = vst [vmem:[%s1521] sm:$0xff] %v3532
    %3611 = vst [vmem:[%s1521 + $0x8] sm:$0xff] %v3537
    %3612 = vst [vmem:[%s1521 + $0x10] sm:$0xff] %v3542
    %3613 = vst [vmem:[%s1521 + $0x18] sm:$0xff] %v3547
    %3614 = vst [vmem:[%s1521 + $0x20] sm:$0xff] %v3552
    %3615 = vst [vmem:[%s1521 + $0x28] sm:$0xff] %v3557
    %3616 = vst [vmem:[%s1521 + $0x30] sm:$0xff] %v3562
    %3617 = vst [vmem:[%s1521 + $0x38] sm:$0xff] %v3567
    %3618 = vst [vmem:[%s1521 + $0x40] sm:$0xff] %v3572
    %3619 = vst [vmem:[%s1521 + $0x48] sm:$0xff] %v3577
    %3620 = vst [vmem:[%s1521 + $0x50] sm:$0xff] %v3582
    %3621 = vst [vmem:[%s1521 + $0x58] sm:$0xff] %v3587
    %3622 = vst [vmem:[%s1521 + $0x60] sm:$0xff] %v3592
    %3623 = vst [vmem:[%s1521 + $0x68] sm:$0xff] %v3597
    %3624 = vst [vmem:[%s1521 + $0x70] sm:$0xff] %v3602
    %3625 = vst [vmem:[%s1521 + $0x78] sm:$0xff] %v3607
    %3626 = vmatprep.subr.mxu0 0.0
    %3627 = vmatpush1.msra.mxu0 %v2743
    %3628 = vmatprep.subr.mxu0 0.0
    %3629 = vmatpush1.msra.mxu0 %v2748
    %3630 = vmatprep.subr.mxu0 0.0
    %3631 = vmatpush1.msra.mxu0 %v2753
    %3632 = vmatprep.subr.mxu0 0.0
    %3633 = vmatpush1.msra.mxu0 %v2758
    %3634 = vmatprep.subr.mxu0 0.0
    %3635 = vmatpush1.msra.mxu0 %v2763
    %3636 = vmatprep.subr.mxu0 0.0
    %3637 = vmatpush1.msra.mxu0 %v2768
    %3638 = vmatprep.subr.mxu0 0.0
    %3639 = vmatpush1.msra.mxu0 %v2773
    %3640 = vmatprep.subr.mxu0 0.0
    %3641 = vmatpush1.msra.mxu0 %v2778
    %3642 = vmatprep.subr.mxu0 0.0
    %3643 = vmatpush1.msra.mxu0 %v2783
    %3644 = vmatprep.subr.mxu0 0.0
    %3645 = vmatpush1.msra.mxu0 %v2788
    %3646 = vmatprep.subr.mxu0 0.0
    %3647 = vmatpush1.msra.mxu0 %v2793
    %3648 = vmatprep.subr.mxu0 0.0
    %3649 = vmatpush1.msra.mxu0 %v2798
    %3650 = vmatprep.subr.mxu0 0.0
    %3651 = vmatpush1.msra.mxu0 %v2803
    %3652 = vmatprep.subr.mxu0 0.0
    %3653 = vmatpush1.msra.mxu0 %v2808
    %3654 = vmatprep.subr.mxu0 0.0
    %3655 = vmatpush1.msra.mxu0 %v2813
    %3656 = vmatprep.subr.mxu0 0.0
    %3657 = vmatpush1.msra.mxu0 %v2818
    %3658 = vmatprep.subr.mxu0 0.0
    %3659 = vmatpush1.msra.mxu0 0.0
    %3660 = vmatprep.subr.mxu0 0.0
    %3661 = vmatpush1.msra.mxu0 0.0
    %3662 = vmatprep.subr.mxu0 0.0
    %3663 = vmatpush1.msra.mxu0 0.0
    %3664 = vmatprep.subr.mxu0 0.0
    %3665 = vmatpush1.msra.mxu0 0.0
    %3666 = vmatprep.subr.mxu0 0.0
    %3667 = vmatpush1.msra.mxu0 0.0
    %3668 = vmatprep.subr.mxu0 0.0
    %3669 = vmatpush1.msra.mxu0 0.0
    %3670 = vmatprep.subr.mxu0 0.0
    %3671 = vmatpush1.msra.mxu0 0.0
    %3672 = vmatprep.subr.mxu0 0.0
    %3673 = vmatpush1.msra.mxu0 0.0
    %3674 = vmatprep.subr.mxu0 0.0
    %3675 = vmatpush1.msra.mxu0 0.0
    %3676 = vmatprep.subr.mxu0 0.0
    %3677 = vmatpush1.msra.mxu0 0.0
    %3678 = vmatprep.subr.mxu0 0.0
    %3679 = vmatpush1.msra.mxu0 0.0
    %3680 = vmatprep.subr.mxu0 0.0
    %3681 = vmatpush1.msra.mxu0 0.0
    %3682 = vmatprep.subr.mxu0 0.0
    %3683 = vmatpush1.msra.mxu0 0.0
    %3684 = vmatprep.subr.mxu0 0.0
    %3685 = vmatpush1.msra.mxu0 0.0
    %3686 = vmatprep.subr.mxu0 0.0
    %3687 = vmatpush1.msra.mxu0 0.0
    %3688 = vmatprep.subr.mxu0 0.0
    %3689 = vmatpush1.msra.mxu0 0.0
    %3690 = vmatprep.mubr.f32.mxu0 0.0
    %3691 = vmatmul.mubr.f32.gmra.mrb[0].mxu0 %v56
    %v3692 = vpop.f32.mrb[0].mxu0
    %v3693 = vadd.f32 0.0, %v3692
    %v3694 = vpop.f32.mrb[0].mxu0
    %3695 = vmatprep.mubr.f32.mxu0 0.0
    %3696 = vmatmul.mubr.f32.gmra.mrb[0].mxu0 %v57
    %v3697 = vpop.f32.mrb[0].mxu0
    %v3698 = vadd.f32 0.0, %v3697
    %v3699 = vpop.f32.mrb[0].mxu0
    %3700 = vmatprep.mubr.f32.mxu0 0.0
    %3701 = vmatmul.mubr.f32.gmra.mrb[0].mxu0 %v58
    %v3702 = vpop.f32.mrb[0].mxu0
    %v3703 = vadd.f32 0.0, %v3702
    %v3704 = vpop.f32.mrb[0].mxu0
    %3705 = vmatprep.mubr.f32.mxu0 0.0
    %3706 = vmatmul.mubr.f32.gmra.mrb[0].mxu0 %v59
    %v3707 = vpop.f32.mrb[0].mxu0
    %v3708 = vadd.f32 0.0, %v3707
    %v3709 = vpop.f32.mrb[0].mxu0
    %3710 = vmatprep.mubr.f32.mxu0 0.0
    %3711 = vmatmul.mubr.f32.gmra.mrb[0].mxu0 %v60
    %v3712 = vpop.f32.mrb[0].mxu0
    %v3713 = vadd.f32 0.0, %v3712
    %v3714 = vpop.f32.mrb[0].mxu0
    %3715 = vmatprep.mubr.f32.mxu0 0.0
    %3716 = vmatmul.mubr.f32.gmra.mrb[0].mxu0 %v61
    %v3717 = vpop.f32.mrb[0].mxu0
    %v3718 = vadd.f32 0.0, %v3717
    %v3719 = vpop.f32.mrb[0].mxu0
    %3720 = vmatprep.mubr.f32.mxu0 0.0
    %3721 = vmatmul.mubr.f32.gmra.mrb[0].mxu0 %v62
    %v3722 = vpop.f32.mrb[0].mxu0
    %v3723 = vadd.f32 0.0, %v3722
    %v3724 = vpop.f32.mrb[0].mxu0
    %3725 = vmatprep.mubr.f32.mxu0 0.0
    %3726 = vmatmul.mubr.f32.gmra.mrb[0].mxu0 %v63
    %v3727 = vpop.f32.mrb[0].mxu0
    %v3728 = vadd.f32 0.0, %v3727
    %v3729 = vpop.f32.mrb[0].mxu0
    %3730 = vmatprep.mubr.f32.mxu0 0.0
    %3731 = vmatmul.mubr.f32.gmra.mrb[0].mxu0 %v64
    %v3732 = vpop.f32.mrb[0].mxu0
    %v3733 = vadd.f32 0.0, %v3732
    %v3734 = vpop.f32.mrb[0].mxu0
    %3735 = vmatprep.mubr.f32.mxu0 0.0
    %3736 = vmatmul.mubr.f32.gmra.mrb[0].mxu0 %v65
    %v3737 = vpop.f32.mrb[0].mxu0
    %v3738 = vadd.f32 0.0, %v3737
    %v3739 = vpop.f32.mrb[0].mxu0
    %3740 = vmatprep.mubr.f32.mxu0 0.0
    %3741 = vmatmul.mubr.f32.gmra.mrb[0].mxu0 %v66
    %v3742 = vpop.f32.mrb[0].mxu0
    %v3743 = vadd.f32 0.0, %v3742
    %v3744 = vpop.f32.mrb[0].mxu0
    %3745 = vmatprep.mubr.f32.mxu0 0.0
    %3746 = vmatmul.mubr.f32.gmra.mrb[0].mxu0 %v67
    %v3747 = vpop.f32.mrb[0].mxu0
    %v3748 = vadd.f32 0.0, %v3747
    %v3749 = vpop.f32.mrb[0].mxu0
    %3750 = vmatprep.mubr.f32.mxu0 0.0
    %3751 = vmatmul.mubr.f32.gmra.mrb[0].mxu0 %v68
    %v3752 = vpop.f32.mrb[0].mxu0
    %v3753 = vadd.f32 0.0, %v3752
    %v3754 = vpop.f32.mrb[0].mxu0
    %3755 = vmatprep.mubr.f32.mxu0 0.0
    %3756 = vmatmul.mubr.f32.gmra.mrb[0].mxu0 %v69
    %v3757 = vpop.f32.mrb[0].mxu0
    %v3758 = vadd.f32 0.0, %v3757
    %v3759 = vpop.f32.mrb[0].mxu0
    %3760 = vmatprep.mubr.f32.mxu0 0.0
    %3761 = vmatmul.mubr.f32.gmra.mrb[0].mxu0 %v70
    %v3762 = vpop.f32.mrb[0].mxu0
    %v3763 = vadd.f32 0.0, %v3762
    %v3764 = vpop.f32.mrb[0].mxu0
    %3765 = vmatprep.mubr.f32.mxu0 0.0
    %3766 = vmatmul.mubr.f32.gmra.mrb[0].mxu0 %v71
    %v3767 = vpop.f32.mrb[0].mxu0
    %v3768 = vadd.f32 0.0, %v3767
    %v3769 = vpop.f32.mrb[0].mxu0
    %3770 = vdwg.mxu0
    %3771 = vst [vmem:[%s1683] sm:$0xff] %v3693
    %3772 = vst [vmem:[%s1683 + $0x8] sm:$0xff] %v3698
    %3773 = vst [vmem:[%s1683 + $0x10] sm:$0xff] %v3703
    %3774 = vst [vmem:[%s1683 + $0x18] sm:$0xff] %v3708
    %3775 = vst [vmem:[%s1683 + $0x20] sm:$0xff] %v3713
    %3776 = vst [vmem:[%s1683 + $0x28] sm:$0xff] %v3718
    %3777 = vst [vmem:[%s1683 + $0x30] sm:$0xff] %v3723
    %3778 = vst [vmem:[%s1683 + $0x38] sm:$0xff] %v3728
    %3779 = vst [vmem:[%s1683 + $0x40] sm:$0xff] %v3733
    %3780 = vst [vmem:[%s1683 + $0x48] sm:$0xff] %v3738
    %3781 = vst [vmem:[%s1683 + $0x50] sm:$0xff] %v3743
    %3782 = vst [vmem:[%s1683 + $0x58] sm:$0xff] %v3748
    %3783 = vst [vmem:[%s1683 + $0x60] sm:$0xff] %v3753
    %3784 = vst [vmem:[%s1683 + $0x68] sm:$0xff] %v3758
    %3785 = vst [vmem:[%s1683 + $0x70] sm:$0xff] %v3763
    %3786 = vst [vmem:[%s1683 + $0x78] sm:$0xff] %v3768
    %v3787 = vld [vmem:[#allocation2] sm:$0xff]
    %v3788 = vld [vmem:[#allocation2 + $0x8] sm:$0xff]
    %v3789 = vld [vmem:[#allocation2 + $0x10] sm:$0xff]
    %v3790 = vld [vmem:[#allocation2 + $0x18] sm:$0xff]
    %v3791 = vld [vmem:[#allocation2 + $0x20] sm:$0xff]
    %v3792 = vld [vmem:[#allocation2 + $0x28] sm:$0xff]
    %v3793 = vld [vmem:[#allocation2 + $0x30] sm:$0xff]
    %v3794 = vld [vmem:[#allocation2 + $0x38] sm:$0xff]
    %v3795 = vld [vmem:[#allocation2 + $0x40] sm:$0xff]
    %v3796 = vld [vmem:[#allocation2 + $0x48] sm:$0xff]
    %v3797 = vld [vmem:[#allocation2 + $0x50] sm:$0xff]
    %v3798 = vld [vmem:[#allocation2 + $0x58] sm:$0xff]
    %v3799 = vld [vmem:[#allocation2 + $0x60] sm:$0xff]
    %v3800 = vld [vmem:[#allocation2 + $0x68] sm:$0xff]
    %v3801 = vld [vmem:[#allocation2 + $0x70] sm:$0xff]
    %v3802 = vld [vmem:[#allocation2 + $0x78] sm:$0xff]
    %v3803 = vld [vmem:[#allocation2 + $0x80] sm:$0xff]
    %v3804 = vld [vmem:[#allocation2 + $0x88] sm:$0xff]
    %v3805 = vld [vmem:[#allocation2 + $0x90] sm:$0xff]
    %v3806 = vld [vmem:[#allocation2 + $0x98] sm:$0xff]
    %v3807 = vld [vmem:[#allocation2 + $0xa0] sm:$0xff]
    %v3808 = vld [vmem:[#allocation2 + $0xa8] sm:$0xff]
    %v3809 = vld [vmem:[#allocation2 + $0xb0] sm:$0xff]
    %v3810 = vld [vmem:[#allocation2 + $0xb8] sm:$0xff]
    %v3811 = vld [vmem:[#allocation2 + $0xc0] sm:$0xff]
    %v3812 = vld [vmem:[#allocation2 + $0xc8] sm:$0xff]
    %v3813 = vld [vmem:[#allocation2 + $0xd0] sm:$0xff]
    %v3814 = vld [vmem:[#allocation2 + $0xd8] sm:$0xff]
    %v3815 = vld [vmem:[#allocation2 + $0xe0] sm:$0xff]
    %v3816 = vld [vmem:[#allocation2 + $0xe8] sm:$0xff]
    %v3817 = vld [vmem:[#allocation2 + $0xf0] sm:$0xff]
    %v3818 = vld [vmem:[#allocation2 + $0xf8] sm:$0xff]
    %v3819 = vld [vmem:[#allocation2 + $0x100] sm:$0xff]
    %v3820 = vld [vmem:[#allocation2 + $0x108] sm:$0xff]
    %v3821 = vld [vmem:[#allocation2 + $0x110] sm:$0xff]
    %v3822 = vld [vmem:[#allocation2 + $0x118] sm:$0xff]
    %v3823 = vld [vmem:[#allocation2 + $0x120] sm:$0xff]
    %v3824 = vld [vmem:[#allocation2 + $0x128] sm:$0xff]
    %v3825 = vld [vmem:[#allocation2 + $0x130] sm:$0xff]
    %v3826 = vld [vmem:[#allocation2 + $0x138] sm:$0xff]
    %v3827 = vld [vmem:[#allocation2 + $0x140] sm:$0xff]
    %v3828 = vld [vmem:[#allocation2 + $0x148] sm:$0xff]
    %v3829 = vld [vmem:[#allocation2 + $0x150] sm:$0xff]
    %v3830 = vld [vmem:[#allocation2 + $0x158] sm:$0xff]
    %v3831 = vld [vmem:[#allocation2 + $0x160] sm:$0xff]
    %v3832 = vld [vmem:[#allocation2 + $0x168] sm:$0xff]
    %v3833 = vld [vmem:[#allocation2 + $0x170] sm:$0xff]
    %v3834 = vld [vmem:[#allocation2 + $0x178] sm:$0xff]
    %v3835 = vld [vmem:[#allocation2 + $0x180] sm:$0xff]
    %v3836 = vld [vmem:[#allocation2 + $0x188] sm:$0xff]
    %v3837 = vld [vmem:[#allocation2 + $0x190] sm:$0xff]
    %v3838 = vld [vmem:[#allocation2 + $0x198] sm:$0xff]
    %v3839 = vld [vmem:[#allocation2 + $0x1a0] sm:$0xff]
    %v3840 = vld [vmem:[#allocation2 + $0x1a8] sm:$0xff]
    %v3841 = vld [vmem:[#allocation2 + $0x1b0] sm:$0xff]
    %v3842 = vld [vmem:[#allocation2 + $0x1b8] sm:$0xff]
    %v3843 = vld [vmem:[#allocation2 + $0x1c0] sm:$0xff]
    %v3844 = vld [vmem:[#allocation2 + $0x1c8] sm:$0xff]
    %v3845 = vld [vmem:[#allocation2 + $0x1d0] sm:$0xff]
    %v3846 = vld [vmem:[#allocation2 + $0x1d8] sm:$0xff]
    %v3847 = vld [vmem:[#allocation2 + $0x1e0] sm:$0xff]
    %v3848 = vld [vmem:[#allocation2 + $0x1e8] sm:$0xff]
    %v3849 = vld [vmem:[#allocation2 + $0x1f0] sm:$0xff]
    %v3850 = vld [vmem:[#allocation2 + $0x1f8] sm:$0xff]
    %v3851 = vld [vmem:[#allocation2 + $0x200] sm:$0xff]
    %v3852 = vld [vmem:[#allocation2 + $0x208] sm:$0xff]
    %v3853 = vld [vmem:[#allocation2 + $0x210] sm:$0xff]
    %v3854 = vld [vmem:[#allocation2 + $0x218] sm:$0xff]
    %v3855 = vld [vmem:[#allocation2 + $0x220] sm:$0xff]
    %v3856 = vld [vmem:[#allocation2 + $0x228] sm:$0xff]
    %v3857 = vld [vmem:[#allocation2 + $0x230] sm:$0xff]
    %v3858 = vld [vmem:[#allocation2 + $0x238] sm:$0xff]
    %v3859 = vld [vmem:[#allocation2 + $0x240] sm:$0xff]
    %v3860 = vld [vmem:[#allocation2 + $0x248] sm:$0xff]
    %v3861 = vld [vmem:[#allocation2 + $0x250] sm:$0xff]
    %v3862 = vld [vmem:[#allocation2 + $0x258] sm:$0xff]
    %v3863 = vld [vmem:[#allocation2 + $0x260] sm:$0xff]
    %v3864 = vld [vmem:[#allocation2 + $0x268] sm:$0xff]
    %v3865 = vld [vmem:[#allocation2 + $0x270] sm:$0xff]
    %v3866 = vld [vmem:[#allocation2 + $0x278] sm:$0xff]
    %v3867 = vld [vmem:[#allocation2 + $0x280] sm:$0xff]
    %v3868 = vld [vmem:[#allocation2 + $0x288] sm:$0xff]
    %v3869 = vld [vmem:[#allocation2 + $0x290] sm:$0xff]
    %v3870 = vld [vmem:[#allocation2 + $0x298] sm:$0xff]
    %v3871 = vld [vmem:[#allocation2 + $0x2a0] sm:$0xff]
    %v3872 = vld [vmem:[#allocation2 + $0x2a8] sm:$0xff]
    %v3873 = vld [vmem:[#allocation2 + $0x2b0] sm:$0xff]
    %v3874 = vld [vmem:[#allocation2 + $0x2b8] sm:$0xff]
    %v3875 = vld [vmem:[#allocation2 + $0x2c0] sm:$0xff]
    %v3876 = vld [vmem:[#allocation2 + $0x2c8] sm:$0xff]
    %v3877 = vld [vmem:[#allocation2 + $0x2d0] sm:$0xff]
    %v3878 = vld [vmem:[#allocation2 + $0x2d8] sm:$0xff]
    %v3879 = vld [vmem:[#allocation2 + $0x2e0] sm:$0xff]
    %v3880 = vld [vmem:[#allocation2 + $0x2e8] sm:$0xff]
    %v3881 = vld [vmem:[#allocation2 + $0x2f0] sm:$0xff]
    %v3882 = vld [vmem:[#allocation2 + $0x2f8] sm:$0xff]
    %v3883 = vmul.f32 %v1796, 0.9
    %v3884 = vmul.f32 %v1797, 0.9
    %v3885 = vmul.f32 %v1798, 0.9
    %v3886 = vmul.f32 %v1799, 0.9
    %v3887 = vmul.f32 %v1800, 0.9
    %v3888 = vmul.f32 %v1801, 0.9
    %v3889 = vmul.f32 %v1802, 0.9
    %v3890 = vmul.f32 %v1803, 0.9
    %v3891 = vmul.f32 %v1804, 0.9
    %v3892 = vmul.f32 %v1805, 0.9
    %v3893 = vmul.f32 %v1806, 0.9
    %v3894 = vmul.f32 %v1807, 0.9
    %v3895 = vmul.f32 %v1808, 0.9
    %v3896 = vmul.f32 %v1809, 0.9
    %v3897 = vmul.f32 %v1810, 0.9
    %v3898 = vmul.f32 %v1811, 0.9
    %v3899 = vmul.f32 %v1812, 0.9
    %v3900 = vmul.f32 %v1813, 0.9
    %v3901 = vmul.f32 %v1814, 0.9
    %v3902 = vmul.f32 %v1815, 0.9
    %v3903 = vmul.f32 %v1816, 0.9
    %v3904 = vmul.f32 %v1817, 0.9
    %v3905 = vmul.f32 %v1818, 0.9
    %v3906 = vmul.f32 %v1819, 0.9
    %v3907 = vmul.f32 %v1820, 0.9
    %v3908 = vmul.f32 %v1821, 0.9
    %v3909 = vmul.f32 %v1822, 0.9
    %v3910 = vmul.f32 %v1823, 0.9
    %v3911 = vmul.f32 %v1824, 0.9
    %v3912 = vmul.f32 %v1825, 0.9
    %v3913 = vmul.f32 %v1826, 0.9
    %v3914 = vmul.f32 %v1827, 0.9
    %v3915 = vmul.f32 %v1828, 0.9
    %v3916 = vmul.f32 %v1829, 0.9
    %v3917 = vmul.f32 %v1830, 0.9
    %v3918 = vmul.f32 %v1831, 0.9
    %v3919 = vmul.f32 %v1832, 0.9
    %v3920 = vmul.f32 %v1833, 0.9
    %v3921 = vmul.f32 %v1834, 0.9
    %v3922 = vmul.f32 %v1835, 0.9
    %v3923 = vmul.f32 %v1836, 0.9
    %v3924 = vmul.f32 %v1837, 0.9
    %v3925 = vmul.f32 %v1838, 0.9
    %v3926 = vmul.f32 %v1839, 0.9
    %v3927 = vmul.f32 %v1840, 0.9
    %v3928 = vmul.f32 %v1841, 0.9
    %v3929 = vmul.f32 %v1842, 0.9
    %v3930 = vmul.f32 %v1843, 0.9
    %v3931 = vmul.f32 %v1844, 0.9
    %v3932 = vmul.f32 %v1845, 0.9
    %v3933 = vmul.f32 %v1846, 0.9
    %v3934 = vmul.f32 %v1847, 0.9
    %v3935 = vmul.f32 %v1848, 0.9
    %v3936 = vmul.f32 %v1849, 0.9
    %v3937 = vmul.f32 %v1850, 0.9
    %v3938 = vmul.f32 %v1851, 0.9
    %v3939 = vmul.f32 %v1852, 0.9
    %v3940 = vmul.f32 %v1853, 0.9
    %v3941 = vmul.f32 %v1854, 0.9
    %v3942 = vmul.f32 %v1855, 0.9
    %v3943 = vmul.f32 %v1856, 0.9
    %v3944 = vmul.f32 %v1857, 0.9
    %v3945 = vmul.f32 %v1858, 0.9
    %v3946 = vmul.f32 %v1859, 0.9
    %v3947 = vmul.f32 %v1860, 0.9
    %v3948 = vmul.f32 %v1861, 0.9
    %v3949 = vmul.f32 %v1862, 0.9
    %v3950 = vmul.f32 %v1863, 0.9
    %v3951 = vmul.f32 %v1864, 0.9
    %v3952 = vmul.f32 %v1865, 0.9
    %v3953 = vmul.f32 %v1866, 0.9
    %v3954 = vmul.f32 %v1867, 0.9
    %v3955 = vmul.f32 %v1868, 0.9
    %v3956 = vmul.f32 %v1869, 0.9
    %v3957 = vmul.f32 %v1870, 0.9
    %v3958 = vmul.f32 %v1871, 0.9
    %v3959 = vmul.f32 %v1872, 0.9
    %v3960 = vmul.f32 %v1873, 0.9
    %v3961 = vmul.f32 %v1874, 0.9
    %v3962 = vmul.f32 %v1875, 0.9
    %v3963 = vmul.f32 %v1876, 0.9
    %v3964 = vmul.f32 %v1877, 0.9
    %v3965 = vmul.f32 %v1878, 0.9
    %v3966 = vmul.f32 %v1879, 0.9
    %v3967 = vmul.f32 %v1880, 0.9
    %v3968 = vmul.f32 %v1881, 0.9
    %v3969 = vmul.f32 %v1882, 0.9
    %v3970 = vmul.f32 %v1883, 0.9
    %v3971 = vmul.f32 %v1884, 0.9
    %v3972 = vmul.f32 %v1885, 0.9
    %v3973 = vmul.f32 %v1886, 0.9
    %v3974 = vmul.f32 %v1887, 0.9
    %v3975 = vmul.f32 %v1888, 0.9
    %v3976 = vmul.f32 %v1889, 0.9
    %v3977 = vmul.f32 %v1890, 0.9
    %v3978 = vmul.f32 %v1891, 0.9
    %v3979 = vadd.f32 %v88, %v3883
    %v3980 = vadd.f32 %v89, %v3884
    %v3981 = vadd.f32 %v90, %v3885
    %v3982 = vadd.f32 %v91, %v3886
    %v3983 = vadd.f32 %v92, %v3887
    %v3984 = vadd.f32 %v93, %v3888
    %v3985 = vadd.f32 %v94, %v3889
    %v3986 = vadd.f32 %v95, %v3890
    %v3987 = vadd.f32 %v96, %v3891
    %v3988 = vadd.f32 %v97, %v3892
    %v3989 = vadd.f32 %v98, %v3893
    %v3990 = vadd.f32 %v99, %v3894
    %v3991 = vadd.f32 %v100, %v3895
    %v3992 = vadd.f32 %v101, %v3896
    %v3993 = vadd.f32 %v102, %v3897
    %v3994 = vadd.f32 %v103, %v3898
    %v3995 = vadd.f32 %v104, %v3899
    %v3996 = vadd.f32 %v105, %v3900
    %v3997 = vadd.f32 %v106, %v3901
    %v3998 = vadd.f32 %v107, %v3902
    %v3999 = vadd.f32 %v108, %v3903
    %v4000 = vadd.f32 %v109, %v3904
    %v4001 = vadd.f32 %v110, %v3905
    %v4002 = vadd.f32 %v111, %v3906
    %v4003 = vadd.f32 %v112, %v3907
    %v4004 = vadd.f32 %v113, %v3908
    %v4005 = vadd.f32 %v114, %v3909
    %v4006 = vadd.f32 %v115, %v3910
    %v4007 = vadd.f32 %v116, %v3911
    %v4008 = vadd.f32 %v117, %v3912
    %v4009 = vadd.f32 %v118, %v3913
    %v4010 = vadd.f32 %v119, %v3914
    %v4011 = vadd.f32 %v120, %v3915
    %v4012 = vadd.f32 %v121, %v3916
    %v4013 = vadd.f32 %v122, %v3917
    %v4014 = vadd.f32 %v123, %v3918
    %v4015 = vadd.f32 %v124, %v3919
    %v4016 = vadd.f32 %v125, %v3920
    %v4017 = vadd.f32 %v126, %v3921
    %v4018 = vadd.f32 %v127, %v3922
    %v4019 = vadd.f32 %v128, %v3923
    %v4020 = vadd.f32 %v129, %v3924
    %v4021 = vadd.f32 %v130, %v3925
    %v4022 = vadd.f32 %v131, %v3926
    %v4023 = vadd.f32 %v132, %v3927
    %v4024 = vadd.f32 %v133, %v3928
    %v4025 = vadd.f32 %v134, %v3929
    %v4026 = vadd.f32 %v135, %v3930
    %v4027 = vadd.f32 %v136, %v3931
    %v4028 = vadd.f32 %v137, %v3932
    %v4029 = vadd.f32 %v138, %v3933
    %v4030 = vadd.f32 %v139, %v3934
    %v4031 = vadd.f32 %v140, %v3935
    %v4032 = vadd.f32 %v141, %v3936
    %v4033 = vadd.f32 %v142, %v3937
    %v4034 = vadd.f32 %v143, %v3938
    %v4035 = vadd.f32 %v144, %v3939
    %v4036 = vadd.f32 %v145, %v3940
    %v4037 = vadd.f32 %v146, %v3941
    %v4038 = vadd.f32 %v147, %v3942
    %v4039 = vadd.f32 %v148, %v3943
    %v4040 = vadd.f32 %v149, %v3944
    %v4041 = vadd.f32 %v150, %v3945
    %v4042 = vadd.f32 %v151, %v3946
    %v4043 = vadd.f32 %v152, %v3947
    %v4044 = vadd.f32 %v153, %v3948
    %v4045 = vadd.f32 %v154, %v3949
    %v4046 = vadd.f32 %v155, %v3950
    %v4047 = vadd.f32 %v156, %v3951
    %v4048 = vadd.f32 %v157, %v3952
    %v4049 = vadd.f32 %v158, %v3953
    %v4050 = vadd.f32 %v159, %v3954
    %v4051 = vadd.f32 %v160, %v3955
    %v4052 = vadd.f32 %v161, %v3956
    %v4053 = vadd.f32 %v162, %v3957
    %v4054 = vadd.f32 %v163, %v3958
    %v4055 = vadd.f32 %v164, %v3959
    %v4056 = vadd.f32 %v165, %v3960
    %v4057 = vadd.f32 %v166, %v3961
    %v4058 = vadd.f32 %v167, %v3962
    %v4059 = vadd.f32 %v168, %v3963
    %v4060 = vadd.f32 %v169, %v3964
    %v4061 = vadd.f32 %v170, %v3965
    %v4062 = vadd.f32 %v171, %v3966
    %v4063 = vadd.f32 %v172, %v3967
    %v4064 = vadd.f32 %v173, %v3968
    %v4065 = vadd.f32 %v174, %v3969
    %v4066 = vadd.f32 %v175, %v3970
    %v4067 = vadd.f32 %v176, %v3971
    %v4068 = vadd.f32 %v177, %v3972
    %v4069 = vadd.f32 %v178, %v3973
    %v4070 = vadd.f32 %v179, %v3974
    %v4071 = vadd.f32 %v180, %v3975
    %v4072 = vadd.f32 %v181, %v3976
    %v4073 = vadd.f32 %v182, %v3977
    %v4074 = vadd.f32 %v183, %v3978
    %v4075 = vmax.f32 %v3979, 0.0
    %v4076 = vmax.f32 %v3980, 0.0
    %v4077 = vmax.f32 %v3981, 0.0
    %v4078 = vmax.f32 %v3982, 0.0
    %v4079 = vmax.f32 %v3983, 0.0
    %v4080 = vmax.f32 %v3984, 0.0
    %v4081 = vmax.f32 %v3985, 0.0
    %v4082 = vmax.f32 %v3986, 0.0
    %v4083 = vmax.f32 %v3987, 0.0
    %v4084 = vmax.f32 %v3988, 0.0
    %v4085 = vmax.f32 %v3989, 0.0
    %v4086 = vmax.f32 %v3990, 0.0
    %v4087 = vmax.f32 %v3991, 0.0
    %v4088 = vmax.f32 %v3992, 0.0
    %v4089 = vmax.f32 %v3993, 0.0
    %v4090 = vmax.f32 %v3994, 0.0
    %v4091 = vmax.f32 %v3995, 0.0
    %v4092 = vmax.f32 %v3996, 0.0
    %v4093 = vmax.f32 %v3997, 0.0
    %v4094 = vmax.f32 %v3998, 0.0
    %v4095 = vmax.f32 %v3999, 0.0
    %v4096 = vmax.f32 %v4000, 0.0
    %v4097 = vmax.f32 %v4001, 0.0
    %v4098 = vmax.f32 %v4002, 0.0
    %v4099 = vmax.f32 %v4003, 0.0
    %v4100 = vmax.f32 %v4004, 0.0
    %v4101 = vmax.f32 %v4005, 0.0
    %v4102 = vmax.f32 %v4006, 0.0
    %v4103 = vmax.f32 %v4007, 0.0
    %v4104 = vmax.f32 %v4008, 0.0
    %v4105 = vmax.f32 %v4009, 0.0
    %v4106 = vmax.f32 %v4010, 0.0
    %v4107 = vmax.f32 %v4011, 0.0
    %v4108 = vmax.f32 %v4012, 0.0
    %v4109 = vmax.f32 %v4013, 0.0
    %v4110 = vmax.f32 %v4014, 0.0
    %v4111 = vmax.f32 %v4015, 0.0
    %v4112 = vmax.f32 %v4016, 0.0
    %v4113 = vmax.f32 %v4017, 0.0
    %v4114 = vmax.f32 %v4018, 0.0
    %v4115 = vmax.f32 %v4019, 0.0
    %v4116 = vmax.f32 %v4020, 0.0
    %v4117 = vmax.f32 %v4021, 0.0
    %v4118 = vmax.f32 %v4022, 0.0
    %v4119 = vmax.f32 %v4023, 0.0
    %v4120 = vmax.f32 %v4024, 0.0
    %v4121 = vmax.f32 %v4025, 0.0
    %v4122 = vmax.f32 %v4026, 0.0
    %v4123 = vmax.f32 %v4027, 0.0
    %v4124 = vmax.f32 %v4028, 0.0
    %v4125 = vmax.f32 %v4029, 0.0
    %v4126 = vmax.f32 %v4030, 0.0
    %v4127 = vmax.f32 %v4031, 0.0
    %v4128 = vmax.f32 %v4032, 0.0
    %v4129 = vmax.f32 %v4033, 0.0
    %v4130 = vmax.f32 %v4034, 0.0
    %v4131 = vmax.f32 %v4035, 0.0
    %v4132 = vmax.f32 %v4036, 0.0
    %v4133 = vmax.f32 %v4037, 0.0
    %v4134 = vmax.f32 %v4038, 0.0
    %v4135 = vmax.f32 %v4039, 0.0
    %v4136 = vmax.f32 %v4040, 0.0
    %v4137 = vmax.f32 %v4041, 0.0
    %v4138 = vmax.f32 %v4042, 0.0
    %v4139 = vmax.f32 %v4043, 0.0
    %v4140 = vmax.f32 %v4044, 0.0
    %v4141 = vmax.f32 %v4045, 0.0
    %v4142 = vmax.f32 %v4046, 0.0
    %v4143 = vmax.f32 %v4047, 0.0
    %v4144 = vmax.f32 %v4048, 0.0
    %v4145 = vmax.f32 %v4049, 0.0
    %v4146 = vmax.f32 %v4050, 0.0
    %v4147 = vmax.f32 %v4051, 0.0
    %v4148 = vmax.f32 %v4052, 0.0
    %v4149 = vmax.f32 %v4053, 0.0
    %v4150 = vmax.f32 %v4054, 0.0
    %v4151 = vmax.f32 %v4055, 0.0
    %v4152 = vmax.f32 %v4056, 0.0
    %v4153 = vmax.f32 %v4057, 0.0
    %v4154 = vmax.f32 %v4058, 0.0
    %v4155 = vmax.f32 %v4059, 0.0
    %v4156 = vmax.f32 %v4060, 0.0
    %v4157 = vmax.f32 %v4061, 0.0
    %v4158 = vmax.f32 %v4062, 0.0
    %v4159 = vmax.f32 %v4063, 0.0
    %v4160 = vmax.f32 %v4064, 0.0
    %v4161 = vmax.f32 %v4065, 0.0
    %v4162 = vmax.f32 %v4066, 0.0
    %v4163 = vmax.f32 %v4067, 0.0
    %v4164 = vmax.f32 %v4068, 0.0
    %v4165 = vmax.f32 %v4069, 0.0
    %v4166 = vmax.f32 %v4070, 0.0
    %v4167 = vmax.f32 %v4071, 0.0
    %v4168 = vmax.f32 %v4072, 0.0
    %v4169 = vmax.f32 %v4073, 0.0
    %v4170 = vmax.f32 %v4074, 0.0
    %v4171 = vmin.f32 %v4075, 1.0
    %v4172 = vmin.f32 %v4076, 1.0
    %v4173 = vmin.f32 %v4077, 1.0
    %v4174 = vmin.f32 %v4078, 1.0
    %v4175 = vmin.f32 %v4079, 1.0
    %v4176 = vmin.f32 %v4080, 1.0
    %v4177 = vmin.f32 %v4081, 1.0
    %v4178 = vmin.f32 %v4082, 1.0
    %v4179 = vmin.f32 %v4083, 1.0
    %v4180 = vmin.f32 %v4084, 1.0
    %v4181 = vmin.f32 %v4085, 1.0
    %v4182 = vmin.f32 %v4086, 1.0
    %v4183 = vmin.f32 %v4087, 1.0
    %v4184 = vmin.f32 %v4088, 1.0
    %v4185 = vmin.f32 %v4089, 1.0
    %v4186 = vmin.f32 %v4090, 1.0
    %v4187 = vmin.f32 %v4091, 1.0
    %v4188 = vmin.f32 %v4092, 1.0
    %v4189 = vmin.f32 %v4093, 1.0
    %v4190 = vmin.f32 %v4094, 1.0
    %v4191 = vmin.f32 %v4095, 1.0
    %v4192 = vmin.f32 %v4096, 1.0
    %v4193 = vmin.f32 %v4097, 1.0
    %v4194 = vmin.f32 %v4098, 1.0
    %v4195 = vmin.f32 %v4099, 1.0
    %v4196 = vmin.f32 %v4100, 1.0
    %v4197 = vmin.f32 %v4101, 1.0
    %v4198 = vmin.f32 %v4102, 1.0
    %v4199 = vmin.f32 %v4103, 1.0
    %v4200 = vmin.f32 %v4104, 1.0
    %v4201 = vmin.f32 %v4105, 1.0
    %v4202 = vmin.f32 %v4106, 1.0
    %v4203 = vmin.f32 %v4107, 1.0
    %v4204 = vmin.f32 %v4108, 1.0
    %v4205 = vmin.f32 %v4109, 1.0
    %v4206 = vmin.f32 %v4110, 1.0
    %v4207 = vmin.f32 %v4111, 1.0
    %v4208 = vmin.f32 %v4112, 1.0
    %v4209 = vmin.f32 %v4113, 1.0
    %v4210 = vmin.f32 %v4114, 1.0
    %v4211 = vmin.f32 %v4115, 1.0
    %v4212 = vmin.f32 %v4116, 1.0
    %v4213 = vmin.f32 %v4117, 1.0
    %v4214 = vmin.f32 %v4118, 1.0
    %v4215 = vmin.f32 %v4119, 1.0
    %v4216 = vmin.f32 %v4120, 1.0
    %v4217 = vmin.f32 %v4121, 1.0
    %v4218 = vmin.f32 %v4122, 1.0
    %v4219 = vmin.f32 %v4123, 1.0
    %v4220 = vmin.f32 %v4124, 1.0
    %v4221 = vmin.f32 %v4125, 1.0
    %v4222 = vmin.f32 %v4126, 1.0
    %v4223 = vmin.f32 %v4127, 1.0
    %v4224 = vmin.f32 %v4128, 1.0
    %v4225 = vmin.f32 %v4129, 1.0
    %v4226 = vmin.f32 %v4130, 1.0
    %v4227 = vmin.f32 %v4131, 1.0
    %v4228 = vmin.f32 %v4132, 1.0
    %v4229 = vmin.f32 %v4133, 1.0
    %v4230 = vmin.f32 %v4134, 1.0
    %v4231 = vmin.f32 %v4135, 1.0
    %v4232 = vmin.f32 %v4136, 1.0
    %v4233 = vmin.f32 %v4137, 1.0
    %v4234 = vmin.f32 %v4138, 1.0
    %v4235 = vmin.f32 %v4139, 1.0
    %v4236 = vmin.f32 %v4140, 1.0
    %v4237 = vmin.f32 %v4141, 1.0
    %v4238 = vmin.f32 %v4142, 1.0
    %v4239 = vmin.f32 %v4143, 1.0
    %v4240 = vmin.f32 %v4144, 1.0
    %v4241 = vmin.f32 %v4145, 1.0
    %v4242 = vmin.f32 %v4146, 1.0
    %v4243 = vmin.f32 %v4147, 1.0
    %v4244 = vmin.f32 %v4148, 1.0
    %v4245 = vmin.f32 %v4149, 1.0
    %v4246 = vmin.f32 %v4150, 1.0
    %v4247 = vmin.f32 %v4151, 1.0
    %v4248 = vmin.f32 %v4152, 1.0
    %v4249 = vmin.f32 %v4153, 1.0
    %v4250 = vmin.f32 %v4154, 1.0
    %v4251 = vmin.f32 %v4155, 1.0
    %v4252 = vmin.f32 %v4156, 1.0
    %v4253 = vmin.f32 %v4157, 1.0
    %v4254 = vmin.f32 %v4158, 1.0
    %v4255 = vmin.f32 %v4159, 1.0
    %v4256 = vmin.f32 %v4160, 1.0
    %v4257 = vmin.f32 %v4161, 1.0
    %v4258 = vmin.f32 %v4162, 1.0
    %v4259 = vmin.f32 %v4163, 1.0
    %v4260 = vmin.f32 %v4164, 1.0
    %v4261 = vmin.f32 %v4165, 1.0
    %v4262 = vmin.f32 %v4166, 1.0
    %v4263 = vmin.f32 %v4167, 1.0
    %v4264 = vmin.f32 %v4168, 1.0
    %v4265 = vmin.f32 %v4169, 1.0
    %v4266 = vmin.f32 %v4170, 1.0
    %v4267 = vmul.f32 %v3787, %v4171
    %v4268 = vmul.f32 %v3788, %v4172
    %v4269 = vmul.f32 %v3789, %v4173
    %v4270 = vmul.f32 %v3790, %v4174
    %v4271 = vmul.f32 %v3791, %v4175
    %v4272 = vmul.f32 %v3792, %v4176
    %v4273 = vmul.f32 %v3793, %v4177
    %v4274 = vmul.f32 %v3794, %v4178
    %v4275 = vmul.f32 %v3795, %v4179
    %v4276 = vmul.f32 %v3796, %v4180
    %v4277 = vmul.f32 %v3797, %v4181
    %v4278 = vmul.f32 %v3798, %v4182
    %v4279 = vmul.f32 %v3799, %v4183
    %v4280 = vmul.f32 %v3800, %v4184
    %v4281 = vmul.f32 %v3801, %v4185
    %v4282 = vmul.f32 %v3802, %v4186
    %v4283 = vmul.f32 %v3803, %v4187
    %v4284 = vmul.f32 %v3804, %v4188
    %v4285 = vmul.f32 %v3805, %v4189
    %v4286 = vmul.f32 %v3806, %v4190
    %v4287 = vmul.f32 %v3807, %v4191
    %v4288 = vmul.f32 %v3808, %v4192
    %v4289 = vmul.f32 %v3809, %v4193
    %v4290 = vmul.f32 %v3810, %v4194
    %v4291 = vmul.f32 %v3811, %v4195
    %v4292 = vmul.f32 %v3812, %v4196
    %v4293 = vmul.f32 %v3813, %v4197
    %v4294 = vmul.f32 %v3814, %v4198
    %v4295 = vmul.f32 %v3815, %v4199
    %v4296 = vmul.f32 %v3816, %v4200
    %v4297 = vmul.f32 %v3817, %v4201
    %v4298 = vmul.f32 %v3818, %v4202
    %v4299 = vmul.f32 %v3819, %v4203
    %v4300 = vmul.f32 %v3820, %v4204
    %v4301 = vmul.f32 %v3821, %v4205
    %v4302 = vmul.f32 %v3822, %v4206
    %v4303 = vmul.f32 %v3823, %v4207
    %v4304 = vmul.f32 %v3824, %v4208
    %v4305 = vmul.f32 %v3825, %v4209
    %v4306 = vmul.f32 %v3826, %v4210
    %v4307 = vmul.f32 %v3827, %v4211
    %v4308 = vmul.f32 %v3828, %v4212
    %v4309 = vmul.f32 %v3829, %v4213
    %v4310 = vmul.f32 %v3830, %v4214
    %v4311 = vmul.f32 %v3831, %v4215
    %v4312 = vmul.f32 %v3832, %v4216
    %v4313 = vmul.f32 %v3833, %v4217
    %v4314 = vmul.f32 %v3834, %v4218
    %v4315 = vmul.f32 %v3835, %v4219
    %v4316 = vmul.f32 %v3836, %v4220
    %v4317 = vmul.f32 %v3837, %v4221
    %v4318 = vmul.f32 %v3838, %v4222
    %v4319 = vmul.f32 %v3839, %v4223
    %v4320 = vmul.f32 %v3840, %v4224
    %v4321 = vmul.f32 %v3841, %v4225
    %v4322 = vmul.f32 %v3842, %v4226
    %v4323 = vmul.f32 %v3843, %v4227
    %v4324 = vmul.f32 %v3844, %v4228
    %v4325 = vmul.f32 %v3845, %v4229
    %v4326 = vmul.f32 %v3846, %v4230
    %v4327 = vmul.f32 %v3847, %v4231
    %v4328 = vmul.f32 %v3848, %v4232
    %v4329 = vmul.f32 %v3849, %v4233
    %v4330 = vmul.f32 %v3850, %v4234
    %v4331 = vmul.f32 %v3851, %v4235
    %v4332 = vmul.f32 %v3852, %v4236
    %v4333 = vmul.f32 %v3853, %v4237
    %v4334 = vmul.f32 %v3854, %v4238
    %v4335 = vmul.f32 %v3855, %v4239
    %v4336 = vmul.f32 %v3856, %v4240
    %v4337 = vmul.f32 %v3857, %v4241
    %v4338 = vmul.f32 %v3858, %v4242
    %v4339 = vmul.f32 %v3859, %v4243
    %v4340 = vmul.f32 %v3860, %v4244
    %v4341 = vmul.f32 %v3861, %v4245
    %v4342 = vmul.f32 %v3862, %v4246
    %v4343 = vmul.f32 %v3863, %v4247
    %v4344 = vmul.f32 %v3864, %v4248
    %v4345 = vmul.f32 %v3865, %v4249
    %v4346 = vmul.f32 %v3866, %v4250
    %v4347 = vmul.f32 %v3867, %v4251
    %v4348 = vmul.f32 %v3868, %v4252
    %v4349 = vmul.f32 %v3869, %v4253
    %v4350 = vmul.f32 %v3870, %v4254
    %v4351 = vmul.f32 %v3871, %v4255
    %v4352 = vmul.f32 %v3872, %v4256
    %v4353 = vmul.f32 %v3873, %v4257
    %v4354 = vmul.f32 %v3874, %v4258
    %v4355 = vmul.f32 %v3875, %v4259
    %v4356 = vmul.f32 %v3876, %v4260
    %v4357 = vmul.f32 %v3877, %v4261
    %v4358 = vmul.f32 %v3878, %v4262
    %v4359 = vmul.f32 %v3879, %v4263
    %v4360 = vmul.f32 %v3880, %v4264
    %v4361 = vmul.f32 %v3881, %v4265
    %v4362 = vmul.f32 %v3882, %v4266
    %v4363 = vsub.f32 1.0, %v3787
    %v4364 = vsub.f32 1.0, %v3788
    %v4365 = vsub.f32 1.0, %v3789
    %v4366 = vsub.f32 1.0, %v3790
    %v4367 = vsub.f32 1.0, %v3791
    %v4368 = vsub.f32 1.0, %v3792
    %v4369 = vsub.f32 1.0, %v3793
    %v4370 = vsub.f32 1.0, %v3794
    %v4371 = vsub.f32 1.0, %v3795
    %v4372 = vsub.f32 1.0, %v3796
    %v4373 = vsub.f32 1.0, %v3797
    %v4374 = vsub.f32 1.0, %v3798
    %v4375 = vsub.f32 1.0, %v3799
    %v4376 = vsub.f32 1.0, %v3800
    %v4377 = vsub.f32 1.0, %v3801
    %v4378 = vsub.f32 1.0, %v3802
    %v4379 = vsub.f32 1.0, %v3803
    %v4380 = vsub.f32 1.0, %v3804
    %v4381 = vsub.f32 1.0, %v3805
    %v4382 = vsub.f32 1.0, %v3806
    %v4383 = vsub.f32 1.0, %v3807
    %v4384 = vsub.f32 1.0, %v3808
    %v4385 = vsub.f32 1.0, %v3809
    %v4386 = vsub.f32 1.0, %v3810
    %v4387 = vsub.f32 1.0, %v3811
    %v4388 = vsub.f32 1.0, %v3812
    %v4389 = vsub.f32 1.0, %v3813
    %v4390 = vsub.f32 1.0, %v3814
    %v4391 = vsub.f32 1.0, %v3815
    %v4392 = vsub.f32 1.0, %v3816
    %v4393 = vsub.f32 1.0, %v3817
    %v4394 = vsub.f32 1.0, %v3818
    %v4395 = vsub.f32 1.0, %v3819
    %v4396 = vsub.f32 1.0, %v3820
    %v4397 = vsub.f32 1.0, %v3821
    %v4398 = vsub.f32 1.0, %v3822
    %v4399 = vsub.f32 1.0, %v3823
    %v4400 = vsub.f32 1.0, %v3824
    %v4401 = vsub.f32 1.0, %v3825
    %v4402 = vsub.f32 1.0, %v3826
    %v4403 = vsub.f32 1.0, %v3827
    %v4404 = vsub.f32 1.0, %v3828
    %v4405 = vsub.f32 1.0, %v3829
    %v4406 = vsub.f32 1.0, %v3830
    %v4407 = vsub.f32 1.0, %v3831
    %v4408 = vsub.f32 1.0, %v3832
    %v4409 = vsub.f32 1.0, %v3833
    %v4410 = vsub.f32 1.0, %v3834
    %v4411 = vsub.f32 1.0, %v3835
    %v4412 = vsub.f32 1.0, %v3836
    %v4413 = vsub.f32 1.0, %v3837
    %v4414 = vsub.f32 1.0, %v3838
    %v4415 = vsub.f32 1.0, %v3839
    %v4416 = vsub.f32 1.0, %v3840
    %v4417 = vsub.f32 1.0, %v3841
    %v4418 = vsub.f32 1.0, %v3842
    %v4419 = vsub.f32 1.0, %v3843
    %v4420 = vsub.f32 1.0, %v3844
    %v4421 = vsub.f32 1.0, %v3845
    %v4422 = vsub.f32 1.0, %v3846
    %v4423 = vsub.f32 1.0, %v3847
    %v4424 = vsub.f32 1.0, %v3848
    %v4425 = vsub.f32 1.0, %v3849
    %v4426 = vsub.f32 1.0, %v3850
    %v4427 = vsub.f32 1.0, %v3851
    %v4428 = vsub.f32 1.0, %v3852
    %v4429 = vsub.f32 1.0, %v3853
    %v4430 = vsub.f32 1.0, %v3854
    %v4431 = vsub.f32 1.0, %v3855
    %v4432 = vsub.f32 1.0, %v3856
    %v4433 = vsub.f32 1.0, %v3857
    %v4434 = vsub.f32 1.0, %v3858
    %v4435 = vsub.f32 1.0, %v3859
    %v4436 = vsub.f32 1.0, %v3860
    %v4437 = vsub.f32 1.0, %v3861
    %v4438 = vsub.f32 1.0, %v3862
    %v4439 = vsub.f32 1.0, %v3863
    %v4440 = vsub.f32 1.0, %v3864
    %v4441 = vsub.f32 1.0, %v3865
    %v4442 = vsub.f32 1.0, %v3866
    %v4443 = vsub.f32 1.0, %v3867
    %v4444 = vsub.f32 1.0, %v3868
    %v4445 = vsub.f32 1.0, %v3869
    %v4446 = vsub.f32 1.0, %v3870
    %v4447 = vsub.f32 1.0, %v3871
    %v4448 = vsub.f32 1.0, %v3872
    %v4449 = vsub.f32 1.0, %v3873
    %v4450 = vsub.f32 1.0, %v3874
    %v4451 = vsub.f32 1.0, %v3875
    %v4452 = vsub.f32 1.0, %v3876
    %v4453 = vsub.f32 1.0, %v3877
    %v4454 = vsub.f32 1.0, %v3878
    %v4455 = vsub.f32 1.0, %v3879
    %v4456 = vsub.f32 1.0, %v3880
    %v4457 = vsub.f32 1.0, %v3881
    %v4458 = vsub.f32 1.0, %v3882
    %v4459 = vmul.f32 %v4363, %v88
    %v4460 = vmul.f32 %v4364, %v89
    %v4461 = vmul.f32 %v4365, %v90
    %v4462 = vmul.f32 %v4366, %v91
    %v4463 = vmul.f32 %v4367, %v92
    %v4464 = vmul.f32 %v4368, %v93
    %v4465 = vmul.f32 %v4369, %v94
    %v4466 = vmul.f32 %v4370, %v95
    %v4467 = vmul.f32 %v4371, %v96
    %v4468 = vmul.f32 %v4372, %v97
    %v4469 = vmul.f32 %v4373, %v98
    %v4470 = vmul.f32 %v4374, %v99
    %v4471 = vmul.f32 %v4375, %v100
    %v4472 = vmul.f32 %v4376, %v101
    %v4473 = vmul.f32 %v4377, %v102
    %v4474 = vmul.f32 %v4378, %v103
    %v4475 = vmul.f32 %v4379, %v104
    %v4476 = vmul.f32 %v4380, %v105
    %v4477 = vmul.f32 %v4381, %v106
    %v4478 = vmul.f32 %v4382, %v107
    %v4479 = vmul.f32 %v4383, %v108
    %v4480 = vmul.f32 %v4384, %v109
    %v4481 = vmul.f32 %v4385, %v110
    %v4482 = vmul.f32 %v4386, %v111
    %v4483 = vmul.f32 %v4387, %v112
    %v4484 = vmul.f32 %v4388, %v113
    %v4485 = vmul.f32 %v4389, %v114
    %v4486 = vmul.f32 %v4390, %v115
    %v4487 = vmul.f32 %v4391, %v116
    %v4488 = vmul.f32 %v4392, %v117
    %v4489 = vmul.f32 %v4393, %v118
    %v4490 = vmul.f32 %v4394, %v119
    %v4491 = vmul.f32 %v4395, %v120
    %v4492 = vmul.f32 %v4396, %v121
    %v4493 = vmul.f32 %v4397, %v122
    %v4494 = vmul.f32 %v4398, %v123
    %v4495 = vmul.f32 %v4399, %v124
    %v4496 = vmul.f32 %v4400, %v125
    %v4497 = vmul.f32 %v4401, %v126
    %v4498 = vmul.f32 %v4402, %v127
    %v4499 = vmul.f32 %v4403, %v128
    %v4500 = vmul.f32 %v4404, %v129
    %v4501 = vmul.f32 %v4405, %v130
    %v4502 = vmul.f32 %v4406, %v131
    %v4503 = vmul.f32 %v4407, %v132
    %v4504 = vmul.f32 %v4408, %v133
    %v4505 = vmul.f32 %v4409, %v134
    %v4506 = vmul.f32 %v4410, %v135
    %v4507 = vmul.f32 %v4411, %v136
    %v4508 = vmul.f32 %v4412, %v137
    %v4509 = vmul.f32 %v4413, %v138
    %v4510 = vmul.f32 %v4414, %v139
    %v4511 = vmul.f32 %v4415, %v140
    %v4512 = vmul.f32 %v4416, %v141
    %v4513 = vmul.f32 %v4417, %v142
    %v4514 = vmul.f32 %v4418, %v143
    %v4515 = vmul.f32 %v4419, %v144
    %v4516 = vmul.f32 %v4420, %v145
    %v4517 = vmul.f32 %v4421, %v146
    %v4518 = vmul.f32 %v4422, %v147
    %v4519 = vmul.f32 %v4423, %v148
    %v4520 = vmul.f32 %v4424, %v149
    %v4521 = vmul.f32 %v4425, %v150
    %v4522 = vmul.f32 %v4426, %v151
    %v4523 = vmul.f32 %v4427, %v152
    %v4524 = vmul.f32 %v4428, %v153
    %v4525 = vmul.f32 %v4429, %v154
    %v4526 = vmul.f32 %v4430, %v155
    %v4527 = vmul.f32 %v4431, %v156
    %v4528 = vmul.f32 %v4432, %v157
    %v4529 = vmul.f32 %v4433, %v158
    %v4530 = vmul.f32 %v4434, %v159
    %v4531 = vmul.f32 %v4435, %v160
    %v4532 = vmul.f32 %v4436, %v161
    %v4533 = vmul.f32 %v4437, %v162
    %v4534 = vmul.f32 %v4438, %v163
    %v4535 = vmul.f32 %v4439, %v164
    %v4536 = vmul.f32 %v4440, %v165
    %v4537 = vmul.f32 %v4441, %v166
    %v4538 = vmul.f32 %v4442, %v167
    %v4539 = vmul.f32 %v4443, %v168
    %v4540 = vmul.f32 %v4444, %v169
    %v4541 = vmul.f32 %v4445, %v170
    %v4542 = vmul.f32 %v4446, %v171
    %v4543 = vmul.f32 %v4447, %v172
    %v4544 = vmul.f32 %v4448, %v173
    %v4545 = vmul.f32 %v4449, %v174
    %v4546 = vmul.f32 %v4450, %v175
    %v4547 = vmul.f32 %v4451, %v176
    %v4548 = vmul.f32 %v4452, %v177
    %v4549 = vmul.f32 %v4453, %v178
    %v4550 = vmul.f32 %v4454, %v179
    %v4551 = vmul.f32 %v4455, %v180
    %v4552 = vmul.f32 %v4456, %v181
    %v4553 = vmul.f32 %v4457, %v182
    %v4554 = vmul.f32 %v4458, %v183
    %v4555 = vadd.f32 %v4267, %v4459
    %v4556 = vadd.f32 %v4268, %v4460
    %v4557 = vadd.f32 %v4269, %v4461
    %v4558 = vadd.f32 %v4270, %v4462
    %v4559 = vadd.f32 %v4271, %v4463
    %v4560 = vadd.f32 %v4272, %v4464
    %v4561 = vadd.f32 %v4273, %v4465
    %v4562 = vadd.f32 %v4274, %v4466
    %v4563 = vadd.f32 %v4275, %v4467
    %v4564 = vadd.f32 %v4276, %v4468
    %v4565 = vadd.f32 %v4277, %v4469
    %v4566 = vadd.f32 %v4278, %v4470
    %v4567 = vadd.f32 %v4279, %v4471
    %v4568 = vadd.f32 %v4280, %v4472
    %v4569 = vadd.f32 %v4281, %v4473
    %v4570 = vadd.f32 %v4282, %v4474
    %v4571 = vadd.f32 %v4283, %v4475
    %v4572 = vadd.f32 %v4284, %v4476
    %v4573 = vadd.f32 %v4285, %v4477
    %v4574 = vadd.f32 %v4286, %v4478
    %v4575 = vadd.f32 %v4287, %v4479
    %v4576 = vadd.f32 %v4288, %v4480
    %v4577 = vadd.f32 %v4289, %v4481
    %v4578 = vadd.f32 %v4290, %v4482
    %v4579 = vadd.f32 %v4291, %v4483
    %v4580 = vadd.f32 %v4292, %v4484
    %v4581 = vadd.f32 %v4293, %v4485
    %v4582 = vadd.f32 %v4294, %v4486
    %v4583 = vadd.f32 %v4295, %v4487
    %v4584 = vadd.f32 %v4296, %v4488
    %v4585 = vadd.f32 %v4297, %v4489
    %v4586 = vadd.f32 %v4298, %v4490
    %v4587 = vadd.f32 %v4299, %v4491
    %v4588 = vadd.f32 %v4300, %v4492
    %v4589 = vadd.f32 %v4301, %v4493
    %v4590 = vadd.f32 %v4302, %v4494
    %v4591 = vadd.f32 %v4303, %v4495
    %v4592 = vadd.f32 %v4304, %v4496
    %v4593 = vadd.f32 %v4305, %v4497
    %v4594 = vadd.f32 %v4306, %v4498
    %v4595 = vadd.f32 %v4307, %v4499
    %v4596 = vadd.f32 %v4308, %v4500
    %v4597 = vadd.f32 %v4309, %v4501
    %v4598 = vadd.f32 %v4310, %v4502
    %v4599 = vadd.f32 %v4311, %v4503
    %v4600 = vadd.f32 %v4312, %v4504
    %v4601 = vadd.f32 %v4313, %v4505
    %v4602 = vadd.f32 %v4314, %v4506
    %v4603 = vadd.f32 %v4315, %v4507
    %v4604 = vadd.f32 %v4316, %v4508
    %v4605 = vadd.f32 %v4317, %v4509
    %v4606 = vadd.f32 %v4318, %v4510
    %v4607 = vadd.f32 %v4319, %v4511
    %v4608 = vadd.f32 %v4320, %v4512
    %v4609 = vadd.f32 %v4321, %v4513
    %v4610 = vadd.f32 %v4322, %v4514
    %v4611 = vadd.f32 %v4323, %v4515
    %v4612 = vadd.f32 %v4324, %v4516
    %v4613 = vadd.f32 %v4325, %v4517
    %v4614 = vadd.f32 %v4326, %v4518
    %v4615 = vadd.f32 %v4327, %v4519
    %v4616 = vadd.f32 %v4328, %v4520
    %v4617 = vadd.f32 %v4329, %v4521
    %v4618 = vadd.f32 %v4330, %v4522
    %v4619 = vadd.f32 %v4331, %v4523
    %v4620 = vadd.f32 %v4332, %v4524
    %v4621 = vadd.f32 %v4333, %v4525
    %v4622 = vadd.f32 %v4334, %v4526
    %v4623 = vadd.f32 %v4335, %v4527
    %v4624 = vadd.f32 %v4336, %v4528
    %v4625 = vadd.f32 %v4337, %v4529
    %v4626 = vadd.f32 %v4338, %v4530
    %v4627 = vadd.f32 %v4339, %v4531
    %v4628 = vadd.f32 %v4340, %v4532
    %v4629 = vadd.f32 %v4341, %v4533
    %v4630 = vadd.f32 %v4342, %v4534
    %v4631 = vadd.f32 %v4343, %v4535
    %v4632 = vadd.f32 %v4344, %v4536
    %v4633 = vadd.f32 %v4345, %v4537
    %v4634 = vadd.f32 %v4346, %v4538
    %v4635 = vadd.f32 %v4347, %v4539
    %v4636 = vadd.f32 %v4348, %v4540
    %v4637 = vadd.f32 %v4349, %v4541
    %v4638 = vadd.f32 %v4350, %v4542
    %v4639 = vadd.f32 %v4351, %v4543
    %v4640 = vadd.f32 %v4352, %v4544
    %v4641 = vadd.f32 %v4353, %v4545
    %v4642 = vadd.f32 %v4354, %v4546
    %v4643 = vadd.f32 %v4355, %v4547
    %v4644 = vadd.f32 %v4356, %v4548
    %v4645 = vadd.f32 %v4357, %v4549
    %v4646 = vadd.f32 %v4358, %v4550
    %v4647 = vadd.f32 %v4359, %v4551
    %v4648 = vadd.f32 %v4360, %v4552
    %v4649 = vadd.f32 %v4361, %v4553
    %v4650 = vadd.f32 %v4362, %v4554
    %4651 = vst [vmem:[#allocation9] sm:$0xff] %v4555
    %4652 = vst [vmem:[#allocation9 + $0x8] sm:$0xff] %v4556
    %4653 = vst [vmem:[#allocation9 + $0x10] sm:$0xff] %v4557
    %4654 = vst [vmem:[#allocation9 + $0x18] sm:$0xff] %v4558
    %4655 = vst [vmem:[#allocation9 + $0x20] sm:$0xff] %v4559
    %4656 = vst [vmem:[#allocation9 + $0x28] sm:$0xff] %v4560
    %4657 = vst [vmem:[#allocation9 + $0x30] sm:$0xff] %v4561
    %4658 = vst [vmem:[#allocation9 + $0x38] sm:$0xff] %v4562
    %4659 = vst [vmem:[#allocation9 + $0x40] sm:$0xff] %v4563
    %4660 = vst [vmem:[#allocation9 + $0x48] sm:$0xff] %v4564
    %4661 = vst [vmem:[#allocation9 + $0x50] sm:$0xff] %v4565
    %4662 = vst [vmem:[#allocation9 + $0x58] sm:$0xff] %v4566
    %4663 = vst [vmem:[#allocation9 + $0x60] sm:$0xff] %v4567
    %4664 = vst [vmem:[#allocation9 + $0x68] sm:$0xff] %v4568
    %4665 = vst [vmem:[#allocation9 + $0x70] sm:$0xff] %v4569
    %4666 = vst [vmem:[#allocation9 + $0x78] sm:$0xff] %v4570
    %4667 = vst [vmem:[#allocation9 + $0x80] sm:$0xff] %v4571
    %4668 = vst [vmem:[#allocation9 + $0x88] sm:$0xff] %v4572
    %4669 = vst [vmem:[#allocation9 + $0x90] sm:$0xff] %v4573
    %4670 = vst [vmem:[#allocation9 + $0x98] sm:$0xff] %v4574
    %4671 = vst [vmem:[#allocation9 + $0xa0] sm:$0xff] %v4575
    %4672 = vst [vmem:[#allocation9 + $0xa8] sm:$0xff] %v4576
    %4673 = vst [vmem:[#allocation9 + $0xb0] sm:$0xff] %v4577
    %4674 = vst [vmem:[#allocation9 + $0xb8] sm:$0xff] %v4578
    %4675 = vst [vmem:[#allocation9 + $0xc0] sm:$0xff] %v4579
    %4676 = vst [vmem:[#allocation9 + $0xc8] sm:$0xff] %v4580
    %4677 = vst [vmem:[#allocation9 + $0xd0] sm:$0xff] %v4581
    %4678 = vst [vmem:[#allocation9 + $0xd8] sm:$0xff] %v4582
    %4679 = vst [vmem:[#allocation9 + $0xe0] sm:$0xff] %v4583
    %4680 = vst [vmem:[#allocation9 + $0xe8] sm:$0xff] %v4584
    %4681 = vst [vmem:[#allocation9 + $0xf0] sm:$0xff] %v4585
    %4682 = vst [vmem:[#allocation9 + $0xf8] sm:$0xff] %v4586
    %4683 = vst [vmem:[#allocation9 + $0x100] sm:$0xff] %v4587
    %4684 = vst [vmem:[#allocation9 + $0x108] sm:$0xff] %v4588
    %4685 = vst [vmem:[#allocation9 + $0x110] sm:$0xff] %v4589
    %4686 = vst [vmem:[#allocation9 + $0x118] sm:$0xff] %v4590
    %4687 = vst [vmem:[#allocation9 + $0x120] sm:$0xff] %v4591
    %4688 = vst [vmem:[#allocation9 + $0x128] sm:$0xff] %v4592
    %4689 = vst [vmem:[#allocation9 + $0x130] sm:$0xff] %v4593
    %4690 = vst [vmem:[#allocation9 + $0x138] sm:$0xff] %v4594
    %4691 = vst [vmem:[#allocation9 + $0x140] sm:$0xff] %v4595
    %4692 = vst [vmem:[#allocation9 + $0x148] sm:$0xff] %v4596
    %4693 = vst [vmem:[#allocation9 + $0x150] sm:$0xff] %v4597
    %4694 = vst [vmem:[#allocation9 + $0x158] sm:$0xff] %v4598
    %4695 = vst [vmem:[#allocation9 + $0x160] sm:$0xff] %v4599
    %4696 = vst [vmem:[#allocation9 + $0x168] sm:$0xff] %v4600
    %4697 = vst [vmem:[#allocation9 + $0x170] sm:$0xff] %v4601
    %4698 = vst [vmem:[#allocation9 + $0x178] sm:$0xff] %v4602
    %4699 = vst [vmem:[#allocation9 + $0x180] sm:$0xff] %v4603
    %4700 = vst [vmem:[#allocation9 + $0x188] sm:$0xff] %v4604
    %4701 = vst [vmem:[#allocation9 + $0x190] sm:$0xff] %v4605
    %4702 = vst [vmem:[#allocation9 + $0x198] sm:$0xff] %v4606
    %4703 = vst [vmem:[#allocation9 + $0x1a0] sm:$0xff] %v4607
    %4704 = vst [vmem:[#allocation9 + $0x1a8] sm:$0xff] %v4608
    %4705 = vst [vmem:[#allocation9 + $0x1b0] sm:$0xff] %v4609
    %4706 = vst [vmem:[#allocation9 + $0x1b8] sm:$0xff] %v4610
    %4707 = vst [vmem:[#allocation9 + $0x1c0] sm:$0xff] %v4611
    %4708 = vst [vmem:[#allocation9 + $0x1c8] sm:$0xff] %v4612
    %4709 = vst [vmem:[#allocation9 + $0x1d0] sm:$0xff] %v4613
    %4710 = vst [vmem:[#allocation9 + $0x1d8] sm:$0xff] %v4614
    %4711 = vst [vmem:[#allocation9 + $0x1e0] sm:$0xff] %v4615
    %4712 = vst [vmem:[#allocation9 + $0x1e8] sm:$0xff] %v4616
    %4713 = vst [vmem:[#allocation9 + $0x1f0] sm:$0xff] %v4617
    %4714 = vst [vmem:[#allocation9 + $0x1f8] sm:$0xff] %v4618
    %4715 = vst [vmem:[#allocation9 + $0x200] sm:$0xff] %v4619
    %4716 = vst [vmem:[#allocation9 + $0x208] sm:$0xff] %v4620
    %4717 = vst [vmem:[#allocation9 + $0x210] sm:$0xff] %v4621
    %4718 = vst [vmem:[#allocation9 + $0x218] sm:$0xff] %v4622
    %4719 = vst [vmem:[#allocation9 + $0x220] sm:$0xff] %v4623
    %4720 = vst [vmem:[#allocation9 + $0x228] sm:$0xff] %v4624
    %4721 = vst [vmem:[#allocation9 + $0x230] sm:$0xff] %v4625
    %4722 = vst [vmem:[#allocation9 + $0x238] sm:$0xff] %v4626
    %4723 = vst [vmem:[#allocation9 + $0x240] sm:$0xff] %v4627
    %4724 = vst [vmem:[#allocation9 + $0x248] sm:$0xff] %v4628
    %4725 = vst [vmem:[#allocation9 + $0x250] sm:$0xff] %v4629
    %4726 = vst [vmem:[#allocation9 + $0x258] sm:$0xff] %v4630
    %4727 = vst [vmem:[#allocation9 + $0x260] sm:$0xff] %v4631
    %4728 = vst [vmem:[#allocation9 + $0x268] sm:$0xff] %v4632
    %4729 = vst [vmem:[#allocation9 + $0x270] sm:$0xff] %v4633
    %4730 = vst [vmem:[#allocation9 + $0x278] sm:$0xff] %v4634
    %4731 = vst [vmem:[#allocation9 + $0x280] sm:$0xff] %v4635
    %4732 = vst [vmem:[#allocation9 + $0x288] sm:$0xff] %v4636
    %4733 = vst [vmem:[#allocation9 + $0x290] sm:$0xff] %v4637
    %4734 = vst [vmem:[#allocation9 + $0x298] sm:$0xff] %v4638
    %4735 = vst [vmem:[#allocation9 + $0x2a0] sm:$0xff] %v4639
    %4736 = vst [vmem:[#allocation9 + $0x2a8] sm:$0xff] %v4640
    %4737 = vst [vmem:[#allocation9 + $0x2b0] sm:$0xff] %v4641
    %4738 = vst [vmem:[#allocation9 + $0x2b8] sm:$0xff] %v4642
    %4739 = vst [vmem:[#allocation9 + $0x2c0] sm:$0xff] %v4643
    %4740 = vst [vmem:[#allocation9 + $0x2c8] sm:$0xff] %v4644
    %4741 = vst [vmem:[#allocation9 + $0x2d0] sm:$0xff] %v4645
    %4742 = vst [vmem:[#allocation9 + $0x2d8] sm:$0xff] %v4646
    %4743 = vst [vmem:[#allocation9 + $0x2e0] sm:$0xff] %v4647
    %4744 = vst [vmem:[#allocation9 + $0x2e8] sm:$0xff] %v4648
    %4745 = vst [vmem:[#allocation9 + $0x2f0] sm:$0xff] %v4649
    %4746 = vst [vmem:[#allocation9 + $0x2f8] sm:$0xff] %v4650
    // Predicated region
    $region26: #{tpu_custom_call.1} parent=1 // pred_check
      _
    $region27: #{tpu_custom_call.1} parent=1 // pred_check_branch
      %4748 = sbr.rel (0) target = $region29
    $region28: #{tpu_custom_call.1} parent=1 // pred_region
      %s4750 = ssub.s32 12288, 12288
      %4751 = vsyncadd [#allocation5], %s4750
      %s4752 = sshll.u32 [#allocation9], 4
      %s4753 = int_to_ptr.vmem [resolvable:$true] %s4752
      %4758 = dma.vmem_to_hbm [thread:$0]  %s4753, 12288, %s3, [#allocation5], 128, 128, 8
    $region29: #{tpu_custom_call.1} parent=1 // pred_fallthru
      _
    // Predicated region
    $region30: #{tpu_custom_call.1} parent=1 // pred_check
      _
    $region31: #{tpu_custom_call.1} parent=1 // pred_check_branch
      %4760 = sbr.rel (0) target = $region33
    $region32: #{tpu_custom_call.1} parent=1 // pred_region
      %4761 = dma.done [#allocation5], 12288
    $region33: #{tpu_custom_call.1} parent=1 // pred_fallthru
      _
    %4762 = vsyncpa [#allocation4], 1
    %4763 = vsyncpa [#allocation7], 1
    %4764 = vsyncpa [#allocation5], 1

</llo_original>
